<compile_context>
chip_gen: v6e
topology: v6e:2x2x1
jax: 0.10.0
libtpu: 0.0.40
codegen_flags: <defaults>
</compile_context>

<pallas_src>
import functools

import jax
import jax.numpy as jnp
import numpy as np
from jax.experimental import pallas as pl
from jax.experimental.pallas import tpu as pltpu

EPS = 1e-5
MXU_DTYPE = jnp.bfloat16          # matmul operand dtype (accumulation is f32)
VMEM_LIMIT = 48 * 1024 * 1024


def _round_up(x, m):
    return (x + m - 1) // m * m


def _pick_tile_h(H, Wp, Cin, Cout, vmem_budget=10 * 2 ** 20):
    """Largest divisor of H that keeps per-step temporaries under the budget and
    gives ~>=8 H tiles for pipeline depth (but not silly-thin tiles)."""
    # per window row: f32 xwin + 3 rolled copies + bf16 xw/operand + f32 acc/y
    # + double-buffered pipeline blocks (rough, conservative).
    per_row = Wp * (36 * Cin + 16 * Cout)
    cap = max(1, vmem_budget // per_row - 2)
    target = int(min(H, cap, max(4, pl.cdiv(H, 8))))
    for th in range(target, 0, -1):
        if H % th == 0:
            return th
    return 1


# ---------------------------------------------------------------------------
# Kernel 1: fused [previous BN affine] -> conv3x3 (no bias) -> ReLU
#           -> per-sample BN partial (sum, sum-of-squares) statistics.
#
# Activations travel between layers as (N, H, Wp, C) f32 with real columns at
# 1..W, column 0 = left conv pad and columns W+1..Wp-1 = alignment junk (zero).
# Grid = (N, H // tile_h); the 1-row top/bottom halos arrive as two extra 1-row
# inputs whose index_maps clamp at the image border (masked to zero in-kernel).
# ---------------------------------------------------------------------------
def _conv_relu_stats_kernel(scale_ref, shift_ref, xt_ref, xm_ref, xb_ref,
                            w_ref, y_ref, stats_ref, *, W):
    _, TH, Wp, Cin = xm_ref.shape
    Cout = y_ref.shape[-1]
    h = pl.program_id(1)
    nh = pl.num_programs(1)

    scale = scale_ref[...]                              # (1, Cin)
    shift = shift_ref[...]

    # Single column mask reused for prologue and epilogue.
    col = jax.lax.broadcasted_iota(jnp.int32, (1, Wp, 1), 1)
    cmask = (col >= 1) & (col <= W)

    # Prologue: previous layer's BN affine; halo columns forced back to zero.
    # The 1-row halo blocks are real neighbour rows except at the image border,
    # where they are zeroed (== the conv's zero padding).
    def edge_row(ref, keep):
        r = ref[0].astype(jnp.float32) * scale + shift          # (1, Wp, Cin)
        return jnp.where(cmask, r, 0.0) * keep

    top = edge_row(xt_ref, jnp.where(h == 0, 0.0, 1.0))
    bot = edge_row(xb_ref, jnp.where(h == nh - 1, 0.0, 1.0))
    mid = jnp.where(cmask, xm_ref[0].astype(jnp.float32) * scale + shift, 0.0)
    xwin = jnp.concatenate([top, mid, bot], axis=0)             # (TH+2, Wp, Cin)

    # kw shifts as pure sublane rolls (wrap-around lands in masked junk cols),
    # concatenated once on the lane axis -> (TH+2, Wp, 3*Cin), then cast to the
    # MXU operand dtype (bf16) once.
    xw = jnp.concatenate(
        [xwin if s == 0 else pltpu.roll(xwin, shift=s, axis=1)
         for s in (1, 0, Wp - 1)], axis=-1)
    xw = xw.astype(w_ref.dtype)

    # 3 accumulated matmuls over kh (K = 3*Cin each) instead of a 9x im2col slab.
    acc = jnp.zeros((TH * Wp, Cout), jnp.float32)
    for kh in range(3):
        a2 = xw[kh:kh + TH].reshape(TH * Wp, 3 * Cin)
        acc = acc + jnp.dot(a2, w_ref[kh], preferred_element_type=jnp.float32)

    # ReLU + junk-column mask (keeps the zero-column invariant and exact stats).
    acc = jnp.where(cmask, jnp.maximum(acc.reshape(TH, Wp, Cout), 0.0), 0.0)
    y_ref[...] = acc[None].astype(y_ref.dtype)

    # BN partial statistics accumulated across H tiles in the resident output
    # block (h is the innermost "arbitrary" axis).
    acc2 = acc.reshape(TH * Wp, Cout)
    s1 = jnp.sum(acc2, axis=0, keepdims=True)                   # (1, Cout)
    s2 = jnp.sum(acc2 * acc2, axis=0, keepdims=True)            # (1, Cout)

    @pl.when(h == 0)
    def _init():
        stats_ref[...] = jnp.zeros_like(stats_ref)

    stats_ref[...] += jnp.concatenate([s1, s2], axis=0)[None]   # (1, 2, Cout)


def conv3x3_relu_stats(xp, w3, scale, shift, *, W):
    """xp: (N, H, Wp, Cin) padded-W layout; w3: (3, 3*Cin, Cout) bf16/f32.
    Returns (y (N, H, Wp, Cout), stats (N, 2, Cout))."""
    N, H, Wp, Cin = xp.shape
    _, K3, Cout = w3.shape
    TH = _pick_tile_h(H, Wp, Cin, Cout)
    assert H % TH == 0
    nh = H // TH
    kernel = functools.partial(_conv_relu_stats_kernel, W=W)
    return pl.pallas_call(
        kernel,
        out_shape=(
            jax.ShapeDtypeStruct((N, H, Wp, Cout), xp.dtype),
            jax.ShapeDtypeStruct((N, 2, Cout), jnp.float32),
        ),
        grid=(N, nh),
        in_specs=[
            pl.BlockSpec((1, Cin), lambda n, h: (0, 0)),
            pl.BlockSpec((1, Cin), lambda n, h: (0, 0)),
            # top halo row (clamped at the image border, masked in-kernel)
            pl.BlockSpec((1, 1, Wp, Cin),
                         lambda n, h: (n, jnp.maximum(h * TH - 1, 0), 0, 0)),
            # tile interior
            pl.BlockSpec((1, TH, Wp, Cin), lambda n, h: (n, h, 0, 0)),
            # bottom halo row (clamped at the image border, masked in-kernel)
            pl.BlockSpec((1, 1, Wp, Cin),
                         lambda n, h: (n, jnp.minimum((h + 1) * TH, H - 1), 0, 0)),
            # conv weights, resident across the whole grid
            pl.BlockSpec((3, K3, Cout), lambda n, h: (0, 0, 0)),
        ],
        out_specs=(
            pl.BlockSpec((1, TH, Wp, Cout), lambda n, h: (n, h, 0, 0)),
            pl.BlockSpec((1, 2, Cout), lambda n, h: (n, 0, 0)),
        ),
        compiler_params=pltpu.CompilerParams(
            dimension_semantics=("parallel", "arbitrary"),
            vmem_limit_bytes=VMEM_LIMIT),
    )(scale, shift, xp, xp, xp, w3)


# ---------------------------------------------------------------------------
# Kernel 2: standalone BN affine apply for the LAST layer only (H-tiled).
# ---------------------------------------------------------------------------
def _bn_apply_kernel(scale_ref, shift_ref, x_ref, o_ref):
    _, TH, Wp, C = x_ref.shape
    Wout = o_ref.shape[2]
    y = x_ref[0].astype(jnp.float32) * scale_ref[...] + shift_ref[...]
    # Real cols 1..W -> 0..W-1 via a sublane roll so the final slice is aligned.
    y = pltpu.roll(y, shift=Wp - 1, axis=1)
    o_ref[...] = y[:, 0:Wout, :][None].astype(o_ref.dtype)


def bn_apply(xp, scale, shift, *, W):
    N, H, Wp, C = xp.shape
    TH = _pick_tile_h(H, Wp, C, C)
    nh = H // TH
    return pl.pallas_call(
        _bn_apply_kernel,
        out_shape=jax.ShapeDtypeStruct((N, H, W, C), xp.dtype),
        grid=(N, nh),
        in_specs=[
            pl.BlockSpec((1, C), lambda n, h: (0, 0)),
            pl.BlockSpec((1, C), lambda n, h: (0, 0)),
            pl.BlockSpec((1, TH, Wp, C), lambda n, h: (n, h, 0, 0)),
        ],
        out_specs=pl.BlockSpec((1, TH, W, C), lambda n, h: (n, h, 0, 0)),
        compiler_params=pltpu.CompilerParams(
            dimension_semantics=("parallel", "parallel"),
            vmem_limit_bytes=VMEM_LIMIT),
    )(scale, shift, xp)


# ---------------------------------------------------------------------------
# TripleConv3 forward (Pallas) and a pure-JAX reference.
# ---------------------------------------------------------------------------
def triple_conv3_pallas(x_nchw, params, *, mxu_dtype=MXU_DTYPE):
    N, Cin, H, W = x_nchw.shape
    Wp = _round_up(W + 2, 16)

    # TODO(synk): fuse this transpose + pad into the first conv kernel.
    x = jnp.transpose(x_nchw, (0, 2, 3, 1))                     # NHWC
    xp = jnp.pad(x, ((0, 0), (0, 0), (1, Wp - W - 1), (0, 0)))  # (N, H, Wp, Cin)

    count = N * H * W
    scale = jnp.ones((1, Cin), jnp.float32)        # identity affine before layer 0
    shift = jnp.zeros((1, Cin), jnp.float32)
    for w_oihw, gamma, beta in params:
        cout, cin = w_oihw.shape[0], w_oihw.shape[1]
        # OIHW -> (kh, kw, ci, co) -> (3, 3*Cin, Cout); bf16 for the MXU.
        w3 = jnp.transpose(w_oihw, (2, 3, 1, 0)).reshape(3, 3 * cin, cout)
        w3 = w3.astype(mxu_dtype)
        xp, stats = conv3x3_relu_stats(xp, w3, scale, shift, W=W)
        # BatchNorm2d training-mode batch statistics (biased var, eps=1e-5) from
        # the fused per-sample partial sums.  One-pass form in f32 + clamp.
        s = jnp.sum(stats, axis=0)                              # (2, cout)
        mean = s[0] / count
        var = jnp.maximum(s[1] / count - mean * mean, 0.0)
        inv = jax.lax.rsqrt(var + EPS)
        scale = (gamma * inv).reshape(1, cout)
        shift = (beta - mean * gamma * inv).reshape(1, cout)

    y = bn_apply(xp, scale, shift, W=W)
    # TODO(synk): fuse this NHWC->NCHW transpose into bn_apply.
    return jnp.transpose(y, (0, 3, 1, 2))


def triple_conv3_ref(x_nchw, params, conv_dtype=jnp.float32):
    y = x_nchw
    for w_oihw, gamma, beta in params:
        z = jax.lax.conv_general_dilated(
            y.astype(conv_dtype), w_oihw.astype(conv_dtype),
            window_strides=(1, 1), padding=((1, 1), (1, 1)),
            dimension_numbers=("NCHW", "OIHW", "NCHW"),
            preferred_element_type=jnp.float32,
            precision=jax.lax.Precision.HIGHEST)
        z = jnp.maximum(z, 0.0)
        mean = jnp.mean(z, axis=(0, 2, 3), keepdims=True)
        var = jnp.mean((z - mean) ** 2, axis=(0, 2, 3), keepdims=True)
        y = (z - mean) * jax.lax.rsqrt(var + EPS)
        y = y * gamma.reshape(1, -1, 1, 1) + beta.reshape(1, -1, 1, 1)
    return y


def make_params(key, in_channels, out_channels, mid_channels=None):
    if not mid_channels:
        mid_channels = out_channels
    dims = [
        (in_channels, mid_channels),
        (mid_channels, mid_channels),
        (mid_channels, out_channels),
    ]
    params = []
    for cin, cout in dims:
        key, kw, kg, kb = jax.random.split(key, 4)
        w = 0.1 * jax.random.normal(kw, (cout, cin, 3, 3), jnp.float32)  # OIHW
        gamma = 1.0 + 0.1 * jax.random.normal(kg, (cout,), jnp.float32)
        beta = 0.1 * jax.random.normal(kb, (cout,), jnp.float32)
        params.append((w, gamma, beta))
    return params


if __name__ == "__main__":
    key = jax.random.PRNGKey(0)
    k_x, k_p = jax.random.split(key)

    N, Cin, H, W = 2, 4, 16, 16
    Cout = 8
    x = jax.random.normal(k_x, (N, Cin, H, W), jnp.float32)
    params = make_params(k_p, Cin, Cout)

    fwd = jax.jit(triple_conv3_pallas)
    out = jax.block_until_ready(fwd(x, params))
    assert out.shape == (N, Cout, H, W), out.shape

    # Structural check: reference with the same (bf16 operand, f32 accumulation)
    # conv rounding model -> tight tolerance.
    ref_bf16 = jax.block_until_ready(
        triple_conv3_ref(x, params, conv_dtype=jnp.bfloat16))
    np.testing.assert_allclose(np.asarray(out), np.asarray(ref_bf16),
                               rtol=1e-2, atol=1e-2)

    # Semantic check vs the f32 PyTorch-style forward.  bf16 MXU operands
    # (recommended by the perf review for all TPU generations) deviate from the
    # pure-f32 forward and the deviation roughly doubles per BN layer, hence the
    # loosened tolerance.
    ref_f32 = jax.block_until_ready(triple_conv3_ref(x, params))
    np.testing.assert_allclose(np.asarray(out), np.asarray(ref_f32),
                               rtol=5e-2, atol=1e-1)
    print("KERNEL_OK")
</pallas_src>

<mosaic_0001>
module attributes {stable_mosaic.version = 11 : i64} {
  func.func @_conv_relu_stats_kernel(%arg0: i32, %arg1: i32, %arg2: memref<1x4xf32, #tpu.memory_space<vmem>>, %arg3: memref<1x4xf32, #tpu.memory_space<vmem>>, %arg4: memref<1x1x32x4xf32, #tpu.memory_space<vmem>>, %arg5: memref<1x4x32x4xf32, #tpu.memory_space<vmem>>, %arg6: memref<1x1x32x4xf32, #tpu.memory_space<vmem>>, %arg7: memref<3x12x8xbf16, #tpu.memory_space<vmem>>, %arg8: memref<1x4x32x8xf32, #tpu.memory_space<vmem>>, %arg9: memref<1x2x8xf32, #tpu.memory_space<vmem>>) attributes {dimension_semantics = [#tpu.dimension_semantics<parallel>, #tpu.dimension_semantics<arbitrary>], iteration_bounds = array<i64: 2, 4>, scalar_prefetch = 0 : i64, scratch_operands = 0 : i64, tpu.core_type = #tpu.core_type<tc>, window_params = [{pipeline_mode = #tpu.pipeline_mode<synchronous>, transform_indices = @transform_0, window_bounds = array<i64: 1, 4>}, {pipeline_mode = #tpu.pipeline_mode<synchronous>, transform_indices = @transform_1, window_bounds = array<i64: 1, 4>}, {transform_indices = @transform_2, window_bounds = array<i64: 1, 1, 32, 4>}, {transform_indices = @transform_3, window_bounds = array<i64: 1, 4, 32, 4>}, {transform_indices = @transform_4, window_bounds = array<i64: 1, 1, 32, 4>}, {pipeline_mode = #tpu.pipeline_mode<synchronous>, transform_indices = @transform_5, window_bounds = array<i64: 3, 12, 8>}, {transform_indices = @transform_6, window_bounds = array<i64: 1, 4, 32, 8>}, {transform_indices = @transform_7, window_bounds = array<i64: 1, 2, 8>}]} {
    %c0 = arith.constant 0 : index
    %c0_0 = arith.constant 0 : index
    %0 = vector.load %arg2[%c0, %c0_0] : memref<1x4xf32, #tpu.memory_space<vmem>>, vector<1x4xf32>
    %c0_1 = arith.constant 0 : index
    %c0_2 = arith.constant 0 : index
    %1 = vector.load %arg3[%c0_1, %c0_2] : memref<1x4xf32, #tpu.memory_space<vmem>>, vector<1x4xf32>
    %2 = tpu.iota {dimensions = array<i32: 1>} : vector<1x32x1xi32>
    %c1_i32 = arith.constant 1 : i32
    %3 = vector.broadcast %c1_i32 : i32 to vector<1x32x1xi32>
    %4 = arith.cmpi sge, %2, %3 : vector<1x32x1xi32>
    %c16_i32 = arith.constant 16 : i32
    %5 = vector.broadcast %c16_i32 : i32 to vector<1x32x1xi32>
    %6 = arith.cmpi sle, %2, %5 : vector<1x32x1xi32>
    %7 = arith.andi %4, %6 : vector<1x32x1xi1>
    %c0_i32 = arith.constant 0 : i32
    %8 = arith.cmpi eq, %arg1, %c0_i32 : i32
    %cst = arith.constant 0.000000e+00 : f32
    %cst_3 = arith.constant 1.000000e+00 : f32
    %9 = arith.select %8, %cst, %cst_3 : f32
    %c0_4 = arith.constant 0 : index
    %c0_5 = arith.constant 0 : index
    %c0_6 = arith.constant 0 : index
    %c0_7 = arith.constant 0 : index
    %10 = vector.load %arg4[%c0_4, %c0_5, %c0_6, %c0_7] : memref<1x1x32x4xf32, #tpu.memory_space<vmem>>, vector<1x1x32x4xf32>
    %11 = vector.shape_cast %10 : vector<1x1x32x4xf32> to vector<1x32x4xf32>
    %12 = vector.shape_cast %0 : vector<1x4xf32> to vector<1x1x4xf32>
    %13 = vector.broadcast %12 : vector<1x1x4xf32> to vector<1x32x4xf32>
    %14 = arith.mulf %11, %13 : vector<1x32x4xf32>
    %15 = vector.shape_cast %1 : vector<1x4xf32> to vector<1x1x4xf32>
    %16 = vector.broadcast %15 : vector<1x1x4xf32> to vector<1x32x4xf32>
    %17 = arith.addf %14, %16 : vector<1x32x4xf32>
    %cst_8 = arith.constant 0.000000e+00 : f32
    %18 = vector.shape_cast %7 : vector<1x32x1xi1> to vector<1x32x1xi1>
    %19 = vector.broadcast %18 : vector<1x32x1xi1> to vector<1x32x4xi1>
    %20 = vector.broadcast %cst_8 : f32 to vector<1x32x4xf32>
    %21 = arith.select %19, %17, %20 : vector<1x32x4xi1>, vector<1x32x4xf32>
    %22 = vector.broadcast %9 : f32 to vector<1x32x4xf32>
    %23 = arith.mulf %21, %22 : vector<1x32x4xf32>
    %c3_i32 = arith.constant 3 : i32
    %24 = arith.cmpi eq, %arg1, %c3_i32 : i32
    %cst_9 = arith.constant 0.000000e+00 : f32
    %cst_10 = arith.constant 1.000000e+00 : f32
    %25 = arith.select %24, %cst_9, %cst_10 : f32
    %c0_11 = arith.constant 0 : index
    %c0_12 = arith.constant 0 : index
    %c0_13 = arith.constant 0 : index
    %c0_14 = arith.constant 0 : index
    %26 = vector.load %arg6[%c0_11, %c0_12, %c0_13, %c0_14] : memref<1x1x32x4xf32, #tpu.memory_space<vmem>>, vector<1x1x32x4xf32>
    %27 = vector.shape_cast %26 : vector<1x1x32x4xf32> to vector<1x32x4xf32>
    %28 = vector.shape_cast %0 : vector<1x4xf32> to vector<1x1x4xf32>
    %29 = vector.broadcast %28 : vector<1x1x4xf32> to vector<1x32x4xf32>
    %30 = arith.mulf %27, %29 : vector<1x32x4xf32>
    %31 = vector.shape_cast %1 : vector<1x4xf32> to vector<1x1x4xf32>
    %32 = vector.broadcast %31 : vector<1x1x4xf32> to vector<1x32x4xf32>
    %33 = arith.addf %30, %32 : vector<1x32x4xf32>
    %cst_15 = arith.constant 0.000000e+00 : f32
    %34 = vector.shape_cast %7 : vector<1x32x1xi1> to vector<1x32x1xi1>
    %35 = vector.broadcast %34 : vector<1x32x1xi1> to vector<1x32x4xi1>
    %36 = vector.broadcast %cst_15 : f32 to vector<1x32x4xf32>
    %37 = arith.select %35, %33, %36 : vector<1x32x4xi1>, vector<1x32x4xf32>
    %38 = vector.broadcast %25 : f32 to vector<1x32x4xf32>
    %39 = arith.mulf %37, %38 : vector<1x32x4xf32>
    %c0_16 = arith.constant 0 : index
    %c0_17 = arith.constant 0 : index
    %c0_18 = arith.constant 0 : index
    %c0_19 = arith.constant 0 : index
    %40 = vector.load %arg5[%c0_16, %c0_17, %c0_18, %c0_19] : memref<1x4x32x4xf32, #tpu.memory_space<vmem>>, vector<1x4x32x4xf32>
    %41 = vector.shape_cast %40 : vector<1x4x32x4xf32> to vector<4x32x4xf32>
    %42 = vector.shape_cast %0 : vector<1x4xf32> to vector<1x1x4xf32>
    %43 = vector.broadcast %42 : vector<1x1x4xf32> to vector<4x32x4xf32>
    %44 = arith.mulf %41, %43 : vector<4x32x4xf32>
    %45 = vector.shape_cast %1 : vector<1x4xf32> to vector<1x1x4xf32>
    %46 = vector.broadcast %45 : vector<1x1x4xf32> to vector<4x32x4xf32>
    %47 = arith.addf %44, %46 : vector<4x32x4xf32>
    %cst_20 = arith.constant 0.000000e+00 : f32
    %48 = vector.shape_cast %7 : vector<1x32x1xi1> to vector<1x32x1xi1>
    %49 = vector.broadcast %48 : vector<1x32x1xi1> to vector<4x32x4xi1>
    %50 = vector.broadcast %cst_20 : f32 to vector<4x32x4xf32>
    %51 = arith.select %49, %47, %50 : vector<4x32x4xi1>, vector<4x32x4xf32>
    %52 = tpu.concatenate %23, %51, %39 in 0 : vector<1x32x4xf32>, vector<4x32x4xf32>, vector<1x32x4xf32> -> vector<6x32x4xf32>
    %c1_i32_21 = arith.constant 1 : i32
    %53 = tpu.dynamic_rotate %52 by %c1_i32_21 dim 1 : vector<6x32x4xf32>, i32 -> vector<6x32x4xf32>
    %c31_i32 = arith.constant 31 : i32
    %54 = tpu.dynamic_rotate %52 by %c31_i32 dim 1 : vector<6x32x4xf32>, i32 -> vector<6x32x4xf32>
    %55 = tpu.concatenate %53, %52, %54 in 2 : vector<6x32x4xf32>, vector<6x32x4xf32>, vector<6x32x4xf32> -> vector<6x32x12xf32>
    %56 = arith.truncf %55 : vector<6x32x12xf32> to vector<6x32x12xbf16>
    %cst_22 = arith.constant 0.000000e+00 : f32
    %57 = vector.broadcast %cst_22 : f32 to vector<128x8xf32>
    %58 = vector.extract_strided_slice %56 {offsets = [0, 0, 0], sizes = [4, 32, 12], strides = [1, 1, 1]} : vector<6x32x12xbf16> to vector<4x32x12xbf16>
    %59 = vector.shape_cast %58 : vector<4x32x12xbf16> to vector<128x12xbf16>
    %c0_23 = arith.constant 0 : index
    %c0_24 = arith.constant 0 : index
    %c0_25 = arith.constant 0 : index
    %60 = vector.load %arg7[%c0_23, %c0_24, %c0_25] : memref<3x12x8xbf16, #tpu.memory_space<vmem>>, vector<1x12x8xbf16>
    %61 = vector.shape_cast %60 : vector<1x12x8xbf16> to vector<12x8xbf16>
    %cst_26 = arith.constant dense<0.000000e+00> : vector<128x8xf32>
    %62 = tpu.matmul %59, %61, %cst_26 {dimension_numbers = #tpu.dot_dimension_numbers<[1], [0], [0], [1], [0, 0, 1, 1], [], []>} : vector<128x12xbf16>, vector<12x8xbf16>, vector<128x8xf32> -> vector<128x8xf32>
    %63 = arith.addf %57, %62 : vector<128x8xf32>
    %64 = vector.extract_strided_slice %56 {offsets = [1, 0, 0], sizes = [4, 32, 12], strides = [1, 1, 1]} : vector<6x32x12xbf16> to vector<4x32x12xbf16>
    %65 = vector.shape_cast %64 : vector<4x32x12xbf16> to vector<128x12xbf16>
    %c1 = arith.constant 1 : index
    %c0_27 = arith.constant 0 : index
    %c0_28 = arith.constant 0 : index
    %66 = vector.load %arg7[%c1, %c0_27, %c0_28] : memref<3x12x8xbf16, #tpu.memory_space<vmem>>, vector<1x12x8xbf16>
    %67 = vector.shape_cast %66 : vector<1x12x8xbf16> to vector<12x8xbf16>
    %cst_29 = arith.constant dense<0.000000e+00> : vector<128x8xf32>
    %68 = tpu.matmul %65, %67, %cst_29 {dimension_numbers = #tpu.dot_dimension_numbers<[1], [0], [0], [1], [0, 0, 1, 1], [], []>} : vector<128x12xbf16>, vector<12x8xbf16>, vector<128x8xf32> -> vector<128x8xf32>
    %69 = arith.addf %63, %68 : vector<128x8xf32>
    %70 = vector.extract_strided_slice %56 {offsets = [2, 0, 0], sizes = [4, 32, 12], strides = [1, 1, 1]} : vector<6x32x12xbf16> to vector<4x32x12xbf16>
    %71 = vector.shape_cast %70 : vector<4x32x12xbf16> to vector<128x12xbf16>
    %c2 = arith.constant 2 : index
    %c0_30 = arith.constant 0 : index
    %c0_31 = arith.constant 0 : index
    %72 = vector.load %arg7[%c2, %c0_30, %c0_31] : memref<3x12x8xbf16, #tpu.memory_space<vmem>>, vector<1x12x8xbf16>
    %73 = vector.shape_cast %72 : vector<1x12x8xbf16> to vector<12x8xbf16>
    %cst_32 = arith.constant dense<0.000000e+00> : vector<128x8xf32>
    %74 = tpu.matmul %71, %73, %cst_32 {dimension_numbers = #tpu.dot_dimension_numbers<[1], [0], [0], [1], [0, 0, 1, 1], [], []>} : vector<128x12xbf16>, vector<12x8xbf16>, vector<128x8xf32> -> vector<128x8xf32>
    %75 = arith.addf %69, %74 : vector<128x8xf32>
    %76 = vector.shape_cast %75 : vector<128x8xf32> to vector<4x32x8xf32>
    %cst_33 = arith.constant 0.000000e+00 : f32
    %77 = vector.broadcast %cst_33 : f32 to vector<4x32x8xf32>
    %78 = arith.maximumf %76, %77 : vector<4x32x8xf32>
    %cst_34 = arith.constant 0.000000e+00 : f32
    %79 = vector.shape_cast %7 : vector<1x32x1xi1> to vector<1x32x1xi1>
    %80 = vector.broadcast %79 : vector<1x32x1xi1> to vector<4x32x8xi1>
    %81 = vector.broadcast %cst_34 : f32 to vector<4x32x8xf32>
    %82 = arith.select %80, %78, %81 : vector<4x32x8xi1>, vector<4x32x8xf32>
    %83 = vector.shape_cast %82 : vector<4x32x8xf32> to vector<1x4x32x8xf32>
    %c0_35 = arith.constant 0 : index
    %c0_36 = arith.constant 0 : index
    %c0_37 = arith.constant 0 : index
    %c0_38 = arith.constant 0 : index
    %84 = vector.load %arg8[%c0_35, %c0_36, %c0_37, %c0_38] : memref<1x4x32x8xf32, #tpu.memory_space<vmem>>, vector<1x4x32x8xf32>
    tpu.vector_store %arg8[%c0_35, %c0_36, %c0_37, %c0_38], %83 {strides = array<i32>} : memref<1x4x32x8xf32, #tpu.memory_space<vmem>>, vector<1x4x32x8xf32>,
    %85 = vector.shape_cast %82 : vector<4x32x8xf32> to vector<128x8xf32>
    %cst_39 = arith.constant dense<0.000000e+00> : vector<8xf32>
    %86 = vector.multi_reduction <add>, %85, %cst_39 [0] : vector<128x8xf32> to vector<8xf32>
    %87 = vector.shape_cast %86 : vector<8xf32> to vector<1x8xf32>
    %88 = arith.mulf %85, %85 : vector<128x8xf32>
    %cst_40 = arith.constant dense<0.000000e+00> : vector<8xf32>
    %89 = vector.multi_reduction <add>, %88, %cst_40 [0] : vector<128x8xf32> to vector<8xf32>
    %90 = vector.shape_cast %89 : vector<8xf32> to vector<1x8xf32>
    %c0_i32_41 = arith.constant 0 : i32
    %91 = arith.cmpi eq, %arg1, %c0_i32_41 : i32
    %92 = arith.extui %91 : i1 to i32
    %c0_i32_42 = arith.constant 0 : i32
    %93 = arith.cmpi ne, %92, %c0_i32_42 : i32
    scf.if %93 {
      %cst_49 = arith.constant 0.000000e+00 : f32
      %99 = vector.broadcast %cst_49 : f32 to vector<1x2x8xf32>
      %c0_50 = arith.constant 0 : index
      %c0_51 = arith.constant 0 : index
      %c0_52 = arith.constant 0 : index
      %100 = vector.load %arg9[%c0_50, %c0_51, %c0_52] : memref<1x2x8xf32, #tpu.memory_space<vmem>>, vector<1x2x8xf32>
      tpu.vector_store %arg9[%c0_50, %c0_51, %c0_52], %99 {strides = array<i32>} : memref<1x2x8xf32, #tpu.memory_space<vmem>>, vector<1x2x8xf32>,
    } else {
    }
    %c0_43 = arith.constant 0 : index
    %c0_44 = arith.constant 0 : index
    %c0_45 = arith.constant 0 : index
    %94 = vector.load %arg9[%c0_43, %c0_44, %c0_45] : memref<1x2x8xf32, #tpu.memory_space<vmem>>, vector<1x2x8xf32>
    %95 = tpu.concatenate %87, %90 in 0 : vector<1x8xf32>, vector<1x8xf32> -> vector<2x8xf32>
    %96 = vector.shape_cast %95 : vector<2x8xf32> to vector<1x2x8xf32>
    %97 = arith.addf %94, %96 : vector<1x2x8xf32>
    %c0_46 = arith.constant 0 : index
    %c0_47 = arith.constant 0 : index
    %c0_48 = arith.constant 0 : index
    %98 = vector.load %arg9[%c0_46, %c0_47, %c0_48] : memref<1x2x8xf32, #tpu.memory_space<vmem>>, vector<1x2x8xf32>
    tpu.vector_store %arg9[%c0_46, %c0_47, %c0_48], %97 {strides = array<i32>} : memref<1x2x8xf32, #tpu.memory_space<vmem>>, vector<1x2x8xf32>,
    return
  }
  func.func @transform_0(%arg0: i32, %arg1: i32) -> (i32, i32) {
    %c0_i32 = arith.constant 0 : i32
    %c0_i32_0 = arith.constant 0 : i32
    %c0_i32_1 = arith.constant 0 : i32
    return %c0_i32, %c0_i32_0 : i32, i32
  }
  func.func @transform_1(%arg0: i32, %arg1: i32) -> (i32, i32) {
    %c0_i32 = arith.constant 0 : i32
    %c0_i32_0 = arith.constant 0 : i32
    %c0_i32_1 = arith.constant 0 : i32
    return %c0_i32, %c0_i32_0 : i32, i32
  }
  func.func @transform_2(%arg0: i32, %arg1: i32) -> (i32, i32, i32, i32) {
    %c4_i32 = arith.constant 4 : i32
    %0 = arith.muli %arg1, %c4_i32 : i32
    %c1_i32 = arith.constant 1 : i32
    %1 = arith.subi %0, %c1_i32 : i32
    %c0_i32 = arith.constant 0 : i32
    %2 = arith.maxsi %1, %c0_i32 : i32
    %c0_i32_0 = arith.constant 0 : i32
    %c0_i32_1 = arith.constant 0 : i32
    %c0_i32_2 = arith.constant 0 : i32
    return %arg0, %2, %c0_i32_0, %c0_i32_1 : i32, i32, i32, i32
  }
  func.func @transform_3(%arg0: i32, %arg1: i32) -> (i32, i32, i32, i32) {
    %c0_i32 = arith.constant 0 : i32
    %c0_i32_0 = arith.constant 0 : i32
    %c0_i32_1 = arith.constant 0 : i32
    return %arg0, %arg1, %c0_i32, %c0_i32_0 : i32, i32, i32, i32
  }
  func.func @transform_4(%arg0: i32, %arg1: i32) -> (i32, i32, i32, i32) {
    %c1_i32 = arith.constant 1 : i32
    %0 = arith.addi %arg1, %c1_i32 : i32
    %c4_i32 = arith.constant 4 : i32
    %1 = arith.muli %0, %c4_i32 : i32
    %c15_i32 = arith.constant 15 : i32
    %2 = arith.minsi %1, %c15_i32 : i32
    %c0_i32 = arith.constant 0 : i32
    %c0_i32_0 = arith.constant 0 : i32
    %c0_i32_1 = arith.constant 0 : i32
    return %arg0, %2, %c0_i32, %c0_i32_0 : i32, i32, i32, i32
  }
  func.func @transform_5(%arg0: i32, %arg1: i32) -> (i32, i32, i32) {
    %c0_i32 = arith.constant 0 : i32
    %c0_i32_0 = arith.constant 0 : i32
    %c0_i32_1 = arith.constant 0 : i32
    %c0_i32_2 = arith.constant 0 : i32
    return %c0_i32, %c0_i32_0, %c0_i32_1 : i32, i32, i32
  }
  func.func @transform_6(%arg0: i32, %arg1: i32) -> (i32, i32, i32, i32) {
    %c0_i32 = arith.constant 0 : i32
    %c0_i32_0 = arith.constant 0 : i32
    %c0_i32_1 = arith.constant 0 : i32
    return %arg0, %arg1, %c0_i32, %c0_i32_0 : i32, i32, i32, i32
  }
  func.func @transform_7(%arg0: i32, %arg1: i32) -> (i32, i32, i32) {
    %c0_i32 = arith.constant 0 : i32
    %c0_i32_0 = arith.constant 0 : i32
    %c0_i32_1 = arith.constant 0 : i32
    return %arg0, %c0_i32, %c0_i32_0 : i32, i32, i32
  }
}

module attributes {stable_mosaic.version = 11 : i64} {
  func.func @_bn_apply_kernel(%arg0: i32, %arg1: i32, %arg2: memref<1x8xf32, #tpu.memory_space<vmem>>, %arg3: memref<1x8xf32, #tpu.memory_space<vmem>>, %arg4: memref<1x4x32x8xf32, #tpu.memory_space<vmem>>, %arg5: memref<1x4x16x8xf32, #tpu.memory_space<vmem>>) attributes {dimension_semantics = [#tpu.dimension_semantics<parallel>, #tpu.dimension_semantics<parallel>], iteration_bounds = array<i64: 2, 4>, scalar_prefetch = 0 : i64, scratch_operands = 0 : i64, tpu.core_type = #tpu.core_type<tc>, window_params = [{pipeline_mode = #tpu.pipeline_mode<synchronous>, transform_indices = @transform_0, window_bounds = array<i64: 1, 8>}, {pipeline_mode = #tpu.pipeline_mode<synchronous>, transform_indices = @transform_1, window_bounds = array<i64: 1, 8>}, {transform_indices = @transform_2, window_bounds = array<i64: 1, 4, 32, 8>}, {transform_indices = @transform_3, window_bounds = array<i64: 1, 4, 16, 8>}]} {
    %c0 = arith.constant 0 : index
    %c0_0 = arith.constant 0 : index
    %c0_1 = arith.constant 0 : index
    %c0_2 = arith.constant 0 : index
    %0 = vector.load %arg4[%c0, %c0_0, %c0_1, %c0_2] : memref<1x4x32x8xf32, #tpu.memory_space<vmem>>, vector<1x4x32x8xf32>
    %1 = vector.shape_cast %0 : vector<1x4x32x8xf32> to vector<4x32x8xf32>
    %c0_3 = arith.constant 0 : index
    %c0_4 = arith.constant 0 : index
    %2 = vector.load %arg2[%c0_3, %c0_4] : memref<1x8xf32, #tpu.memory_space<vmem>>, vector<1x8xf32>
    %3 = vector.shape_cast %2 : vector<1x8xf32> to vector<1x1x8xf32>
    %4 = vector.broadcast %3 : vector<1x1x8xf32> to vector<4x32x8xf32>
    %5 = arith.mulf %1, %4 : vector<4x32x8xf32>
    %c0_5 = arith.constant 0 : index
    %c0_6 = arith.constant 0 : index
    %6 = vector.load %arg3[%c0_5, %c0_6] : memref<1x8xf32, #tpu.memory_space<vmem>>, vector<1x8xf32>
    %7 = vector.shape_cast %6 : vector<1x8xf32> to vector<1x1x8xf32>
    %8 = vector.broadcast %7 : vector<1x1x8xf32> to vector<4x32x8xf32>
    %9 = arith.addf %5, %8 : vector<4x32x8xf32>
    %c31_i32 = arith.constant 31 : i32
    %10 = tpu.dynamic_rotate %9 by %c31_i32 dim 1 : vector<4x32x8xf32>, i32 -> vector<4x32x8xf32>
    %11 = vector.extract_strided_slice %10 {offsets = [0, 0, 0], sizes = [4, 16, 8], strides = [1, 1, 1]} : vector<4x32x8xf32> to vector<4x16x8xf32>
    %12 = vector.shape_cast %11 : vector<4x16x8xf32> to vector<1x4x16x8xf32>
    %c0_7 = arith.constant 0 : index
    %c0_8 = arith.constant 0 : index
    %c0_9 = arith.constant 0 : index
    %c0_10 = arith.constant 0 : index
    %13 = vector.load %arg5[%c0_7, %c0_8, %c0_9, %c0_10] : memref<1x4x16x8xf32, #tpu.memory_space<vmem>>, vector<1x4x16x8xf32>
    tpu.vector_store %arg5[%c0_7, %c0_8, %c0_9, %c0_10], %12 {strides = array<i32>} : memref<1x4x16x8xf32, #tpu.memory_space<vmem>>, vector<1x4x16x8xf32>,
    return
  }
  func.func @transform_0(%arg0: i32, %arg1: i32) -> (i32, i32) {
    %c0_i32 = arith.constant 0 : i32
    %c0_i32_0 = arith.constant 0 : i32
    %c0_i32_1 = arith.constant 0 : i32
    return %c0_i32, %c0_i32_0 : i32, i32
  }
  func.func @transform_1(%arg0: i32, %arg1: i32) -> (i32, i32) {
    %c0_i32 = arith.constant 0 : i32
    %c0_i32_0 = arith.constant 0 : i32
    %c0_i32_1 = arith.constant 0 : i32
    return %c0_i32, %c0_i32_0 : i32, i32
  }
  func.func @transform_2(%arg0: i32, %arg1: i32) -> (i32, i32, i32, i32) {
    %c0_i32 = arith.constant 0 : i32
    %c0_i32_0 = arith.constant 0 : i32
    %c0_i32_1 = arith.constant 0 : i32
    return %arg0, %arg1, %c0_i32, %c0_i32_0 : i32, i32, i32, i32
  }
  func.func @transform_3(%arg0: i32, %arg1: i32) -> (i32, i32, i32, i32) {
    %c0_i32 = arith.constant 0 : i32
    %c0_i32_0 = arith.constant 0 : i32
    %c0_i32_1 = arith.constant 0 : i32
    return %arg0, %arg1, %c0_i32, %c0_i32_0 : i32, i32, i32, i32
  }
}

module attributes {stable_mosaic.version = 11 : i64} {
  func.func @_conv_relu_stats_kernel(%arg0: i32, %arg1: i32, %arg2: memref<1x8xf32, #tpu.memory_space<vmem>>, %arg3: memref<1x8xf32, #tpu.memory_space<vmem>>, %arg4: memref<1x1x32x8xf32, #tpu.memory_space<vmem>>, %arg5: memref<1x4x32x8xf32, #tpu.memory_space<vmem>>, %arg6: memref<1x1x32x8xf32, #tpu.memory_space<vmem>>, %arg7: memref<3x24x8xbf16, #tpu.memory_space<vmem>>, %arg8: memref<1x4x32x8xf32, #tpu.memory_space<vmem>>, %arg9: memref<1x2x8xf32, #tpu.memory_space<vmem>>) attributes {dimension_semantics = [#tpu.dimension_semantics<parallel>, #tpu.dimension_semantics<arbitrary>], iteration_bounds = array<i64: 2, 4>, scalar_prefetch = 0 : i64, scratch_operands = 0 : i64, tpu.core_type = #tpu.core_type<tc>, window_params = [{pipeline_mode = #tpu.pipeline_mode<synchronous>, transform_indices = @transform_0, window_bounds = array<i64: 1, 8>}, {pipeline_mode = #tpu.pipeline_mode<synchronous>, transform_indices = @transform_1, window_bounds = array<i64: 1, 8>}, {transform_indices = @transform_2, window_bounds = array<i64: 1, 1, 32, 8>}, {transform_indices = @transform_3, window_bounds = array<i64: 1, 4, 32, 8>}, {transform_indices = @transform_4, window_bounds = array<i64: 1, 1, 32, 8>}, {pipeline_mode = #tpu.pipeline_mode<synchronous>, transform_indices = @transform_5, window_bounds = array<i64: 3, 24, 8>}, {transform_indices = @transform_6, window_bounds = array<i64: 1, 4, 32, 8>}, {transform_indices = @transform_7, window_bounds = array<i64: 1, 2, 8>}]} {
    %c0 = arith.constant 0 : index
    %c0_0 = arith.constant 0 : index
    %0 = vector.load %arg2[%c0, %c0_0] : memref<1x8xf32, #tpu.memory_space<vmem>>, vector<1x8xf32>
    %c0_1 = arith.constant 0 : index
    %c0_2 = arith.constant 0 : index
    %1 = vector.load %arg3[%c0_1, %c0_2] : memref<1x8xf32, #tpu.memory_space<vmem>>, vector<1x8xf32>
    %2 = tpu.iota {dimensions = array<i32: 1>} : vector<1x32x1xi32>
    %c1_i32 = arith.constant 1 : i32
    %3 = vector.broadcast %c1_i32 : i32 to vector<1x32x1xi32>
    %4 = arith.cmpi sge, %2, %3 : vector<1x32x1xi32>
    %c16_i32 = arith.constant 16 : i32
    %5 = vector.broadcast %c16_i32 : i32 to vector<1x32x1xi32>
    %6 = arith.cmpi sle, %2, %5 : vector<1x32x1xi32>
    %7 = arith.andi %4, %6 : vector<1x32x1xi1>
    %c0_i32 = arith.constant 0 : i32
    %8 = arith.cmpi eq, %arg1, %c0_i32 : i32
    %cst = arith.constant 0.000000e+00 : f32
    %cst_3 = arith.constant 1.000000e+00 : f32
    %9 = arith.select %8, %cst, %cst_3 : f32
    %c0_4 = arith.constant 0 : index
    %c0_5 = arith.constant 0 : index
    %c0_6 = arith.constant 0 : index
    %c0_7 = arith.constant 0 : index
    %10 = vector.load %arg4[%c0_4, %c0_5, %c0_6, %c0_7] : memref<1x1x32x8xf32, #tpu.memory_space<vmem>>, vector<1x1x32x8xf32>
    %11 = vector.shape_cast %10 : vector<1x1x32x8xf32> to vector<1x32x8xf32>
    %12 = vector.shape_cast %0 : vector<1x8xf32> to vector<1x1x8xf32>
    %13 = vector.broadcast %12 : vector<1x1x8xf32> to vector<1x32x8xf32>
    %14 = arith.mulf %11, %13 : vector<1x32x8xf32>
    %15 = vector.shape_cast %1 : vector<1x8xf32> to vector<1x1x8xf32>
    %16 = vector.broadcast %15 : vector<1x1x8xf32> to vector<1x32x8xf32>
    %17 = arith.addf %14, %16 : vector<1x32x8xf32>
    %cst_8 = arith.constant 0.000000e+00 : f32
    %18 = vector.shape_cast %7 : vector<1x32x1xi1> to vector<1x32x1xi1>
    %19 = vector.broadcast %18 : vector<1x32x1xi1> to vector<1x32x8xi1>
    %20 = vector.broadcast %cst_8 : f32 to vector<1x32x8xf32>
    %21 = arith.select %19, %17, %20 : vector<1x32x8xi1>, vector<1x32x8xf32>
    %22 = vector.broadcast %9 : f32 to vector<1x32x8xf32>
    %23 = arith.mulf %21, %22 : vector<1x32x8xf32>
    %c3_i32 = arith.constant 3 : i32
    %24 = arith.cmpi eq, %arg1, %c3_i32 : i32
    %cst_9 = arith.constant 0.000000e+00 : f32
    %cst_10 = arith.constant 1.000000e+00 : f32
    %25 = arith.select %24, %cst_9, %cst_10 : f32
    %c0_11 = arith.constant 0 : index
    %c0_12 = arith.constant 0 : index
    %c0_13 = arith.constant 0 : index
    %c0_14 = arith.constant 0 : index
    %26 = vector.load %arg6[%c0_11, %c0_12, %c0_13, %c0_14] : memref<1x1x32x8xf32, #tpu.memory_space<vmem>>, vector<1x1x32x8xf32>
    %27 = vector.shape_cast %26 : vector<1x1x32x8xf32> to vector<1x32x8xf32>
    %28 = vector.shape_cast %0 : vector<1x8xf32> to vector<1x1x8xf32>
    %29 = vector.broadcast %28 : vector<1x1x8xf32> to vector<1x32x8xf32>
    %30 = arith.mulf %27, %29 : vector<1x32x8xf32>
    %31 = vector.shape_cast %1 : vector<1x8xf32> to vector<1x1x8xf32>
    %32 = vector.broadcast %31 : vector<1x1x8xf32> to vector<1x32x8xf32>
    %33 = arith.addf %30, %32 : vector<1x32x8xf32>
    %cst_15 = arith.constant 0.000000e+00 : f32
    %34 = vector.shape_cast %7 : vector<1x32x1xi1> to vector<1x32x1xi1>
    %35 = vector.broadcast %34 : vector<1x32x1xi1> to vector<1x32x8xi1>
    %36 = vector.broadcast %cst_15 : f32 to vector<1x32x8xf32>
    %37 = arith.select %35, %33, %36 : vector<1x32x8xi1>, vector<1x32x8xf32>
    %38 = vector.broadcast %25 : f32 to vector<1x32x8xf32>
    %39 = arith.mulf %37, %38 : vector<1x32x8xf32>
    %c0_16 = arith.constant 0 : index
    %c0_17 = arith.constant 0 : index
    %c0_18 = arith.constant 0 : index
    %c0_19 = arith.constant 0 : index
    %40 = vector.load %arg5[%c0_16, %c0_17, %c0_18, %c0_19] : memref<1x4x32x8xf32, #tpu.memory_space<vmem>>, vector<1x4x32x8xf32>
    %41 = vector.shape_cast %40 : vector<1x4x32x8xf32> to vector<4x32x8xf32>
    %42 = vector.shape_cast %0 : vector<1x8xf32> to vector<1x1x8xf32>
    %43 = vector.broadcast %42 : vector<1x1x8xf32> to vector<4x32x8xf32>
    %44 = arith.mulf %41, %43 : vector<4x32x8xf32>
    %45 = vector.shape_cast %1 : vector<1x8xf32> to vector<1x1x8xf32>
    %46 = vector.broadcast %45 : vector<1x1x8xf32> to vector<4x32x8xf32>
    %47 = arith.addf %44, %46 : vector<4x32x8xf32>
    %cst_20 = arith.constant 0.000000e+00 : f32
    %48 = vector.shape_cast %7 : vector<1x32x1xi1> to vector<1x32x1xi1>
    %49 = vector.broadcast %48 : vector<1x32x1xi1> to vector<4x32x8xi1>
    %50 = vector.broadcast %cst_20 : f32 to vector<4x32x8xf32>
    %51 = arith.select %49, %47, %50 : vector<4x32x8xi1>, vector<4x32x8xf32>
    %52 = tpu.concatenate %23, %51, %39 in 0 : vector<1x32x8xf32>, vector<4x32x8xf32>, vector<1x32x8xf32> -> vector<6x32x8xf32>
    %c1_i32_21 = arith.constant 1 : i32
    %53 = tpu.dynamic_rotate %52 by %c1_i32_21 dim 1 : vector<6x32x8xf32>, i32 -> vector<6x32x8xf32>
    %c31_i32 = arith.constant 31 : i32
    %54 = tpu.dynamic_rotate %52 by %c31_i32 dim 1 : vector<6x32x8xf32>, i32 -> vector<6x32x8xf32>
    %55 = tpu.concatenate %53, %52, %54 in 2 : vector<6x32x8xf32>, vector<6x32x8xf32>, vector<6x32x8xf32> -> vector<6x32x24xf32>
    %56 = arith.truncf %55 : vector<6x32x24xf32> to vector<6x32x24xbf16>
    %cst_22 = arith.constant 0.000000e+00 : f32
    %57 = vector.broadcast %cst_22 : f32 to vector<128x8xf32>
    %58 = vector.extract_strided_slice %56 {offsets = [0, 0, 0], sizes = [4, 32, 24], strides = [1, 1, 1]} : vector<6x32x24xbf16> to vector<4x32x24xbf16>
    %59 = vector.shape_cast %58 : vector<4x32x24xbf16> to vector<128x24xbf16>
    %c0_23 = arith.constant 0 : index
    %c0_24 = arith.constant 0 : index
    %c0_25 = arith.constant 0 : index
    %60 = vector.load %arg7[%c0_23, %c0_24, %c0_25] : memref<3x24x8xbf16, #tpu.memory_space<vmem>>, vector<1x24x8xbf16>
    %61 = vector.shape_cast %60 : vector<1x24x8xbf16> to vector<24x8xbf16>
    %cst_26 = arith.constant dense<0.000000e+00> : vector<128x8xf32>
    %62 = tpu.matmul %59, %61, %cst_26 {dimension_numbers = #tpu.dot_dimension_numbers<[1], [0], [0], [1], [0, 0, 1, 1], [], []>} : vector<128x24xbf16>, vector<24x8xbf16>, vector<128x8xf32> -> vector<128x8xf32>
    %63 = arith.addf %57, %62 : vector<128x8xf32>
    %64 = vector.extract_strided_slice %56 {offsets = [1, 0, 0], sizes = [4, 32, 24], strides = [1, 1, 1]} : vector<6x32x24xbf16> to vector<4x32x24xbf16>
    %65 = vector.shape_cast %64 : vector<4x32x24xbf16> to vector<128x24xbf16>
    %c1 = arith.constant 1 : index
    %c0_27 = arith.constant 0 : index
    %c0_28 = arith.constant 0 : index
    %66 = vector.load %arg7[%c1, %c0_27, %c0_28] : memref<3x24x8xbf16, #tpu.memory_space<vmem>>, vector<1x24x8xbf16>
    %67 = vector.shape_cast %66 : vector<1x24x8xbf16> to vector<24x8xbf16>
    %cst_29 = arith.constant dense<0.000000e+00> : vector<128x8xf32>
    %68 = tpu.matmul %65, %67, %cst_29 {dimension_numbers = #tpu.dot_dimension_numbers<[1], [0], [0], [1], [0, 0, 1, 1], [], []>} : vector<128x24xbf16>, vector<24x8xbf16>, vector<128x8xf32> -> vector<128x8xf32>
    %69 = arith.addf %63, %68 : vector<128x8xf32>
    %70 = vector.extract_strided_slice %56 {offsets = [2, 0, 0], sizes = [4, 32, 24], strides = [1, 1, 1]} : vector<6x32x24xbf16> to vector<4x32x24xbf16>
    %71 = vector.shape_cast %70 : vector<4x32x24xbf16> to vector<128x24xbf16>
    %c2 = arith.constant 2 : index
    %c0_30 = arith.constant 0 : index
    %c0_31 = arith.constant 0 : index
    %72 = vector.load %arg7[%c2, %c0_30, %c0_31] : memref<3x24x8xbf16, #tpu.memory_space<vmem>>, vector<1x24x8xbf16>
    %73 = vector.shape_cast %72 : vector<1x24x8xbf16> to vector<24x8xbf16>
    %cst_32 = arith.constant dense<0.000000e+00> : vector<128x8xf32>
    %74 = tpu.matmul %71, %73, %cst_32 {dimension_numbers = #tpu.dot_dimension_numbers<[1], [0], [0], [1], [0, 0, 1, 1], [], []>} : vector<128x24xbf16>, vector<24x8xbf16>, vector<128x8xf32> -> vector<128x8xf32>
    %75 = arith.addf %69, %74 : vector<128x8xf32>
    %76 = vector.shape_cast %75 : vector<128x8xf32> to vector<4x32x8xf32>
    %cst_33 = arith.constant 0.000000e+00 : f32
    %77 = vector.broadcast %cst_33 : f32 to vector<4x32x8xf32>
    %78 = arith.maximumf %76, %77 : vector<4x32x8xf32>
    %cst_34 = arith.constant 0.000000e+00 : f32
    %79 = vector.shape_cast %7 : vector<1x32x1xi1> to vector<1x32x1xi1>
    %80 = vector.broadcast %79 : vector<1x32x1xi1> to vector<4x32x8xi1>
    %81 = vector.broadcast %cst_34 : f32 to vector<4x32x8xf32>
    %82 = arith.select %80, %78, %81 : vector<4x32x8xi1>, vector<4x32x8xf32>
    %83 = vector.shape_cast %82 : vector<4x32x8xf32> to vector<1x4x32x8xf32>
    %c0_35 = arith.constant 0 : index
    %c0_36 = arith.constant 0 : index
    %c0_37 = arith.constant 0 : index
    %c0_38 = arith.constant 0 : index
    %84 = vector.load %arg8[%c0_35, %c0_36, %c0_37, %c0_38] : memref<1x4x32x8xf32, #tpu.memory_space<vmem>>, vector<1x4x32x8xf32>
    tpu.vector_store %arg8[%c0_35, %c0_36, %c0_37, %c0_38], %83 {strides = array<i32>} : memref<1x4x32x8xf32, #tpu.memory_space<vmem>>, vector<1x4x32x8xf32>,
    %85 = vector.shape_cast %82 : vector<4x32x8xf32> to vector<128x8xf32>
    %cst_39 = arith.constant dense<0.000000e+00> : vector<8xf32>
    %86 = vector.multi_reduction <add>, %85, %cst_39 [0] : vector<128x8xf32> to vector<8xf32>
    %87 = vector.shape_cast %86 : vector<8xf32> to vector<1x8xf32>
    %88 = arith.mulf %85, %85 : vector<128x8xf32>
    %cst_40 = arith.constant dense<0.000000e+00> : vector<8xf32>
    %89 = vector.multi_reduction <add>, %88, %cst_40 [0] : vector<128x8xf32> to vector<8xf32>
    %90 = vector.shape_cast %89 : vector<8xf32> to vector<1x8xf32>
    %c0_i32_41 = arith.constant 0 : i32
    %91 = arith.cmpi eq, %arg1, %c0_i32_41 : i32
    %92 = arith.extui %91 : i1 to i32
    %c0_i32_42 = arith.constant 0 : i32
    %93 = arith.cmpi ne, %92, %c0_i32_42 : i32
    scf.if %93 {
      %cst_49 = arith.constant 0.000000e+00 : f32
      %99 = vector.broadcast %cst_49 : f32 to vector<1x2x8xf32>
      %c0_50 = arith.constant 0 : index
      %c0_51 = arith.constant 0 : index
      %c0_52 = arith.constant 0 : index
      %100 = vector.load %arg9[%c0_50, %c0_51, %c0_52] : memref<1x2x8xf32, #tpu.memory_space<vmem>>, vector<1x2x8xf32>
      tpu.vector_store %arg9[%c0_50, %c0_51, %c0_52], %99 {strides = array<i32>} : memref<1x2x8xf32, #tpu.memory_space<vmem>>, vector<1x2x8xf32>,
    } else {
    }
    %c0_43 = arith.constant 0 : index
    %c0_44 = arith.constant 0 : index
    %c0_45 = arith.constant 0 : index
    %94 = vector.load %arg9[%c0_43, %c0_44, %c0_45] : memref<1x2x8xf32, #tpu.memory_space<vmem>>, vector<1x2x8xf32>
    %95 = tpu.concatenate %87, %90 in 0 : vector<1x8xf32>, vector<1x8xf32> -> vector<2x8xf32>
    %96 = vector.shape_cast %95 : vector<2x8xf32> to vector<1x2x8xf32>
    %97 = arith.addf %94, %96 : vector<1x2x8xf32>
    %c0_46 = arith.constant 0 : index
    %c0_47 = arith.constant 0 : index
    %c0_48 = arith.constant 0 : index
    %98 = vector.load %arg9[%c0_46, %c0_47, %c0_48] : memref<1x2x8xf32, #tpu.memory_space<vmem>>, vector<1x2x8xf32>
    tpu.vector_store %arg9[%c0_46, %c0_47, %c0_48], %97 {strides = array<i32>} : memref<1x2x8xf32, #tpu.memory_space<vmem>>, vector<1x2x8xf32>,
    return
  }
  func.func @transform_0(%arg0: i32, %arg1: i32) -> (i32, i32) {
    %c0_i32 = arith.constant 0 : i32
    %c0_i32_0 = arith.constant 0 : i32
    %c0_i32_1 = arith.constant 0 : i32
    return %c0_i32, %c0_i32_0 : i32, i32
  }
  func.func @transform_1(%arg0: i32, %arg1: i32) -> (i32, i32) {
    %c0_i32 = arith.constant 0 : i32
    %c0_i32_0 = arith.constant 0 : i32
    %c0_i32_1 = arith.constant 0 : i32
    return %c0_i32, %c0_i32_0 : i32, i32
  }
  func.func @transform_2(%arg0: i32, %arg1: i32) -> (i32, i32, i32, i32) {
    %c4_i32 = arith.constant 4 : i32
    %0 = arith.muli %arg1, %c4_i32 : i32
    %c1_i32 = arith.constant 1 : i32
    %1 = arith.subi %0, %c1_i32 : i32
    %c0_i32 = arith.constant 0 : i32
    %2 = arith.maxsi %1, %c0_i32 : i32
    %c0_i32_0 = arith.constant 0 : i32
    %c0_i32_1 = arith.constant 0 : i32
    %c0_i32_2 = arith.constant 0 : i32
    return %arg0, %2, %c0_i32_0, %c0_i32_1 : i32, i32, i32, i32
  }
  func.func @transform_3(%arg0: i32, %arg1: i32) -> (i32, i32, i32, i32) {
    %c0_i32 = arith.constant 0 : i32
    %c0_i32_0 = arith.constant 0 : i32
    %c0_i32_1 = arith.constant 0 : i32
    return %arg0, %arg1, %c0_i32, %c0_i32_0 : i32, i32, i32, i32
  }
  func.func @transform_4(%arg0: i32, %arg1: i32) -> (i32, i32, i32, i32) {
    %c1_i32 = arith.constant 1 : i32
    %0 = arith.addi %arg1, %c1_i32 : i32
    %c4_i32 = arith.constant 4 : i32
    %1 = arith.muli %0, %c4_i32 : i32
    %c15_i32 = arith.constant 15 : i32
    %2 = arith.minsi %1, %c15_i32 : i32
    %c0_i32 = arith.constant 0 : i32
    %c0_i32_0 = arith.constant 0 : i32
    %c0_i32_1 = arith.constant 0 : i32
    return %arg0, %2, %c0_i32, %c0_i32_0 : i32, i32, i32, i32
  }
  func.func @transform_5(%arg0: i32, %arg1: i32) -> (i32, i32, i32) {
    %c0_i32 = arith.constant 0 : i32
    %c0_i32_0 = arith.constant 0 : i32
    %c0_i32_1 = arith.constant 0 : i32
    %c0_i32_2 = arith.constant 0 : i32
    return %c0_i32, %c0_i32_0, %c0_i32_1 : i32, i32, i32
  }
  func.func @transform_6(%arg0: i32, %arg1: i32) -> (i32, i32, i32, i32) {
    %c0_i32 = arith.constant 0 : i32
    %c0_i32_0 = arith.constant 0 : i32
    %c0_i32_1 = arith.constant 0 : i32
    return %arg0, %arg1, %c0_i32, %c0_i32_0 : i32, i32, i32, i32
  }
  func.func @transform_7(%arg0: i32, %arg1: i32) -> (i32, i32, i32) {
    %c0_i32 = arith.constant 0 : i32
    %c0_i32_0 = arith.constant 0 : i32
    %c0_i32_1 = arith.constant 0 : i32
    return %arg0, %c0_i32, %c0_i32_0 : i32, i32, i32
  }
}

</mosaic_0001>

<llo_original>
// kernel: triple_conv3_pallas.7
$region0: #{triple_conv3_pallas.7}
  #allocation0 [shape = 'u32[]', space=smem, size = 0x4, offset = 0x4, fixed_abs, tag = 'smem constant byte address 0x4 - core index']
  #allocation1 [shape = 'u32[144,128]{1,0:T(1,128)}', space=vmem, size = 0x12000, scoped, tag = 'internal scratch']
  %s0 = inlined_call_operand.vmem [shape: f32[1,8], index: 0, kind: input, shape index: {}]
  %s1 = inlined_call_operand.vmem [shape: f32[1,8], index: 1, kind: input, shape index: {}]
  %s2 = inlined_call_operand.vmem [shape: f32[2,16,32,8], index: 2, kind: input, shape index: {}]
  %s3 = inlined_call_operand.vmem [shape: f32[2,16,16,8], index: 3, kind: output, shape index: {}]
  %s4 = sld [smem:[#allocation0]]
  $region45: #{triple_conv3_pallas.7} parent=0
    _
  %s6 = ssub.s32 1, %s4
  %s7 = scalar_select 0, %s6, %s4
  loop: start=0, step=1, limit=10
  $region2: #{triple_conv3_pallas.7} parent=0 // loop_pre_header
    _
  $region3: #{triple_conv3_pallas.7} parent=0 // loop_header
    %s9 = sphi 0, %s13
    %p10 = scmp.ge.s32.totalorder %s9, 10
    %s16 = sphi 0, %s28
    %s17 = sphi 0, %s24
    %s18 = sphi 0, %s16
    %s19 = sphi 0, %s17
    %s20 = sphi 0, %s18
    %s21 = sphi 0, %s19
    %s29 = sphi 0, %s29
    %s31 = sphi 0, %s29
    %s32 = sphi 0, %s31
    %s46 = sphi 0, %s32
    %s50 = sphi 0, %s50
    %s52 = sphi 0, %s50
    %s53 = sphi 0, %s52
    %s67 = sphi 0, %s53
    %s75 = sphi 0, %s77
    %s78 = sphi 0, %s75
    %s79 = sphi 0, %s78
    %s95 = sphi 0, %s79
    %s103 = sphi 0, %s105
    %s106 = sphi 0, %s103
    %s107 = sphi 0, %s106
    %s123 = sphi 0, %s107
  $region4: #{triple_conv3_pallas.7} parent=0 // loop_header_branch
    %12 = sbr.rel (%p10) target = $region8
  $region5: #{triple_conv3_pallas.7} parent=0 // loop_body
    %s14 = ssub.s32 %s9, 1
    %s15 = ssub.s32 %s9, 2
    %s22 = sadd.s32 1, %s17
    %p23 = scmp.ge.s32.totalorder %s22, 4
    %s24 = scalar_select %p23, 0, %s22
    %s25 = sadd.s32 1, %s16
    %s26 = scalar_select %p23, %s25, %s16
    %p27 = scmp.ge.s32.totalorder %s26, 2
    %s28 = scalar_select %p27, 0, %s26
    %s30 = sadd.s32 %s29, 1
    %p33 = scmp.eq.s32.totalorder %s9, 7
    %p34 = scmp.ne.s32.totalorder %s29, %s31
    %p35 = scmp.eq.s32.totalorder %s9, 0
    %p36 = por %p34, %p35
    %p37 = scmp.ne.s32.totalorder %s29, %s31
    %p38 = scmp.eq.s32.totalorder %s14, 7
    %p39 = por %p37, %p38
    %p40 = scmp.ne.s32.totalorder %s31, %s32
    %p41 = scmp.eq.s32.totalorder %s14, 0
    %p42 = por %p40, %p41
    %p43 = scmp.ne.s32.totalorder %s31, %s32
    %p44 = scmp.eq.s32.totalorder %s15, 7
    %p45 = por %p43, %p44
    %p47 = scmp.ne.s32.totalorder %s32, %s46
    %p48 = scmp.eq.s32.totalorder %s15, 0
    %p49 = por %p47, %p48
    %s51 = sadd.s32 %s50, 1
    %p54 = scmp.eq.s32.totalorder %s9, 7
    %p55 = scmp.ne.s32.totalorder %s50, %s52
    %p56 = scmp.eq.s32.totalorder %s9, 0
    %p57 = por %p55, %p56
    %p58 = scmp.ne.s32.totalorder %s50, %s52
    %p59 = scmp.eq.s32.totalorder %s14, 7
    %p60 = por %p58, %p59
    %p61 = scmp.ne.s32.totalorder %s52, %s53
    %p62 = scmp.eq.s32.totalorder %s14, 0
    %p63 = por %p61, %p62
    %p64 = scmp.ne.s32.totalorder %s52, %s53
    %p65 = scmp.eq.s32.totalorder %s15, 7
    %p66 = por %p64, %p65
    %p68 = scmp.ne.s32.totalorder %s53, %s67
    %p69 = scmp.eq.s32.totalorder %s15, 0
    %p70 = por %p68, %p69
    %s71 = ssub.s32 %s16, %s28
    %s72 = ssub.s32 %s17, %s24
    %s73 = sor.u32 %s71, %s72
    %p74 = scmp.eq.s32.totalorder %s73, 0
    %s76 = sadd.s32 %s75, 1
    %s77 = scalar_select %p74, %s75, %s76
    %p80 = pneg %p74
    %p81 = scmp.eq.s32.totalorder %s9, 7
    %p82 = por %p80, %p81
    %p83 = scmp.ne.s32.totalorder %s75, %s78
    %p84 = scmp.eq.s32.totalorder %s9, 0
    %p85 = por %p83, %p84
    %p86 = scmp.ne.s32.totalorder %s75, %s78
    %p87 = scmp.eq.s32.totalorder %s14, 7
    %p88 = por %p86, %p87
    %p89 = scmp.ne.s32.totalorder %s78, %s79
    %p90 = scmp.eq.s32.totalorder %s14, 0
    %p91 = por %p89, %p90
    %p92 = scmp.ne.s32.totalorder %s78, %s79
    %p93 = scmp.eq.s32.totalorder %s15, 7
    %p94 = por %p92, %p93
    %p96 = scmp.ne.s32.totalorder %s79, %s95
    %p97 = scmp.eq.s32.totalorder %s15, 0
    %p98 = por %p96, %p97
    %s99 = ssub.s32 %s16, %s28
    %s100 = ssub.s32 %s17, %s24
    %s101 = sor.u32 %s99, %s100
    %p102 = scmp.eq.s32.totalorder %s101, 0
    %s104 = sadd.s32 %s103, 1
    %s105 = scalar_select %p102, %s103, %s104
    %p108 = pneg %p102
    %p109 = scmp.eq.s32.totalorder %s9, 7
    %p110 = por %p108, %p109
    %p111 = scmp.ne.s32.totalorder %s103, %s106
    %p112 = scmp.eq.s32.totalorder %s9, 0
    %p113 = por %p111, %p112
    %p114 = scmp.ne.s32.totalorder %s103, %s106
    %p115 = scmp.eq.s32.totalorder %s14, 7
    %p116 = por %p114, %p115
    %p117 = scmp.ne.s32.totalorder %s106, %s107
    %p118 = scmp.eq.s32.totalorder %s14, 0
    %p119 = por %p117, %p118
    %p120 = scmp.ne.s32.totalorder %s106, %s107
    %p121 = scmp.eq.s32.totalorder %s15, 7
    %p122 = por %p120, %p121
    %p124 = scmp.ne.s32.totalorder %s107, %s123
    %p125 = scmp.eq.s32.totalorder %s15, 0
    %p126 = por %p124, %p125
    %p127 = scmp.le.s32.totalorder 1, %s9
    %p128 = scmp.lt.s32.totalorder %s9, 9
    %p129 = pnand %p127, %p128
    %p130 = pneg %p129
    // Predicated region
    $region9: #{triple_conv3_pallas.7} parent=5 // pred_check
      _
    $region10: #{triple_conv3_pallas.7} parent=5 // pred_check_branch
      %132 = sbr.rel (%p129) target = $region12
    $region11: #{triple_conv3_pallas.7} parent=5 // pred_region
      %s133 = ssub.s32 %s9, 1
      // Predicated region
      $region13: #{triple_conv3_pallas.7} parent=11 // pred_check
        %p134 = pneg %p42
      $region14: #{triple_conv3_pallas.7} parent=11 // pred_check_branch
        %136 = sbr.rel (%p134) target = $region16
      $region15: #{triple_conv3_pallas.7} parent=11 // pred_region
        _
      $region16: #{triple_conv3_pallas.7} parent=11 // pred_fallthru
        _
      // Predicated region
      $region17: #{triple_conv3_pallas.7} parent=11 // pred_check
        %p137 = pneg %p63
      $region18: #{triple_conv3_pallas.7} parent=11 // pred_check_branch
        %139 = sbr.rel (%p137) target = $region20
      $region19: #{triple_conv3_pallas.7} parent=11 // pred_region
        _
      $region20: #{triple_conv3_pallas.7} parent=11 // pred_fallthru
        _
    $region12: #{triple_conv3_pallas.7} parent=5 // pred_fallthru
      _
    %p140 = scmp.lt.s32.totalorder %s9, 8
    // Predicated region
    $region21: #{triple_conv3_pallas.7} parent=5 // pred_check
      %p141 = pneg %p140
    $region22: #{triple_conv3_pallas.7} parent=5 // pred_check_branch
      %143 = sbr.rel (%p141) target = $region24
    $region23: #{triple_conv3_pallas.7} parent=5 // pred_region
      // Predicated region
      $region25: #{triple_conv3_pallas.7} parent=23 // pred_check
        %p144 = pneg %p85
      $region26: #{triple_conv3_pallas.7} parent=23 // pred_check_branch
        %146 = sbr.rel (%p144) target = $region28
      $region27: #{triple_conv3_pallas.7} parent=23 // pred_region
        %s147 = smul.u32 4, %s17
        %p148 = scmp.lt.s32.totalorder %s16, 1
        %s149 = scalar_select %p148, %s16, 1
        %p150 = scmp.lt.s32.totalorder %s147, 15
        %s151 = scalar_select %p150, %s147, 15
        %s152 = smul.addr %s151, 4
        %s153 = smul.addr %s149, 64
        %s154 = sadd.s32 %s152, %s153
        %s155 = smul.addr %s154, 8
        %s156 = scalar_lea.vmem %s2, %s155
        %s157 = smul.u32 4, %s17
      $region28: #{triple_conv3_pallas.7} parent=23 // pred_fallthru
        _
    $region24: #{triple_conv3_pallas.7} parent=5 // pred_fallthru
      _
    %p158 = scmp.le.s32.totalorder 1, %s9
    %p159 = scmp.lt.s32.totalorder %s9, 9
    %p160 = pnand %p158, %p159
    %p161 = pneg %p160
    // Predicated region
    $region29: #{triple_conv3_pallas.7} parent=5 // pred_check
      _
    $region30: #{triple_conv3_pallas.7} parent=5 // pred_check_branch
      %163 = sbr.rel (%p160) target = $region32
    $region31: #{triple_conv3_pallas.7} parent=5 // pred_region
      %s164 = ssub.s32 %s9, 1
      %p165 = pneg %p42
      %p166 = pneg %p39
      %p167 = pneg %p63
      %p168 = pneg %p60
      %s169 = smul.u32 4, %s19
      %p170 = scmp.lt.s32.totalorder %s18, 1
      %s171 = scalar_select %p170, %s18, 1
      %p172 = scmp.lt.s32.totalorder %s169, 15
      %s173 = scalar_select %p172, %s169, 15
      %s174 = smul.addr %s173, 4
      %s175 = smul.addr %s171, 64
      %s176 = sadd.s32 %s174, %s175
      %s177 = smul.addr %s176, 8
      %s178 = scalar_lea.vmem %s2, %s177
      %p179 = pneg %p91
      %p180 = pneg %p88
      %p181 = pneg %p119
      %p182 = pneg %p116
      %s183 = smul.u32 4, %s19
      %p184 = scmp.lt.s32.totalorder %s18, 1
      %s185 = scalar_select %p184, %s18, 1
      %p186 = scmp.lt.s32.totalorder %s183, 15
      %s187 = scalar_select %p186, %s183, 15
      %s188 = smul.addr %s187, 2
      %s189 = smul.addr %s185, 32
      %s190 = sadd.s32 %s188, %s189
      %s191 = smul.addr %s190, 8
      %s192 = scalar_lea.vmem %s3, %s191
      %s193 = smul.u32 4, %s19
      %p194 = scmp.lt.s32.totalorder %s18, 1
      %s195 = scalar_select %p194, %s18, 1
      %p196 = scmp.lt.s32.totalorder %s193, 15
      %s197 = scalar_select %p196, %s193, 15
      %s198 = smul.addr %s197, 4
      %s199 = smul.addr %s195, 64
      %s200 = sadd.s32 %s198, %s199
      %s201 = smul.addr %s200, 8
      %s202 = scalar_lea.vmem %s2, %s201
      %s203 = smul.u32 4, %s19
      %s204 = smul.u32 4, %s19
      %p205 = scmp.lt.s32.totalorder %s18, 1
      %s206 = scalar_select %p205, %s18, 1
      %p207 = scmp.lt.s32.totalorder %s204, 15
      %s208 = scalar_select %p207, %s204, 15
      %s209 = smul.addr %s208, 2
      %s210 = smul.addr %s206, 32
      %s211 = sadd.s32 %s209, %s210
      %s212 = smul.addr %s211, 8
      %s213 = scalar_lea.vmem %s3, %s212
      %s214 = smul.u32 4, %s19
      %v215 = vld [vmem:[%s202] sm:$0xff]
      %v216 = vld [vmem:[%s202 + $0x8] sm:$0xff]
      %v217 = vld [vmem:[%s202 + $0x10] sm:$0xff]
      %v218 = vld [vmem:[%s202 + $0x20] sm:$0xff]
      %v219 = vld [vmem:[%s202 + $0x28] sm:$0xff]
      %v220 = vld [vmem:[%s202 + $0x30] sm:$0xff]
      %v221 = vld [vmem:[%s202 + $0x40] sm:$0xff]
      %v222 = vld [vmem:[%s202 + $0x48] sm:$0xff]
      %v223 = vld [vmem:[%s202 + $0x50] sm:$0xff]
      %v224 = vld [vmem:[%s202 + $0x60] sm:$0xff]
      %v225 = vld [vmem:[%s202 + $0x68] sm:$0xff]
      %v226 = vld [vmem:[%s202 + $0x70] sm:$0xff]
      %v227 = vld [vmem:[%s0] sm:$0x1]
      %v229 = vlaneseq
      %v230 = vshrl.u32 %v229, 7
      %v231 = vsub.s32 0, %v230
      %v232 = vrot.slane %v227, %v231
      %v234 = vmul.f32 %v215, %v232
      %v235 = vmul.f32 %v216, %v232
      %v236 = vmul.f32 %v217, %v232
      %v237 = vmul.f32 %v218, %v232
      %v238 = vmul.f32 %v219, %v232
      %v239 = vmul.f32 %v220, %v232
      %v240 = vmul.f32 %v221, %v232
      %v241 = vmul.f32 %v222, %v232
      %v242 = vmul.f32 %v223, %v232
      %v243 = vmul.f32 %v224, %v232
      %v244 = vmul.f32 %v225, %v232
      %v245 = vmul.f32 %v226, %v232
      %v246 = vld [vmem:[%s1] sm:$0x1]
      %v248 = vlaneseq
      %v249 = vshrl.u32 %v248, 7
      %v250 = vsub.s32 0, %v249
      %v251 = vrot.slane %v246, %v250
      %v253 = vadd.f32 %v234, %v251
      %v254 = vadd.f32 %v235, %v251
      %v255 = vadd.f32 %v236, %v251
      %v256 = vadd.f32 %v237, %v251
      %v257 = vadd.f32 %v238, %v251
      %v258 = vadd.f32 %v239, %v251
      %v259 = vadd.f32 %v240, %v251
      %v260 = vadd.f32 %v241, %v251
      %v261 = vadd.f32 %v242, %v251
      %v262 = vadd.f32 %v243, %v251
      %v263 = vadd.f32 %v244, %v251
      %v264 = vadd.f32 %v245, %v251
      %v265 = vrot.slane %v253, 1
      %v266 = vrot.slane %v256, 1
      %v267 = vrot.slane %v259, 1
      %v268 = vrot.slane %v262, 1
      %v269 = vrot.slane %v254, 1
      %v270 = vrot.slane %v257, 1
      %v271 = vrot.slane %v260, 1
      %v272 = vrot.slane %v263, 1
      %v273 = vrot.slane %v255, 1
      %v274 = vrot.slane %v258, 1
      %v275 = vrot.slane %v261, 1
      %v276 = vrot.slane %v264, 1
      %v277 = vlaneseq
      %v278 = vshrl.u32 %v277, 7
      %vm279 = vcmp.lt.s32.totalorder %v278, 7
      %v280 = vsel %vm279, %v269, %v273
      %v281 = vsel %vm279, %v270, %v274
      %v282 = vsel %vm279, %v271, %v275
      %v283 = vsel %vm279, %v272, %v276
      %v284 = vsel %vm279, %v265, %v269
      %v285 = vsel %vm279, %v266, %v270
      %v286 = vsel %vm279, %v267, %v271
      %v287 = vsel %vm279, %v268, %v272
      %vm288 = vcmask 64512
      %289 = vst.msk [vmem:[%s213] sm:$0xff] %vm288, %v284
      %290 = vst.msk [vmem:[%s213 + $0x8] sm:$0xff] %vm288, %v280
      %291 = vst.msk [vmem:[%s213 + $0x10] sm:$0xff] %vm288, %v285
      %292 = vst.msk [vmem:[%s213 + $0x18] sm:$0xff] %vm288, %v281
      %293 = vst.msk [vmem:[%s213 + $0x20] sm:$0xff] %vm288, %v286
      %294 = vst.msk [vmem:[%s213 + $0x28] sm:$0xff] %vm288, %v282
      %295 = vst.msk [vmem:[%s213 + $0x30] sm:$0xff] %vm288, %v287
      %296 = vst.msk [vmem:[%s213 + $0x38] sm:$0xff] %vm288, %v283
      %s297 = smul.u32 4, %s19
      %p298 = scmp.lt.s32.totalorder %s18, 1
      %s299 = scalar_select %p298, %s18, 1
      %p300 = scmp.lt.s32.totalorder %s297, 15
      %s301 = scalar_select %p300, %s297, 15
      %s302 = smul.addr %s301, 2
      %s303 = smul.addr %s299, 32
      %s304 = sadd.s32 %s302, %s303
      %s305 = smul.addr %s304, 8
      %s306 = scalar_lea.vmem %s3, %s305
      // Predicated region
      $region33: #{triple_conv3_pallas.7} parent=31 // pred_check
        %p307 = pneg %p116
      $region34: #{triple_conv3_pallas.7} parent=31 // pred_check_branch
        %309 = sbr.rel (%p307) target = $region36
      $region35: #{triple_conv3_pallas.7} parent=31 // pred_region
        %s310 = smul.u32 4, %s19
      $region36: #{triple_conv3_pallas.7} parent=31 // pred_fallthru
        _
    $region32: #{triple_conv3_pallas.7} parent=5 // pred_fallthru
      _
    %p311 = scmp.le.s32.totalorder 2, %s9
    // Predicated region
    $region37: #{triple_conv3_pallas.7} parent=5 // pred_check
      %p312 = pneg %p311
    $region38: #{triple_conv3_pallas.7} parent=5 // pred_check_branch
      %314 = sbr.rel (%p312) target = $region40
    $region39: #{triple_conv3_pallas.7} parent=5 // pred_region
      %s315 = ssub.s32 %s9, 2
      // Predicated region
      $region41: #{triple_conv3_pallas.7} parent=39 // pred_check
        %p316 = pneg %p122
      $region42: #{triple_conv3_pallas.7} parent=39 // pred_check_branch
        %318 = sbr.rel (%p316) target = $region44
      $region43: #{triple_conv3_pallas.7} parent=39 // pred_region
        %s319 = smul.u32 4, %s21
        %p320 = scmp.lt.s32.totalorder %s20, 1
        %s321 = scalar_select %p320, %s20, 1
        %p322 = scmp.lt.s32.totalorder %s319, 15
        %s323 = scalar_select %p322, %s319, 15
        %s324 = smul.addr %s323, 2
        %s325 = smul.addr %s321, 32
        %s326 = sadd.s32 %s324, %s325
        %s327 = smul.addr %s326, 8
        %s328 = scalar_lea.vmem %s3, %s327
      $region44: #{triple_conv3_pallas.7} parent=39 // pred_fallthru
        _
    $region40: #{triple_conv3_pallas.7} parent=5 // pred_fallthru
      _
  $region6: #{triple_conv3_pallas.7} parent=0 // loop_footer
    %s13 = sadd.s32 1, %s9
  $region7: #{triple_conv3_pallas.7} parent=0 // loop_footer_branch
    %8 = sbr.rel target = $region3
  $region8: #{triple_conv3_pallas.7} parent=0 // loop_exit
    _

// kernel: triple_conv3_pallas.4
$region0: #{triple_conv3_pallas.4}
  #allocation0 [shape = 'u32[]', space=smem, size = 0x4, offset = 0x4, fixed_abs, tag = 'smem constant byte address 0x4 - core index']
  #allocation1 [shape = 'u32[144,128]{1,0:T(1,128)}', space=vmem, size = 0x12000, scoped, tag = 'internal scratch']
  %s0 = inlined_call_operand.vmem [shape: f32[1,4], index: 0, kind: input, shape index: {}]
  %s1 = inlined_call_operand.vmem [shape: f32[1,4], index: 1, kind: input, shape index: {}]
  %s2 = inlined_call_operand.vmem [shape: f32[2,16,32,4], index: 2, kind: input, shape index: {}, may-alias: {2,3,4}]
  %s3 = inlined_call_operand.vmem [shape: f32[2,16,32,4], index: 3, kind: input, shape index: {}, may-alias: {2,3,4}]
  %s4 = inlined_call_operand.vmem [shape: f32[2,16,32,4], index: 4, kind: input, shape index: {}, may-alias: {2,3,4}]
  %s5 = inlined_call_operand.vmem [shape: bf16[3,12,8], index: 5, kind: input, shape index: {}]
  %s6 = inlined_call_operand.vmem [shape: f32[2,16,32,8], index: 6, kind: output, shape index: {0}]
  %s7 = inlined_call_operand.vmem [shape: f32[2,2,8], index: 7, kind: output, shape index: {1}]
  %8 = xla_tuple %s6, %s7
  %s9 = sld [smem:[#allocation0]]
  $region69: #{triple_conv3_pallas.4} parent=0
    _
  %s11 = ssub.s32 1, %s9
  %s12 = scalar_select 0, %s11, %s9
  loop: start=0, step=1, limit=10
  $region2: #{triple_conv3_pallas.4} parent=0 // loop_pre_header
    _
  $region3: #{triple_conv3_pallas.4} parent=0 // loop_header
    %s14 = sphi 0, %s18
    %p15 = scmp.ge.s32.totalorder %s14, 10
    %s21 = sphi 0, %s33
    %s22 = sphi 0, %s29
    %s23 = sphi 0, %s21
    %s24 = sphi 0, %s22
    %s25 = sphi 0, %s23
    %s26 = sphi 0, %s24
    %s34 = sphi 0, %s34
    %s36 = sphi 0, %s34
    %s37 = sphi 0, %s36
    %s51 = sphi 0, %s37
    %s55 = sphi 0, %s55
    %s57 = sphi 0, %s55
    %s58 = sphi 0, %s57
    %s72 = sphi 0, %s58
    %s88 = sphi 0, %s90
    %s91 = sphi 0, %s88
    %s92 = sphi 0, %s91
    %s108 = sphi 0, %s92
    %s116 = sphi 0, %s118
    %s119 = sphi 0, %s116
    %s120 = sphi 0, %s119
    %s136 = sphi 0, %s120
    %s152 = sphi 0, %s154
    %s155 = sphi 0, %s152
    %s156 = sphi 0, %s155
    %s172 = sphi 0, %s156
    %s176 = sphi 0, %s176
    %s178 = sphi 0, %s176
    %s179 = sphi 0, %s178
    %s193 = sphi 0, %s179
    %s201 = sphi 0, %s203
    %s204 = sphi 0, %s201
    %s205 = sphi 0, %s204
    %s221 = sphi 0, %s205
    %s227 = sphi 0, %s229
    %s230 = sphi 0, %s227
    %s231 = sphi 0, %s230
    %s247 = sphi 0, %s231
  $region4: #{triple_conv3_pallas.4} parent=0 // loop_header_branch
    %17 = sbr.rel (%p15) target = $region8
  $region5: #{triple_conv3_pallas.4} parent=0 // loop_body
    %s19 = ssub.s32 %s14, 1
    %s20 = ssub.s32 %s14, 2
    %s27 = sadd.s32 1, %s22
    %p28 = scmp.ge.s32.totalorder %s27, 4
    %s29 = scalar_select %p28, 0, %s27
    %s30 = sadd.s32 1, %s21
    %s31 = scalar_select %p28, %s30, %s21
    %p32 = scmp.ge.s32.totalorder %s31, 2
    %s33 = scalar_select %p32, 0, %s31
    %s35 = sadd.s32 %s34, 1
    %p38 = scmp.eq.s32.totalorder %s14, 7
    %p39 = scmp.ne.s32.totalorder %s34, %s36
    %p40 = scmp.eq.s32.totalorder %s14, 0
    %p41 = por %p39, %p40
    %p42 = scmp.ne.s32.totalorder %s34, %s36
    %p43 = scmp.eq.s32.totalorder %s19, 7
    %p44 = por %p42, %p43
    %p45 = scmp.ne.s32.totalorder %s36, %s37
    %p46 = scmp.eq.s32.totalorder %s19, 0
    %p47 = por %p45, %p46
    %p48 = scmp.ne.s32.totalorder %s36, %s37
    %p49 = scmp.eq.s32.totalorder %s20, 7
    %p50 = por %p48, %p49
    %p52 = scmp.ne.s32.totalorder %s37, %s51
    %p53 = scmp.eq.s32.totalorder %s20, 0
    %p54 = por %p52, %p53
    %s56 = sadd.s32 %s55, 1
    %p59 = scmp.eq.s32.totalorder %s14, 7
    %p60 = scmp.ne.s32.totalorder %s55, %s57
    %p61 = scmp.eq.s32.totalorder %s14, 0
    %p62 = por %p60, %p61
    %p63 = scmp.ne.s32.totalorder %s55, %s57
    %p64 = scmp.eq.s32.totalorder %s19, 7
    %p65 = por %p63, %p64
    %p66 = scmp.ne.s32.totalorder %s57, %s58
    %p67 = scmp.eq.s32.totalorder %s19, 0
    %p68 = por %p66, %p67
    %p69 = scmp.ne.s32.totalorder %s57, %s58
    %p70 = scmp.eq.s32.totalorder %s20, 7
    %p71 = por %p69, %p70
    %p73 = scmp.ne.s32.totalorder %s58, %s72
    %p74 = scmp.eq.s32.totalorder %s20, 0
    %p75 = por %p73, %p74
    %s76 = smul.u32 %s22, 4
    %s77 = ssub.s32 %s76, 1
    %p78 = scmp.gt.s32.totalorder %s77, 0
    %s79 = scalar_select %p78, %s77, 0
    %s80 = smul.u32 %s29, 4
    %s81 = ssub.s32 %s80, 1
    %p82 = scmp.gt.s32.totalorder %s81, 0
    %s83 = scalar_select %p82, %s81, 0
    %s84 = ssub.s32 %s21, %s33
    %s85 = ssub.s32 %s79, %s83
    %s86 = sor.u32 %s84, %s85
    %p87 = scmp.eq.s32.totalorder %s86, 0
    %s89 = sadd.s32 %s88, 1
    %s90 = scalar_select %p87, %s88, %s89
    %p93 = pneg %p87
    %p94 = scmp.eq.s32.totalorder %s14, 7
    %p95 = por %p93, %p94
    %p96 = scmp.ne.s32.totalorder %s88, %s91
    %p97 = scmp.eq.s32.totalorder %s14, 0
    %p98 = por %p96, %p97
    %p99 = scmp.ne.s32.totalorder %s88, %s91
    %p100 = scmp.eq.s32.totalorder %s19, 7
    %p101 = por %p99, %p100
    %p102 = scmp.ne.s32.totalorder %s91, %s92
    %p103 = scmp.eq.s32.totalorder %s19, 0
    %p104 = por %p102, %p103
    %p105 = scmp.ne.s32.totalorder %s91, %s92
    %p106 = scmp.eq.s32.totalorder %s20, 7
    %p107 = por %p105, %p106
    %p109 = scmp.ne.s32.totalorder %s92, %s108
    %p110 = scmp.eq.s32.totalorder %s20, 0
    %p111 = por %p109, %p110
    %s112 = ssub.s32 %s21, %s33
    %s113 = ssub.s32 %s22, %s29
    %s114 = sor.u32 %s112, %s113
    %p115 = scmp.eq.s32.totalorder %s114, 0
    %s117 = sadd.s32 %s116, 1
    %s118 = scalar_select %p115, %s116, %s117
    %p121 = pneg %p115
    %p122 = scmp.eq.s32.totalorder %s14, 7
    %p123 = por %p121, %p122
    %p124 = scmp.ne.s32.totalorder %s116, %s119
    %p125 = scmp.eq.s32.totalorder %s14, 0
    %p126 = por %p124, %p125
    %p127 = scmp.ne.s32.totalorder %s116, %s119
    %p128 = scmp.eq.s32.totalorder %s19, 7
    %p129 = por %p127, %p128
    %p130 = scmp.ne.s32.totalorder %s119, %s120
    %p131 = scmp.eq.s32.totalorder %s19, 0
    %p132 = por %p130, %p131
    %p133 = scmp.ne.s32.totalorder %s119, %s120
    %p134 = scmp.eq.s32.totalorder %s20, 7
    %p135 = por %p133, %p134
    %p137 = scmp.ne.s32.totalorder %s120, %s136
    %p138 = scmp.eq.s32.totalorder %s20, 0
    %p139 = por %p137, %p138
    %s140 = sadd.s32 %s22, 1
    %s141 = smul.u32 %s140, 4
    %p142 = scmp.lt.s32.totalorder %s141, 15
    %s143 = scalar_select %p142, %s141, 15
    %s144 = sadd.s32 %s29, 1
    %s145 = smul.u32 %s144, 4
    %p146 = scmp.lt.s32.totalorder %s145, 15
    %s147 = scalar_select %p146, %s145, 15
    %s148 = ssub.s32 %s21, %s33
    %s149 = ssub.s32 %s143, %s147
    %s150 = sor.u32 %s148, %s149
    %p151 = scmp.eq.s32.totalorder %s150, 0
    %s153 = sadd.s32 %s152, 1
    %s154 = scalar_select %p151, %s152, %s153
    %p157 = pneg %p151
    %p158 = scmp.eq.s32.totalorder %s14, 7
    %p159 = por %p157, %p158
    %p160 = scmp.ne.s32.totalorder %s152, %s155
    %p161 = scmp.eq.s32.totalorder %s14, 0
    %p162 = por %p160, %p161
    %p163 = scmp.ne.s32.totalorder %s152, %s155
    %p164 = scmp.eq.s32.totalorder %s19, 7
    %p165 = por %p163, %p164
    %p166 = scmp.ne.s32.totalorder %s155, %s156
    %p167 = scmp.eq.s32.totalorder %s19, 0
    %p168 = por %p166, %p167
    %p169 = scmp.ne.s32.totalorder %s155, %s156
    %p170 = scmp.eq.s32.totalorder %s20, 7
    %p171 = por %p169, %p170
    %p173 = scmp.ne.s32.totalorder %s156, %s172
    %p174 = scmp.eq.s32.totalorder %s20, 0
    %p175 = por %p173, %p174
    %s177 = sadd.s32 %s176, 1
    %p180 = scmp.eq.s32.totalorder %s14, 7
    %p181 = scmp.ne.s32.totalorder %s176, %s178
    %p182 = scmp.eq.s32.totalorder %s14, 0
    %p183 = por %p181, %p182
    %p184 = scmp.ne.s32.totalorder %s176, %s178
    %p185 = scmp.eq.s32.totalorder %s19, 7
    %p186 = por %p184, %p185
    %p187 = scmp.ne.s32.totalorder %s178, %s179
    %p188 = scmp.eq.s32.totalorder %s19, 0
    %p189 = por %p187, %p188
    %p190 = scmp.ne.s32.totalorder %s178, %s179
    %p191 = scmp.eq.s32.totalorder %s20, 7
    %p192 = por %p190, %p191
    %p194 = scmp.ne.s32.totalorder %s179, %s193
    %p195 = scmp.eq.s32.totalorder %s20, 0
    %p196 = por %p194, %p195
    %s197 = ssub.s32 %s21, %s33
    %s198 = ssub.s32 %s22, %s29
    %s199 = sor.u32 %s197, %s198
    %p200 = scmp.eq.s32.totalorder %s199, 0
    %s202 = sadd.s32 %s201, 1
    %s203 = scalar_select %p200, %s201, %s202
    %p206 = pneg %p200
    %p207 = scmp.eq.s32.totalorder %s14, 7
    %p208 = por %p206, %p207
    %p209 = scmp.ne.s32.totalorder %s201, %s204
    %p210 = scmp.eq.s32.totalorder %s14, 0
    %p211 = por %p209, %p210
    %p212 = scmp.ne.s32.totalorder %s201, %s204
    %p213 = scmp.eq.s32.totalorder %s19, 7
    %p214 = por %p212, %p213
    %p215 = scmp.ne.s32.totalorder %s204, %s205
    %p216 = scmp.eq.s32.totalorder %s19, 0
    %p217 = por %p215, %p216
    %p218 = scmp.ne.s32.totalorder %s204, %s205
    %p219 = scmp.eq.s32.totalorder %s20, 7
    %p220 = por %p218, %p219
    %p222 = scmp.ne.s32.totalorder %s205, %s221
    %p223 = scmp.eq.s32.totalorder %s20, 0
    %p224 = por %p222, %p223
    %s225 = ssub.s32 %s21, %s33
    %p226 = scmp.eq.s32.totalorder %s225, 0
    %s228 = sadd.s32 %s227, 1
    %s229 = scalar_select %p226, %s227, %s228
    %p232 = pneg %p226
    %p233 = scmp.eq.s32.totalorder %s14, 7
    %p234 = por %p232, %p233
    %p235 = scmp.ne.s32.totalorder %s227, %s230
    %p236 = scmp.eq.s32.totalorder %s14, 0
    %p237 = por %p235, %p236
    %p238 = scmp.ne.s32.totalorder %s227, %s230
    %p239 = scmp.eq.s32.totalorder %s19, 7
    %p240 = por %p238, %p239
    %p241 = scmp.ne.s32.totalorder %s230, %s231
    %p242 = scmp.eq.s32.totalorder %s19, 0
    %p243 = por %p241, %p242
    %p244 = scmp.ne.s32.totalorder %s230, %s231
    %p245 = scmp.eq.s32.totalorder %s20, 7
    %p246 = por %p244, %p245
    %p248 = scmp.ne.s32.totalorder %s231, %s247
    %p249 = scmp.eq.s32.totalorder %s20, 0
    %p250 = por %p248, %p249
    %p251 = scmp.le.s32.totalorder 1, %s14
    %p252 = scmp.lt.s32.totalorder %s14, 9
    %p253 = pnand %p251, %p252
    %p254 = pneg %p253
    // Predicated region
    $region9: #{triple_conv3_pallas.4} parent=5 // pred_check
      _
    $region10: #{triple_conv3_pallas.4} parent=5 // pred_check_branch
      %256 = sbr.rel (%p253) target = $region12
    $region11: #{triple_conv3_pallas.4} parent=5 // pred_region
      %s257 = ssub.s32 %s14, 1
      // Predicated region
      $region13: #{triple_conv3_pallas.4} parent=11 // pred_check
        %p258 = pneg %p47
      $region14: #{triple_conv3_pallas.4} parent=11 // pred_check_branch
        %260 = sbr.rel (%p258) target = $region16
      $region15: #{triple_conv3_pallas.4} parent=11 // pred_region
        _
      $region16: #{triple_conv3_pallas.4} parent=11 // pred_fallthru
        _
      // Predicated region
      $region17: #{triple_conv3_pallas.4} parent=11 // pred_check
        %p261 = pneg %p68
      $region18: #{triple_conv3_pallas.4} parent=11 // pred_check_branch
        %263 = sbr.rel (%p261) target = $region20
      $region19: #{triple_conv3_pallas.4} parent=11 // pred_region
        _
      $region20: #{triple_conv3_pallas.4} parent=11 // pred_fallthru
        _
      // Predicated region
      $region21: #{triple_conv3_pallas.4} parent=11 // pred_check
        %p264 = pneg %p189
      $region22: #{triple_conv3_pallas.4} parent=11 // pred_check_branch
        %266 = sbr.rel (%p264) target = $region24
      $region23: #{triple_conv3_pallas.4} parent=11 // pred_region
        _
      $region24: #{triple_conv3_pallas.4} parent=11 // pred_fallthru
        _
    $region12: #{triple_conv3_pallas.4} parent=5 // pred_fallthru
      _
    %p267 = scmp.lt.s32.totalorder %s14, 8
    // Predicated region
    $region25: #{triple_conv3_pallas.4} parent=5 // pred_check
      %p268 = pneg %p267
    $region26: #{triple_conv3_pallas.4} parent=5 // pred_check_branch
      %270 = sbr.rel (%p268) target = $region28
    $region27: #{triple_conv3_pallas.4} parent=5 // pred_region
      // Predicated region
      $region29: #{triple_conv3_pallas.4} parent=27 // pred_check
        %p271 = pneg %p98
      $region30: #{triple_conv3_pallas.4} parent=27 // pred_check_branch
        %273 = sbr.rel (%p271) target = $region32
      $region31: #{triple_conv3_pallas.4} parent=27 // pred_region
        %s274 = smul.u32 %s22, 4
        %s275 = ssub.s32 %s274, 1
        %p276 = scmp.gt.s32.totalorder %s275, 0
        %s277 = scalar_select %p276, %s275, 0
        %p278 = scmp.lt.s32.totalorder %s21, 1
        %s279 = scalar_select %p278, %s21, 1
        %p280 = scmp.lt.s32.totalorder %s277, 15
        %s281 = scalar_select %p280, %s277, 15
        %s282 = smul.addr %s281, 4
        %s283 = smul.addr %s279, 64
        %s284 = sadd.s32 %s282, %s283
        %s285 = smul.addr %s284, 8
        %s286 = scalar_lea.vmem %s2, %s285
        %s287 = smul.u32 %s22, 4
        %s288 = ssub.s32 %s287, 1
        %p289 = scmp.gt.s32.totalorder %s288, 0
        %s290 = scalar_select %p289, %s288, 0
      $region32: #{triple_conv3_pallas.4} parent=27 // pred_fallthru
        _
      // Predicated region
      $region33: #{triple_conv3_pallas.4} parent=27 // pred_check
        %p291 = pneg %p126
      $region34: #{triple_conv3_pallas.4} parent=27 // pred_check_branch
        %293 = sbr.rel (%p291) target = $region36
      $region35: #{triple_conv3_pallas.4} parent=27 // pred_region
        %s294 = smul.u32 4, %s22
        %p295 = scmp.lt.s32.totalorder %s21, 1
        %s296 = scalar_select %p295, %s21, 1
        %p297 = scmp.lt.s32.totalorder %s294, 15
        %s298 = scalar_select %p297, %s294, 15
        %s299 = smul.addr %s298, 4
        %s300 = smul.addr %s296, 64
        %s301 = sadd.s32 %s299, %s300
        %s302 = smul.addr %s301, 8
        %s303 = scalar_lea.vmem %s3, %s302
        %s304 = smul.u32 4, %s22
      $region36: #{triple_conv3_pallas.4} parent=27 // pred_fallthru
        _
      // Predicated region
      $region37: #{triple_conv3_pallas.4} parent=27 // pred_check
        %p305 = pneg %p162
      $region38: #{triple_conv3_pallas.4} parent=27 // pred_check_branch
        %307 = sbr.rel (%p305) target = $region40
      $region39: #{triple_conv3_pallas.4} parent=27 // pred_region
        %s308 = sadd.s32 %s22, 1
        %s309 = smul.u32 %s308, 4
        %p310 = scmp.lt.s32.totalorder %s309, 15
        %s311 = scalar_select %p310, %s309, 15
        %p312 = scmp.lt.s32.totalorder %s21, 1
        %s313 = scalar_select %p312, %s21, 1
        %p314 = scmp.lt.s32.totalorder %s311, 15
        %s315 = scalar_select %p314, %s311, 15
        %s316 = smul.addr %s315, 4
        %s317 = smul.addr %s313, 64
        %s318 = sadd.s32 %s316, %s317
        %s319 = smul.addr %s318, 8
        %s320 = scalar_lea.vmem %s4, %s319
        %s321 = sadd.s32 %s22, 1
        %s322 = smul.u32 %s321, 4
        %p323 = scmp.lt.s32.totalorder %s322, 15
        %s324 = scalar_select %p323, %s322, 15
      $region40: #{triple_conv3_pallas.4} parent=27 // pred_fallthru
        _
    $region28: #{triple_conv3_pallas.4} parent=5 // pred_fallthru
      _
    %p325 = scmp.le.s32.totalorder 1, %s14
    %p326 = scmp.lt.s32.totalorder %s14, 9
    %p327 = pnand %p325, %p326
    %p328 = pneg %p327
    // Predicated region
    $region41: #{triple_conv3_pallas.4} parent=5 // pred_check
      _
    $region42: #{triple_conv3_pallas.4} parent=5 // pred_check_branch
      %330 = sbr.rel (%p327) target = $region44
    $region43: #{triple_conv3_pallas.4} parent=5 // pred_region
      %s331 = ssub.s32 %s14, 1
      %p332 = pneg %p47
      %p333 = pneg %p44
      %p334 = pneg %p68
      %p335 = pneg %p65
      %s336 = smul.u32 %s24, 4
      %s337 = ssub.s32 %s336, 1
      %p338 = scmp.gt.s32.totalorder %s337, 0
      %s339 = scalar_select %p338, %s337, 0
      %p340 = scmp.lt.s32.totalorder %s23, 1
      %s341 = scalar_select %p340, %s23, 1
      %p342 = scmp.lt.s32.totalorder %s339, 15
      %s343 = scalar_select %p342, %s339, 15
      %s344 = smul.addr %s343, 4
      %s345 = smul.addr %s341, 64
      %s346 = sadd.s32 %s344, %s345
      %s347 = smul.addr %s346, 8
      %s348 = scalar_lea.vmem %s2, %s347
      %p349 = pneg %p104
      %p350 = pneg %p101
      %s351 = smul.u32 4, %s24
      %p352 = scmp.lt.s32.totalorder %s23, 1
      %s353 = scalar_select %p352, %s23, 1
      %p354 = scmp.lt.s32.totalorder %s351, 15
      %s355 = scalar_select %p354, %s351, 15
      %s356 = smul.addr %s355, 4
      %s357 = smul.addr %s353, 64
      %s358 = sadd.s32 %s356, %s357
      %s359 = smul.addr %s358, 8
      %s360 = scalar_lea.vmem %s3, %s359
      %p361 = pneg %p132
      %p362 = pneg %p129
      %s363 = sadd.s32 %s24, 1
      %s364 = smul.u32 %s363, 4
      %p365 = scmp.lt.s32.totalorder %s364, 15
      %s366 = scalar_select %p365, %s364, 15
      %p367 = scmp.lt.s32.totalorder %s23, 1
      %s368 = scalar_select %p367, %s23, 1
      %p369 = scmp.lt.s32.totalorder %s366, 15
      %s370 = scalar_select %p369, %s366, 15
      %s371 = smul.addr %s370, 4
      %s372 = smul.addr %s368, 64
      %s373 = sadd.s32 %s371, %s372
      %s374 = smul.addr %s373, 8
      %s375 = scalar_lea.vmem %s4, %s374
      %p376 = pneg %p168
      %p377 = pneg %p165
      %p378 = pneg %p189
      %p379 = pneg %p186
      %p380 = pneg %p217
      %p381 = pneg %p214
      %s382 = smul.u32 4, %s24
      %p383 = scmp.lt.s32.totalorder %s23, 1
      %s384 = scalar_select %p383, %s23, 1
      %p385 = scmp.lt.s32.totalorder %s382, 15
      %s386 = scalar_select %p385, %s382, 15
      %s387 = smul.addr %s386, 4
      %s388 = smul.addr %s384, 64
      %s389 = sadd.s32 %s387, %s388
      %s390 = smul.addr %s389, 8
      %s391 = scalar_lea.vmem %s6, %s390
      %p392 = pneg %p243
      %p393 = pneg %p240
      %p394 = scmp.lt.s32.totalorder %s23, 1
      %s395 = scalar_select %p394, %s23, 1
      %s396 = smul.addr %s395, 2
      %s397 = scalar_lea.vmem %s7, %s396
      %s398 = smul.u32 %s24, 4
      %s399 = ssub.s32 %s398, 1
      %p400 = scmp.gt.s32.totalorder %s399, 0
      %s401 = scalar_select %p400, %s399, 0
      %p402 = scmp.lt.s32.totalorder %s23, 1
      %s403 = scalar_select %p402, %s23, 1
      %p404 = scmp.lt.s32.totalorder %s401, 15
      %s405 = scalar_select %p404, %s401, 15
      %s406 = smul.addr %s405, 4
      %s407 = smul.addr %s403, 64
      %s408 = sadd.s32 %s406, %s407
      %s409 = smul.addr %s408, 8
      %s410 = scalar_lea.vmem %s2, %s409
      %s411 = smul.u32 %s24, 4
      %s412 = ssub.s32 %s411, 1
      %p413 = scmp.gt.s32.totalorder %s412, 0
      %s414 = scalar_select %p413, %s412, 0
      %s415 = smul.u32 4, %s24
      %p416 = scmp.lt.s32.totalorder %s23, 1
      %s417 = scalar_select %p416, %s23, 1
      %p418 = scmp.lt.s32.totalorder %s415, 15
      %s419 = scalar_select %p418, %s415, 15
      %s420 = smul.addr %s419, 4
      %s421 = smul.addr %s417, 64
      %s422 = sadd.s32 %s420, %s421
      %s423 = smul.addr %s422, 8
      %s424 = scalar_lea.vmem %s3, %s423
      %s425 = smul.u32 4, %s24
      %s426 = sadd.s32 %s24, 1
      %s427 = smul.u32 %s426, 4
      %p428 = scmp.lt.s32.totalorder %s427, 15
      %s429 = scalar_select %p428, %s427, 15
      %p430 = scmp.lt.s32.totalorder %s23, 1
      %s431 = scalar_select %p430, %s23, 1
      %p432 = scmp.lt.s32.totalorder %s429, 15
      %s433 = scalar_select %p432, %s429, 15
      %s434 = smul.addr %s433, 4
      %s435 = smul.addr %s431, 64
      %s436 = sadd.s32 %s434, %s435
      %s437 = smul.addr %s436, 8
      %s438 = scalar_lea.vmem %s4, %s437
      %s439 = sadd.s32 %s24, 1
      %s440 = smul.u32 %s439, 4
      %p441 = scmp.lt.s32.totalorder %s440, 15
      %s442 = scalar_select %p441, %s440, 15
      %s443 = smul.u32 4, %s24
      %p444 = scmp.lt.s32.totalorder %s23, 1
      %s445 = scalar_select %p444, %s23, 1
      %p446 = scmp.lt.s32.totalorder %s443, 15
      %s447 = scalar_select %p446, %s443, 15
      %s448 = smul.addr %s447, 4
      %s449 = smul.addr %s445, 64
      %s450 = sadd.s32 %s448, %s449
      %s451 = smul.addr %s450, 8
      %s452 = scalar_lea.vmem %s6, %s451
      %s453 = smul.u32 4, %s24
      %p454 = scmp.lt.s32.totalorder %s23, 1
      %s455 = scalar_select %p454, %s23, 1
      %s456 = smul.addr %s455, 2
      %s457 = scalar_lea.vmem %s7, %s456
      %v459 = vld [vmem:[%s0] sm:$0x1]
      %v460 = vld [vmem:[%s1] sm:$0x1]
      %v461 = vlaneseq
      %v462 = vshrl.u32 %v461, 7
      %v463 = vadd.s32 %v462, 8
      %v464 = vadd.s32 %v462, 16
      %v465 = vadd.s32 %v462, 24
      %vm466 = vcmp.ge.s32.totalorder %v462, 1
      %vm467 = vcmp.ge.s32.totalorder %v463, 1
      %vm468 = vcmp.ge.s32.totalorder %v464, 1
      %vm469 = vcmp.ge.s32.totalorder %v465, 1
      %vm470 = vcmp.le.s32.totalorder %v462, 16
      %vm471 = vcmp.le.s32.totalorder %v463, 16
      %vm472 = vcmp.le.s32.totalorder %v464, 16
      %vm473 = vcmp.le.s32.totalorder %v465, 16
      %vm474 = vmand %vm466, %vm470
      %vm475 = vmand %vm467, %vm471
      %vm476 = vmand %vm468, %vm472
      %vm477 = vmand %vm469, %vm473
      %p478 = scmp.eq.s32.totalorder %s24, 0
      %s479 = scalar_select %p478, 0.0, 1.0
      %v480 = vld [vmem:[%s410] sm:$0xff]
      %v481 = vld [vmem:[%s410 + $0x8] sm:$0xff]
      %v482 = vld [vmem:[%s410 + $0x10] sm:$0xff]
      %v483 = vld [vmem:[%s410 + $0x18] sm:$0xff]
      %v485 = vlaneseq
      %v486 = vshrl.u32 %v485, 7
      %v487 = vsub.s32 0, %v486
      %v488 = vrot.slane %v459, %v487
      %v490 = vmul.f32 %v480, %v488
      %v491 = vmul.f32 %v481, %v488
      %v492 = vmul.f32 %v482, %v488
      %v493 = vmul.f32 %v483, %v488
      %v495 = vlaneseq
      %v496 = vshrl.u32 %v495, 7
      %v497 = vsub.s32 0, %v496
      %v498 = vrot.slane %v460, %v497
      %v500 = vadd.f32 %v490, %v498
      %v501 = vadd.f32 %v491, %v498
      %v502 = vadd.f32 %v492, %v498
      %v503 = vadd.f32 %v493, %v498
      %v504 = vsel %vm474, 1, 0
      %v505 = vsel %vm475, 1, 0
      %v506 = vsel %vm476, 1, 0
      %v507 = vsel %vm477, 1, 0
      %vm508 = vcmp.eq.s32.totalorder %v504, 1
      %vm509 = vcmp.eq.s32.totalorder %v505, 1
      %vm510 = vcmp.eq.s32.totalorder %v506, 1
      %vm511 = vcmp.eq.s32.totalorder %v507, 1
      %v512 = vsel %vm508, %v500, 0.0
      %v513 = vsel %vm509, %v501, 0.0
      %v514 = vsel %vm510, %v502, 0.0
      %v515 = vsel %vm511, %v503, 0.0
      %v516 = vstv %s479
      %v517 = vmul.f32 %v512, %v516
      %v518 = vmul.f32 %v513, %v516
      %v519 = vmul.f32 %v514, %v516
      %v520 = vmul.f32 %v515, %v516
      %p521 = scmp.eq.s32.totalorder %s24, 3
      %s522 = scalar_select %p521, 0.0, 1.0
      %v523 = vld [vmem:[%s438] sm:$0xff]
      %v524 = vld [vmem:[%s438 + $0x8] sm:$0xff]
      %v525 = vld [vmem:[%s438 + $0x10] sm:$0xff]
      %v526 = vld [vmem:[%s438 + $0x18] sm:$0xff]
      %v527 = vmul.f32 %v523, %v488
      %v528 = vmul.f32 %v524, %v488
      %v529 = vmul.f32 %v525, %v488
      %v530 = vmul.f32 %v526, %v488
      %v531 = vadd.f32 %v527, %v498
      %v532 = vadd.f32 %v528, %v498
      %v533 = vadd.f32 %v529, %v498
      %v534 = vadd.f32 %v530, %v498
      %v535 = vsel %vm508, %v531, 0.0
      %v536 = vsel %vm509, %v532, 0.0
      %v537 = vsel %vm510, %v533, 0.0
      %v538 = vsel %vm511, %v534, 0.0
      %v539 = vstv %s522
      %v540 = vmul.f32 %v535, %v539
      %v541 = vmul.f32 %v536, %v539
      %v542 = vmul.f32 %v537, %v539
      %v543 = vmul.f32 %v538, %v539
      %v544 = vld [vmem:[%s424] sm:$0xff]
      %v545 = vld [vmem:[%s424 + $0x8] sm:$0xff]
      %v546 = vld [vmem:[%s424 + $0x10] sm:$0xff]
      %v547 = vld [vmem:[%s424 + $0x18] sm:$0xff]
      %v548 = vld [vmem:[%s424 + $0x20] sm:$0xff]
      %v549 = vld [vmem:[%s424 + $0x28] sm:$0xff]
      %v550 = vld [vmem:[%s424 + $0x30] sm:$0xff]
      %v551 = vld [vmem:[%s424 + $0x38] sm:$0xff]
      %v552 = vld [vmem:[%s424 + $0x40] sm:$0xff]
      %v553 = vld [vmem:[%s424 + $0x48] sm:$0xff]
      %v554 = vld [vmem:[%s424 + $0x50] sm:$0xff]
      %v555 = vld [vmem:[%s424 + $0x58] sm:$0xff]
      %v556 = vld [vmem:[%s424 + $0x60] sm:$0xff]
      %v557 = vld [vmem:[%s424 + $0x68] sm:$0xff]
      %v558 = vld [vmem:[%s424 + $0x70] sm:$0xff]
      %v559 = vld [vmem:[%s424 + $0x78] sm:$0xff]
      %v560 = vmul.f32 %v544, %v488
      %v561 = vmul.f32 %v545, %v488
      %v562 = vmul.f32 %v546, %v488
      %v563 = vmul.f32 %v547, %v488
      %v564 = vmul.f32 %v548, %v488
      %v565 = vmul.f32 %v549, %v488
      %v566 = vmul.f32 %v550, %v488
      %v567 = vmul.f32 %v551, %v488
      %v568 = vmul.f32 %v552, %v488
      %v569 = vmul.f32 %v553, %v488
      %v570 = vmul.f32 %v554, %v488
      %v571 = vmul.f32 %v555, %v488
      %v572 = vmul.f32 %v556, %v488
      %v573 = vmul.f32 %v557, %v488
      %v574 = vmul.f32 %v558, %v488
      %v575 = vmul.f32 %v559, %v488
      %v576 = vadd.f32 %v560, %v498
      %v577 = vadd.f32 %v561, %v498
      %v578 = vadd.f32 %v562, %v498
      %v579 = vadd.f32 %v563, %v498
      %v580 = vadd.f32 %v564, %v498
      %v581 = vadd.f32 %v565, %v498
      %v582 = vadd.f32 %v566, %v498
      %v583 = vadd.f32 %v567, %v498
      %v584 = vadd.f32 %v568, %v498
      %v585 = vadd.f32 %v569, %v498
      %v586 = vadd.f32 %v570, %v498
      %v587 = vadd.f32 %v571, %v498
      %v588 = vadd.f32 %v572, %v498
      %v589 = vadd.f32 %v573, %v498
      %v590 = vadd.f32 %v574, %v498
      %v591 = vadd.f32 %v575, %v498
      %v592 = vsel %vm508, %v576, 0.0
      %v593 = vsel %vm509, %v577, 0.0
      %v594 = vsel %vm510, %v578, 0.0
      %v595 = vsel %vm511, %v579, 0.0
      %v596 = vsel %vm508, %v580, 0.0
      %v597 = vsel %vm509, %v581, 0.0
      %v598 = vsel %vm510, %v582, 0.0
      %v599 = vsel %vm511, %v583, 0.0
      %v600 = vsel %vm508, %v584, 0.0
      %v601 = vsel %vm509, %v585, 0.0
      %v602 = vsel %vm510, %v586, 0.0
      %v603 = vsel %vm511, %v587, 0.0
      %v604 = vsel %vm508, %v588, 0.0
      %v605 = vsel %vm509, %v589, 0.0
      %v606 = vsel %vm510, %v590, 0.0
      %v607 = vsel %vm511, %v591, 0.0
      %v608 = vrot.slane %v517, 7
      %v609 = vrot.slane %v592, 7
      %v610 = vrot.slane %v596, 7
      %v611 = vrot.slane %v600, 7
      %v612 = vrot.slane %v604, 7
      %v613 = vrot.slane %v540, 7
      %v614 = vrot.slane %v518, 7
      %v615 = vrot.slane %v593, 7
      %v616 = vrot.slane %v597, 7
      %v617 = vrot.slane %v601, 7
      %v618 = vrot.slane %v605, 7
      %v619 = vrot.slane %v541, 7
      %v620 = vrot.slane %v519, 7
      %v621 = vrot.slane %v594, 7
      %v622 = vrot.slane %v598, 7
      %v623 = vrot.slane %v602, 7
      %v624 = vrot.slane %v606, 7
      %v625 = vrot.slane %v542, 7
      %v626 = vrot.slane %v520, 7
      %v627 = vrot.slane %v595, 7
      %v628 = vrot.slane %v599, 7
      %v629 = vrot.slane %v603, 7
      %v630 = vrot.slane %v607, 7
      %v631 = vrot.slane %v543, 7
      %vm632 = vcmp.lt.s32.totalorder %v462, 1
      %v633 = vsel %vm632, %v620, %v626
      %v634 = vsel %vm632, %v621, %v627
      %v635 = vsel %vm632, %v622, %v628
      %v636 = vsel %vm632, %v623, %v629
      %v637 = vsel %vm632, %v624, %v630
      %v638 = vsel %vm632, %v625, %v631
      %v639 = vsel %vm632, %v614, %v620
      %v640 = vsel %vm632, %v615, %v621
      %v641 = vsel %vm632, %v616, %v622
      %v642 = vsel %vm632, %v617, %v623
      %v643 = vsel %vm632, %v618, %v624
      %v644 = vsel %vm632, %v619, %v625
      %v645 = vsel %vm632, %v608, %v614
      %v646 = vsel %vm632, %v609, %v615
      %v647 = vsel %vm632, %v610, %v616
      %v648 = vsel %vm632, %v611, %v617
      %v649 = vsel %vm632, %v612, %v618
      %v650 = vsel %vm632, %v613, %v619
      %v651 = vsel %vm632, %v626, %v608
      %v652 = vsel %vm632, %v627, %v609
      %v653 = vsel %vm632, %v628, %v610
      %v654 = vsel %vm632, %v629, %v611
      %v655 = vsel %vm632, %v630, %v612
      %v656 = vsel %vm632, %v631, %v613
      %v657 = vrot.slane %v517, 1
      %v658 = vrot.slane %v592, 1
      %v659 = vrot.slane %v596, 1
      %v660 = vrot.slane %v600, 1
      %v661 = vrot.slane %v604, 1
      %v662 = vrot.slane %v540, 1
      %v663 = vrot.slane %v518, 1
      %v664 = vrot.slane %v593, 1
      %v665 = vrot.slane %v597, 1
      %v666 = vrot.slane %v601, 1
      %v667 = vrot.slane %v605, 1
      %v668 = vrot.slane %v541, 1
      %v669 = vrot.slane %v519, 1
      %v670 = vrot.slane %v594, 1
      %v671 = vrot.slane %v598, 1
      %v672 = vrot.slane %v602, 1
      %v673 = vrot.slane %v606, 1
      %v674 = vrot.slane %v542, 1
      %v675 = vrot.slane %v520, 1
      %v676 = vrot.slane %v595, 1
      %v677 = vrot.slane %v599, 1
      %v678 = vrot.slane %v603, 1
      %v679 = vrot.slane %v607, 1
      %v680 = vrot.slane %v543, 1
      %vm681 = vcmp.lt.s32.totalorder %v462, 7
      %v682 = vsel %vm681, %v669, %v675
      %v683 = vsel %vm681, %v670, %v676
      %v684 = vsel %vm681, %v671, %v677
      %v685 = vsel %vm681, %v672, %v678
      %v686 = vsel %vm681, %v673, %v679
      %v687 = vsel %vm681, %v674, %v680
      %v688 = vsel %vm681, %v663, %v669
      %v689 = vsel %vm681, %v664, %v670
      %v690 = vsel %vm681, %v665, %v671
      %v691 = vsel %vm681, %v666, %v672
      %v692 = vsel %vm681, %v667, %v673
      %v693 = vsel %vm681, %v668, %v674
      %v694 = vsel %vm681, %v657, %v663
      %v695 = vsel %vm681, %v658, %v664
      %v696 = vsel %vm681, %v659, %v665
      %v697 = vsel %vm681, %v660, %v666
      %v698 = vsel %vm681, %v661, %v667
      %v699 = vsel %vm681, %v662, %v668
      %v700 = vsel %vm681, %v675, %v657
      %v701 = vsel %vm681, %v676, %v658
      %v702 = vsel %vm681, %v677, %v659
      %v703 = vsel %vm681, %v678, %v660
      %v704 = vsel %vm681, %v679, %v661
      %v705 = vsel %vm681, %v680, %v662
      %730 = vrot.lane.b32.xlu0 %v517, 4
      %v731 = vpop.permute.xlu0 %730
      %732 = vrot.lane.b32.xlu0 %v518, 4
      %v733 = vpop.permute.xlu0 %732
      %734 = vrot.lane.b32.xlu0 %v519, 4
      %v735 = vpop.permute.xlu0 %734
      %736 = vrot.lane.b32.xlu0 %v520, 4
      %v737 = vpop.permute.xlu0 %736
      %738 = vrot.lane.b32.xlu0 %v592, 4
      %v739 = vpop.permute.xlu0 %738
      %740 = vrot.lane.b32.xlu0 %v593, 4
      %v741 = vpop.permute.xlu0 %740
      %742 = vrot.lane.b32.xlu0 %v594, 4
      %v743 = vpop.permute.xlu0 %742
      %744 = vrot.lane.b32.xlu0 %v595, 4
      %v745 = vpop.permute.xlu0 %744
      %746 = vrot.lane.b32.xlu0 %v596, 4
      %v747 = vpop.permute.xlu0 %746
      %748 = vrot.lane.b32.xlu0 %v597, 4
      %v749 = vpop.permute.xlu0 %748
      %750 = vrot.lane.b32.xlu0 %v598, 4
      %v751 = vpop.permute.xlu0 %750
      %752 = vrot.lane.b32.xlu0 %v599, 4
      %v753 = vpop.permute.xlu0 %752
      %754 = vrot.lane.b32.xlu0 %v600, 4
      %v755 = vpop.permute.xlu0 %754
      %756 = vrot.lane.b32.xlu0 %v601, 4
      %v757 = vpop.permute.xlu0 %756
      %758 = vrot.lane.b32.xlu0 %v602, 4
      %v759 = vpop.permute.xlu0 %758
      %760 = vrot.lane.b32.xlu0 %v603, 4
      %v761 = vpop.permute.xlu0 %760
      %762 = vrot.lane.b32.xlu0 %v604, 4
      %v763 = vpop.permute.xlu0 %762
      %764 = vrot.lane.b32.xlu0 %v605, 4
      %v765 = vpop.permute.xlu0 %764
      %766 = vrot.lane.b32.xlu0 %v606, 4
      %v767 = vpop.permute.xlu0 %766
      %768 = vrot.lane.b32.xlu0 %v607, 4
      %v769 = vpop.permute.xlu0 %768
      %770 = vrot.lane.b32.xlu0 %v540, 4
      %v771 = vpop.permute.xlu0 %770
      %772 = vrot.lane.b32.xlu0 %v541, 4
      %v773 = vpop.permute.xlu0 %772
      %774 = vrot.lane.b32.xlu0 %v542, 4
      %v775 = vpop.permute.xlu0 %774
      %776 = vrot.lane.b32.xlu0 %v543, 4
      %v777 = vpop.permute.xlu0 %776
      %826 = vrot.lane.b32.xlu0 %v694, 8
      %v827 = vpop.permute.xlu0 %826
      %828 = vrot.lane.b32.xlu0 %v688, 8
      %v829 = vpop.permute.xlu0 %828
      %830 = vrot.lane.b32.xlu0 %v682, 8
      %v831 = vpop.permute.xlu0 %830
      %832 = vrot.lane.b32.xlu0 %v700, 8
      %v833 = vpop.permute.xlu0 %832
      %834 = vrot.lane.b32.xlu0 %v695, 8
      %v835 = vpop.permute.xlu0 %834
      %836 = vrot.lane.b32.xlu0 %v689, 8
      %v837 = vpop.permute.xlu0 %836
      %838 = vrot.lane.b32.xlu0 %v683, 8
      %v839 = vpop.permute.xlu0 %838
      %840 = vrot.lane.b32.xlu0 %v701, 8
      %v841 = vpop.permute.xlu0 %840
      %842 = vrot.lane.b32.xlu0 %v696, 8
      %v843 = vpop.permute.xlu0 %842
      %844 = vrot.lane.b32.xlu0 %v690, 8
      %v845 = vpop.permute.xlu0 %844
      %846 = vrot.lane.b32.xlu0 %v684, 8
      %v847 = vpop.permute.xlu0 %846
      %848 = vrot.lane.b32.xlu0 %v702, 8
      %v849 = vpop.permute.xlu0 %848
      %850 = vrot.lane.b32.xlu0 %v697, 8
      %v851 = vpop.permute.xlu0 %850
      %852 = vrot.lane.b32.xlu0 %v691, 8
      %v853 = vpop.permute.xlu0 %852
      %854 = vrot.lane.b32.xlu0 %v685, 8
      %v855 = vpop.permute.xlu0 %854
      %856 = vrot.lane.b32.xlu0 %v703, 8
      %v857 = vpop.permute.xlu0 %856
      %858 = vrot.lane.b32.xlu0 %v698, 8
      %v859 = vpop.permute.xlu0 %858
      %860 = vrot.lane.b32.xlu0 %v692, 8
      %v861 = vpop.permute.xlu0 %860
      %862 = vrot.lane.b32.xlu0 %v686, 8
      %v863 = vpop.permute.xlu0 %862
      %864 = vrot.lane.b32.xlu0 %v704, 8
      %v865 = vpop.permute.xlu0 %864
      %866 = vrot.lane.b32.xlu0 %v699, 8
      %v867 = vpop.permute.xlu0 %866
      %868 = vrot.lane.b32.xlu0 %v693, 8
      %v869 = vpop.permute.xlu0 %868
      %870 = vrot.lane.b32.xlu0 %v687, 8
      %v871 = vpop.permute.xlu0 %870
      %872 = vrot.lane.b32.xlu0 %v705, 8
      %v873 = vpop.permute.xlu0 %872
      %vm898 = vcmask 31744
      %v899 = vsel %vm898, %v651, %v731
      %v900 = vsel %vm898, %v645, %v733
      %v901 = vsel %vm898, %v639, %v735
      %v902 = vsel %vm898, %v633, %v737
      %v903 = vsel %vm898, %v652, %v739
      %v904 = vsel %vm898, %v646, %v741
      %v905 = vsel %vm898, %v640, %v743
      %v906 = vsel %vm898, %v634, %v745
      %v907 = vsel %vm898, %v653, %v747
      %v908 = vsel %vm898, %v647, %v749
      %v909 = vsel %vm898, %v641, %v751
      %v910 = vsel %vm898, %v635, %v753
      %v911 = vsel %vm898, %v654, %v755
      %v912 = vsel %vm898, %v648, %v757
      %v913 = vsel %vm898, %v642, %v759
      %v914 = vsel %vm898, %v636, %v761
      %v915 = vsel %vm898, %v655, %v763
      %v916 = vsel %vm898, %v649, %v765
      %v917 = vsel %vm898, %v643, %v767
      %v918 = vsel %vm898, %v637, %v769
      %v919 = vsel %vm898, %v656, %v771
      %v920 = vsel %vm898, %v650, %v773
      %v921 = vsel %vm898, %v644, %v775
      %v922 = vsel %vm898, %v638, %v777
      %vm923 = vcmask 64512
      %v924 = vsel %vm923, %v899, %v827
      %v925 = vsel %vm923, %v900, %v829
      %v926 = vsel %vm923, %v901, %v831
      %v927 = vsel %vm923, %v902, %v833
      %v928 = vsel %vm923, %v903, %v835
      %v929 = vsel %vm923, %v904, %v837
      %v930 = vsel %vm923, %v905, %v839
      %v931 = vsel %vm923, %v906, %v841
      %v932 = vsel %vm923, %v907, %v843
      %v933 = vsel %vm923, %v908, %v845
      %v934 = vsel %vm923, %v909, %v847
      %v935 = vsel %vm923, %v910, %v849
      %v936 = vsel %vm923, %v911, %v851
      %v937 = vsel %vm923, %v912, %v853
      %v938 = vsel %vm923, %v913, %v855
      %v939 = vsel %vm923, %v914, %v857
      %v940 = vsel %vm923, %v915, %v859
      %v941 = vsel %vm923, %v916, %v861
      %v942 = vsel %vm923, %v917, %v863
      %v943 = vsel %vm923, %v918, %v865
      %v944 = vsel %vm923, %v919, %v867
      %v945 = vsel %vm923, %v920, %v869
      %v946 = vsel %vm923, %v921, %v871
      %v947 = vsel %vm923, %v922, %v873
      %v948 = vpack.c.bf16 %v925, %v924
      %v949 = vpack.c.bf16 %v927, %v926
      %v950 = vpack.c.bf16 %v929, %v928
      %v951 = vpack.c.bf16 %v931, %v930
      %v952 = vpack.c.bf16 %v933, %v932
      %v953 = vpack.c.bf16 %v935, %v934
      %v954 = vpack.c.bf16 %v937, %v936
      %v955 = vpack.c.bf16 %v939, %v938
      %v956 = vpack.c.bf16 %v941, %v940
      %v957 = vpack.c.bf16 %v943, %v942
      %v958 = vpack.c.bf16 %v945, %v944
      %v959 = vpack.c.bf16 %v947, %v946
      %v960 = vld [vmem:[%s5] sm:$0xf]
      %v961 = vld [vmem:[%s5 + $0x4] sm:$0x3]
      %s962 = scalar_lea.vmem %s5, 8
      %v963 = vld [vmem:[%s962] sm:$0xf]
      %v964 = vld [vmem:[%s962 + $0x4] sm:$0x3]
      %v967 = vunpack.c.l.b16 %v963
      %v968 = vunpack.c.l.b16 %v964
      %v969 = vpack.c.b16 %v968, %v967
      %vm970 = vcmask 97280
      %v972 = vsel %vm970, %v950, 0
      %v975 = vsel %vm970, %v951, 0
      %v978 = vsel %vm970, %v952, 0
      %v981 = vsel %vm970, %v953, 0
      %v984 = vsel %vm970, %v954, 0
      %v987 = vsel %vm970, %v955, 0
      %v990 = vsel %vm970, %v956, 0
      %v993 = vsel %vm970, %v957, 0
      %vm995 = vcmask 1045504
      %v997 = vsel %vm995, %v969, 0
      %999 = vmatprep.subr.bf16.mxu0 0
      %1000 = vmatpush1.bf16.msra.mxu0 0
      %1001 = vmatprep.subr.bf16.mxu0 0
      %1002 = vmatpush1.bf16.msra.mxu0 0
      %1003 = vmatprep.subr.bf16.mxu0 0
      %1004 = vmatpush1.bf16.msra.mxu0 0
      %1005 = vmatprep.subr.bf16.mxu0 0
      %1006 = vmatpush1.bf16.msra.mxu0 0
      %1007 = vmatprep.subr.bf16.mxu0 0
      %1008 = vmatpush1.bf16.msra.mxu0 0
      %1009 = vmatprep.subr.bf16.mxu0 0
      %1010 = vmatpush1.bf16.msra.mxu0 0
      %1011 = vmatprep.subr.bf16.mxu0 0
      %1012 = vmatpush1.bf16.msra.mxu0 0
      %1013 = vmatprep.subr.bf16.mxu0 0
      %1014 = vmatpush1.bf16.msra.mxu0 %v997
      %1015 = vmatprep.subr.bf16.mxu0 0
      %1016 = vmatpush2.bf16.msra.mxu0 0
      %1017 = vmatprep.subr.bf16.mxu0 0
      %1018 = vmatpush2.bf16.msra.mxu0 0
      %1019 = vmatprep.subr.bf16.mxu0 0
      %1020 = vmatpush2.bf16.msra.mxu0 0
      %1021 = vmatprep.subr.bf16.mxu0 0
      %1022 = vmatpush2.bf16.msra.mxu0 0
      %1023 = vmatprep.subr.bf16.mxu0 0
      %1024 = vmatpush2.bf16.msra.mxu0 0
      %1025 = vmatprep.subr.bf16.mxu0 0
      %1026 = vmatpush2.bf16.msra.mxu0 0
      %1027 = vmatprep.subr.bf16.mxu0 0
      %1028 = vmatpush2.bf16.msra.mxu0 0
      %1029 = vmatprep.subr.bf16.mxu0 0
      %1030 = vmatpush2.bf16.msra.mxu0 0
      %1031 = vmatprep.mubr.bf16.mxu0 0
      %1032 = vmatmul.mubr.bf16.gmra.mxu0 %v972
      %v1033 = vpop.f32.mrf.mxu0
      %v1034 = vadd.f32 0.0, %v1033
      %v1035 = vpop.f32.mrf.mxu0
      %v1036 = vpop.f32.mrf.mxu0
      %v1037 = vadd.f32 0.0, %v1036
      %v1038 = vpop.f32.mrf.mxu0
      %1039 = vmatprep.mubr.bf16.mxu0 0
      %1040 = vmatmul.mubr.bf16.gmra.mxu0 %v975
      %v1041 = vpop.f32.mrf.mxu0
      %v1042 = vadd.f32 0.0, %v1041
      %v1043 = vpop.f32.mrf.mxu0
      %v1044 = vpop.f32.mrf.mxu0
      %v1045 = vadd.f32 0.0, %v1044
      %v1046 = vpop.f32.mrf.mxu0
      %1047 = vmatprep.mubr.bf16.mxu0 0
      %1048 = vmatmul.mubr.bf16.gmra.mxu0 %v978
      %v1049 = vpop.f32.mrf.mxu0
      %v1050 = vadd.f32 0.0, %v1049
      %v1051 = vpop.f32.mrf.mxu0
      %v1052 = vpop.f32.mrf.mxu0
      %v1053 = vadd.f32 0.0, %v1052
      %v1054 = vpop.f32.mrf.mxu0
      %1055 = vmatprep.mubr.bf16.mxu0 0
      %1056 = vmatmul.mubr.bf16.gmra.mxu0 %v981
      %v1057 = vpop.f32.mrf.mxu0
      %v1058 = vadd.f32 0.0, %v1057
      %v1059 = vpop.f32.mrf.mxu0
      %v1060 = vpop.f32.mrf.mxu0
      %v1061 = vadd.f32 0.0, %v1060
      %v1062 = vpop.f32.mrf.mxu0
      %1063 = vmatprep.mubr.bf16.mxu0 0
      %1064 = vmatmul.mubr.bf16.gmra.mxu0 %v984
      %v1065 = vpop.f32.mrf.mxu0
      %v1066 = vadd.f32 0.0, %v1065
      %v1067 = vpop.f32.mrf.mxu0
      %v1068 = vpop.f32.mrf.mxu0
      %v1069 = vadd.f32 0.0, %v1068
      %v1070 = vpop.f32.mrf.mxu0
      %1071 = vmatprep.mubr.bf16.mxu0 0
      %1072 = vmatmul.mubr.bf16.gmra.mxu0 %v987
      %v1073 = vpop.f32.mrf.mxu0
      %v1074 = vadd.f32 0.0, %v1073
      %v1075 = vpop.f32.mrf.mxu0
      %v1076 = vpop.f32.mrf.mxu0
      %v1077 = vadd.f32 0.0, %v1076
      %v1078 = vpop.f32.mrf.mxu0
      %1079 = vmatprep.mubr.bf16.mxu0 0
      %1080 = vmatmul.mubr.bf16.gmra.mxu0 %v990
      %v1081 = vpop.f32.mrf.mxu0
      %v1082 = vadd.f32 0.0, %v1081
      %v1083 = vpop.f32.mrf.mxu0
      %v1084 = vpop.f32.mrf.mxu0
      %v1085 = vadd.f32 0.0, %v1084
      %v1086 = vpop.f32.mrf.mxu0
      %1087 = vmatprep.mubr.bf16.mxu0 0
      %1088 = vmatmul.mubr.bf16.gmra.mxu0 %v993
      %v1089 = vpop.f32.mrf.mxu0
      %v1090 = vadd.f32 0.0, %v1089
      %v1091 = vpop.f32.mrf.mxu0
      %v1092 = vpop.f32.mrf.mxu0
      %v1093 = vadd.f32 0.0, %v1092
      %v1094 = vpop.f32.mrf.mxu0
      %1095 = vdwg.mxu0
      %v1098 = vunpack.c.l.b16 %v960
      %v1099 = vunpack.c.l.b16 %v961
      %v1100 = vpack.c.b16 %v1099, %v1098
      %v1102 = vsel %vm970, %v948, 0
      %v1105 = vsel %vm970, %v949, 0
      %v1108 = vsel %vm995, %v1100, 0
      %1110 = vmatprep.subr.bf16.mxu0 0
      %1111 = vmatpush1.bf16.msra.mxu0 0
      %1112 = vmatprep.subr.bf16.mxu0 0
      %1113 = vmatpush1.bf16.msra.mxu0 0
      %1114 = vmatprep.subr.bf16.mxu0 0
      %1115 = vmatpush1.bf16.msra.mxu0 0
      %1116 = vmatprep.subr.bf16.mxu0 0
      %1117 = vmatpush1.bf16.msra.mxu0 0
      %1118 = vmatprep.subr.bf16.mxu0 0
      %1119 = vmatpush1.bf16.msra.mxu0 0
      %1120 = vmatprep.subr.bf16.mxu0 0
      %1121 = vmatpush1.bf16.msra.mxu0 0
      %1122 = vmatprep.subr.bf16.mxu0 0
      %1123 = vmatpush1.bf16.msra.mxu0 0
      %1124 = vmatprep.subr.bf16.mxu0 0
      %1125 = vmatpush1.bf16.msra.mxu0 %v1108
      %1126 = vmatprep.subr.bf16.mxu0 0
      %1127 = vmatpush2.bf16.msra.mxu0 0
      %1128 = vmatprep.subr.bf16.mxu0 0
      %1129 = vmatpush2.bf16.msra.mxu0 0
      %1130 = vmatprep.subr.bf16.mxu0 0
      %1131 = vmatpush2.bf16.msra.mxu0 0
      %1132 = vmatprep.subr.bf16.mxu0 0
      %1133 = vmatpush2.bf16.msra.mxu0 0
      %1134 = vmatprep.subr.bf16.mxu0 0
      %1135 = vmatpush2.bf16.msra.mxu0 0
      %1136 = vmatprep.subr.bf16.mxu0 0
      %1137 = vmatpush2.bf16.msra.mxu0 0
      %1138 = vmatprep.subr.bf16.mxu0 0
      %1139 = vmatpush2.bf16.msra.mxu0 0
      %1140 = vmatprep.subr.bf16.mxu0 0
      %1141 = vmatpush2.bf16.msra.mxu0 0
      %1142 = vmatprep.mubr.bf16.mxu0 0
      %1143 = vmatmul.mubr.bf16.gmra.mxu0 %v1102
      %v1144 = vpop.f32.mrf.mxu0
      %v1145 = vadd.f32 %v1034, %v1144
      %v1146 = vpop.f32.mrf.mxu0
      %v1147 = vpop.f32.mrf.mxu0
      %v1148 = vadd.f32 %v1037, %v1147
      %v1149 = vpop.f32.mrf.mxu0
      %1150 = vmatprep.mubr.bf16.mxu0 0
      %1151 = vmatmul.mubr.bf16.gmra.mxu0 %v1105
      %v1152 = vpop.f32.mrf.mxu0
      %v1153 = vadd.f32 %v1042, %v1152
      %v1154 = vpop.f32.mrf.mxu0
      %v1155 = vpop.f32.mrf.mxu0
      %v1156 = vadd.f32 %v1045, %v1155
      %v1157 = vpop.f32.mrf.mxu0
      %1158 = vmatprep.mubr.bf16.mxu0 0
      %1159 = vmatmul.mubr.bf16.gmra.mxu0 %v972
      %v1160 = vpop.f32.mrf.mxu0
      %v1161 = vadd.f32 %v1050, %v1160
      %v1162 = vpop.f32.mrf.mxu0
      %v1163 = vpop.f32.mrf.mxu0
      %v1164 = vadd.f32 %v1053, %v1163
      %v1165 = vpop.f32.mrf.mxu0
      %1166 = vmatprep.mubr.bf16.mxu0 0
      %1167 = vmatmul.mubr.bf16.gmra.mxu0 %v975
      %v1168 = vpop.f32.mrf.mxu0
      %v1169 = vadd.f32 %v1058, %v1168
      %v1170 = vpop.f32.mrf.mxu0
      %v1171 = vpop.f32.mrf.mxu0
      %v1172 = vadd.f32 %v1061, %v1171
      %v1173 = vpop.f32.mrf.mxu0
      %1174 = vmatprep.mubr.bf16.mxu0 0
      %1175 = vmatmul.mubr.bf16.gmra.mxu0 %v978
      %v1176 = vpop.f32.mrf.mxu0
      %v1177 = vadd.f32 %v1066, %v1176
      %v1178 = vpop.f32.mrf.mxu0
      %v1179 = vpop.f32.mrf.mxu0
      %v1180 = vadd.f32 %v1069, %v1179
      %v1181 = vpop.f32.mrf.mxu0
      %1182 = vmatprep.mubr.bf16.mxu0 0
      %1183 = vmatmul.mubr.bf16.gmra.mxu0 %v981
      %v1184 = vpop.f32.mrf.mxu0
      %v1185 = vadd.f32 %v1074, %v1184
      %v1186 = vpop.f32.mrf.mxu0
      %v1187 = vpop.f32.mrf.mxu0
      %v1188 = vadd.f32 %v1077, %v1187
      %v1189 = vpop.f32.mrf.mxu0
      %1190 = vmatprep.mubr.bf16.mxu0 0
      %1191 = vmatmul.mubr.bf16.gmra.mxu0 %v984
      %v1192 = vpop.f32.mrf.mxu0
      %v1193 = vadd.f32 %v1082, %v1192
      %v1194 = vpop.f32.mrf.mxu0
      %v1195 = vpop.f32.mrf.mxu0
      %v1196 = vadd.f32 %v1085, %v1195
      %v1197 = vpop.f32.mrf.mxu0
      %1198 = vmatprep.mubr.bf16.mxu0 0
      %1199 = vmatmul.mubr.bf16.gmra.mxu0 %v987
      %v1200 = vpop.f32.mrf.mxu0
      %v1201 = vadd.f32 %v1090, %v1200
      %v1202 = vpop.f32.mrf.mxu0
      %v1203 = vpop.f32.mrf.mxu0
      %v1204 = vadd.f32 %v1093, %v1203
      %v1205 = vpop.f32.mrf.mxu0
      %1206 = vdwg.mxu0
      %s1207 = scalar_lea.vmem %s5, 16
      %v1208 = vld [vmem:[%s1207] sm:$0xf]
      %v1209 = vld [vmem:[%s1207 + $0x4] sm:$0x3]
      %v1212 = vunpack.c.l.b16 %v1208
      %v1213 = vunpack.c.l.b16 %v1209
      %v1214 = vpack.c.b16 %v1213, %v1212
      %v1216 = vsel %vm970, %v958, 0
      %v1219 = vsel %vm970, %v959, 0
      %v1222 = vsel %vm995, %v1214, 0
      %1224 = vmatprep.subr.bf16.mxu0 0
      %1225 = vmatpush1.bf16.msra.mxu0 0
      %1226 = vmatprep.subr.bf16.mxu0 0
      %1227 = vmatpush1.bf16.msra.mxu0 0
      %1228 = vmatprep.subr.bf16.mxu0 0
      %1229 = vmatpush1.bf16.msra.mxu0 0
      %1230 = vmatprep.subr.bf16.mxu0 0
      %1231 = vmatpush1.bf16.msra.mxu0 0
      %1232 = vmatprep.subr.bf16.mxu0 0
      %1233 = vmatpush1.bf16.msra.mxu0 0
      %1234 = vmatprep.subr.bf16.mxu0 0
      %1235 = vmatpush1.bf16.msra.mxu0 0
      %1236 = vmatprep.subr.bf16.mxu0 0
      %1237 = vmatpush1.bf16.msra.mxu0 0
      %1238 = vmatprep.subr.bf16.mxu0 0
      %1239 = vmatpush1.bf16.msra.mxu0 %v1222
      %1240 = vmatprep.subr.bf16.mxu0 0
      %1241 = vmatpush2.bf16.msra.mxu0 0
      %1242 = vmatprep.subr.bf16.mxu0 0
      %1243 = vmatpush2.bf16.msra.mxu0 0
      %1244 = vmatprep.subr.bf16.mxu0 0
      %1245 = vmatpush2.bf16.msra.mxu0 0
      %1246 = vmatprep.subr.bf16.mxu0 0
      %1247 = vmatpush2.bf16.msra.mxu0 0
      %1248 = vmatprep.subr.bf16.mxu0 0
      %1249 = vmatpush2.bf16.msra.mxu0 0
      %1250 = vmatprep.subr.bf16.mxu0 0
      %1251 = vmatpush2.bf16.msra.mxu0 0
      %1252 = vmatprep.subr.bf16.mxu0 0
      %1253 = vmatpush2.bf16.msra.mxu0 0
      %1254 = vmatprep.subr.bf16.mxu0 0
      %1255 = vmatpush2.bf16.msra.mxu0 0
      %1256 = vmatprep.mubr.bf16.mxu0 0
      %1257 = vmatmul.mubr.bf16.gmra.mxu0 %v978
      %v1258 = vpop.f32.mrf.mxu0
      %v1259 = vadd.f32 0.0, %v1258
      %v1260 = vpop.f32.mrf.mxu0
      %v1261 = vpop.f32.mrf.mxu0
      %v1262 = vadd.f32 0.0, %v1261
      %v1263 = vpop.f32.mrf.mxu0
      %1264 = vmatprep.mubr.bf16.mxu0 0
      %1265 = vmatmul.mubr.bf16.gmra.mxu0 %v981
      %v1266 = vpop.f32.mrf.mxu0
      %v1267 = vadd.f32 0.0, %v1266
      %v1268 = vpop.f32.mrf.mxu0
      %v1269 = vpop.f32.mrf.mxu0
      %v1270 = vadd.f32 0.0, %v1269
      %v1271 = vpop.f32.mrf.mxu0
      %1272 = vmatprep.mubr.bf16.mxu0 0
      %1273 = vmatmul.mubr.bf16.gmra.mxu0 %v984
      %v1274 = vpop.f32.mrf.mxu0
      %v1275 = vadd.f32 0.0, %v1274
      %v1276 = vpop.f32.mrf.mxu0
      %v1277 = vpop.f32.mrf.mxu0
      %v1278 = vadd.f32 0.0, %v1277
      %v1279 = vpop.f32.mrf.mxu0
      %1280 = vmatprep.mubr.bf16.mxu0 0
      %1281 = vmatmul.mubr.bf16.gmra.mxu0 %v987
      %v1282 = vpop.f32.mrf.mxu0
      %v1283 = vadd.f32 0.0, %v1282
      %v1284 = vpop.f32.mrf.mxu0
      %v1285 = vpop.f32.mrf.mxu0
      %v1286 = vadd.f32 0.0, %v1285
      %v1287 = vpop.f32.mrf.mxu0
      %1288 = vmatprep.mubr.bf16.mxu0 0
      %1289 = vmatmul.mubr.bf16.gmra.mxu0 %v990
      %v1290 = vpop.f32.mrf.mxu0
      %v1291 = vadd.f32 0.0, %v1290
      %v1292 = vpop.f32.mrf.mxu0
      %v1293 = vpop.f32.mrf.mxu0
      %v1294 = vadd.f32 0.0, %v1293
      %v1295 = vpop.f32.mrf.mxu0
      %1296 = vmatprep.mubr.bf16.mxu0 0
      %1297 = vmatmul.mubr.bf16.gmra.mxu0 %v993
      %v1298 = vpop.f32.mrf.mxu0
      %v1299 = vadd.f32 0.0, %v1298
      %v1300 = vpop.f32.mrf.mxu0
      %v1301 = vpop.f32.mrf.mxu0
      %v1302 = vadd.f32 0.0, %v1301
      %v1303 = vpop.f32.mrf.mxu0
      %1304 = vmatprep.mubr.bf16.mxu0 0
      %1305 = vmatmul.mubr.bf16.gmra.mxu0 %v1216
      %v1306 = vpop.f32.mrf.mxu0
      %v1307 = vadd.f32 0.0, %v1306
      %v1308 = vpop.f32.mrf.mxu0
      %v1309 = vpop.f32.mrf.mxu0
      %v1310 = vadd.f32 0.0, %v1309
      %v1311 = vpop.f32.mrf.mxu0
      %1312 = vmatprep.mubr.bf16.mxu0 0
      %1313 = vmatmul.mubr.bf16.gmra.mxu0 %v1219
      %v1314 = vpop.f32.mrf.mxu0
      %v1315 = vadd.f32 0.0, %v1314
      %v1316 = vpop.f32.mrf.mxu0
      %v1317 = vpop.f32.mrf.mxu0
      %v1318 = vadd.f32 0.0, %v1317
      %v1319 = vpop.f32.mrf.mxu0
      %1320 = vdwg.mxu0
      %v1321 = vadd.f32 %v1145, %v1259
      %v1322 = vadd.f32 %v1148, %v1262
      %v1323 = vadd.f32 %v1153, %v1267
      %v1324 = vadd.f32 %v1156, %v1270
      %v1325 = vadd.f32 %v1161, %v1275
      %v1326 = vadd.f32 %v1164, %v1278
      %v1327 = vadd.f32 %v1169, %v1283
      %v1328 = vadd.f32 %v1172, %v1286
      %v1329 = vadd.f32 %v1177, %v1291
      %v1330 = vadd.f32 %v1180, %v1294
      %v1331 = vadd.f32 %v1185, %v1299
      %v1332 = vadd.f32 %v1188, %v1302
      %v1333 = vadd.f32 %v1193, %v1307
      %v1334 = vadd.f32 %v1196, %v1310
      %v1335 = vadd.f32 %v1201, %v1315
      %v1336 = vadd.f32 %v1204, %v1318
      %v1337 = vmax.f32 %v1321, 0.0
      %v1338 = vmax.f32 %v1322, 0.0
      %v1339 = vmax.f32 %v1323, 0.0
      %v1340 = vmax.f32 %v1324, 0.0
      %v1341 = vmax.f32 %v1325, 0.0
      %v1342 = vmax.f32 %v1326, 0.0
      %v1343 = vmax.f32 %v1327, 0.0
      %v1344 = vmax.f32 %v1328, 0.0
      %v1345 = vmax.f32 %v1329, 0.0
      %v1346 = vmax.f32 %v1330, 0.0
      %v1347 = vmax.f32 %v1331, 0.0
      %v1348 = vmax.f32 %v1332, 0.0
      %v1349 = vmax.f32 %v1333, 0.0
      %v1350 = vmax.f32 %v1334, 0.0
      %v1351 = vmax.f32 %v1335, 0.0
      %v1352 = vmax.f32 %v1336, 0.0
      %v1353 = vsel %vm508, %v1337, 0.0
      %v1354 = vsel %vm509, %v1338, 0.0
      %v1355 = vsel %vm510, %v1339, 0.0
      %v1356 = vsel %vm511, %v1340, 0.0
      %v1357 = vsel %vm508, %v1341, 0.0
      %v1358 = vsel %vm509, %v1342, 0.0
      %v1359 = vsel %vm510, %v1343, 0.0
      %v1360 = vsel %vm511, %v1344, 0.0
      %v1361 = vsel %vm508, %v1345, 0.0
      %v1362 = vsel %vm509, %v1346, 0.0
      %v1363 = vsel %vm510, %v1347, 0.0
      %v1364 = vsel %vm511, %v1348, 0.0
      %v1365 = vsel %vm508, %v1349, 0.0
      %v1366 = vsel %vm509, %v1350, 0.0
      %v1367 = vsel %vm510, %v1351, 0.0
      %v1368 = vsel %vm511, %v1352, 0.0
      %1369 = vst.msk [vmem:[%s452] sm:$0xff] %vm923, %v1353
      %1370 = vst.msk [vmem:[%s452 + $0x8] sm:$0xff] %vm923, %v1354
      %1371 = vst.msk [vmem:[%s452 + $0x10] sm:$0xff] %vm923, %v1355
      %1372 = vst.msk [vmem:[%s452 + $0x18] sm:$0xff] %vm923, %v1356
      %1373 = vst.msk [vmem:[%s452 + $0x20] sm:$0xff] %vm923, %v1357
      %1374 = vst.msk [vmem:[%s452 + $0x28] sm:$0xff] %vm923, %v1358
      %1375 = vst.msk [vmem:[%s452 + $0x30] sm:$0xff] %vm923, %v1359
      %1376 = vst.msk [vmem:[%s452 + $0x38] sm:$0xff] %vm923, %v1360
      %1377 = vst.msk [vmem:[%s452 + $0x40] sm:$0xff] %vm923, %v1361
      %1378 = vst.msk [vmem:[%s452 + $0x48] sm:$0xff] %vm923, %v1362
      %1379 = vst.msk [vmem:[%s452 + $0x50] sm:$0xff] %vm923, %v1363
      %1380 = vst.msk [vmem:[%s452 + $0x58] sm:$0xff] %vm923, %v1364
      %1381 = vst.msk [vmem:[%s452 + $0x60] sm:$0xff] %vm923, %v1365
      %1382 = vst.msk [vmem:[%s452 + $0x68] sm:$0xff] %vm923, %v1366
      %1383 = vst.msk [vmem:[%s452 + $0x70] sm:$0xff] %vm923, %v1367
      %1384 = vst.msk [vmem:[%s452 + $0x78] sm:$0xff] %vm923, %v1368
      %v1385 = vsel %vm923, %v1353, 0.0
      %v1386 = vsel %vm923, %v1354, 0.0
      %v1387 = vadd.f32 %v1385, %v1386
      %v1388 = vsel %vm923, %v1355, 0.0
      %v1389 = vadd.f32 %v1387, %v1388
      %v1390 = vsel %vm923, %v1356, 0.0
      %v1391 = vadd.f32 %v1389, %v1390
      %v1392 = vsel %vm923, %v1357, 0.0
      %v1393 = vadd.f32 %v1391, %v1392
      %v1394 = vsel %vm923, %v1358, 0.0
      %v1395 = vadd.f32 %v1393, %v1394
      %v1396 = vsel %vm923, %v1359, 0.0
      %v1397 = vadd.f32 %v1395, %v1396
      %v1398 = vsel %vm923, %v1360, 0.0
      %v1399 = vadd.f32 %v1397, %v1398
      %v1400 = vsel %vm923, %v1361, 0.0
      %v1401 = vadd.f32 %v1399, %v1400
      %v1402 = vsel %vm923, %v1362, 0.0
      %v1403 = vadd.f32 %v1401, %v1402
      %v1404 = vsel %vm923, %v1363, 0.0
      %v1405 = vadd.f32 %v1403, %v1404
      %v1406 = vsel %vm923, %v1364, 0.0
      %v1407 = vadd.f32 %v1405, %v1406
      %v1408 = vsel %vm923, %v1365, 0.0
      %v1409 = vadd.f32 %v1407, %v1408
      %v1410 = vsel %vm923, %v1366, 0.0
      %v1411 = vadd.f32 %v1409, %v1410
      %v1412 = vsel %vm923, %v1367, 0.0
      %v1413 = vadd.f32 %v1411, %v1412
      %v1414 = vsel %vm923, %v1368, 0.0
      %v1415 = vadd.f32 %v1413, %v1414
      %v1416 = vrot.slane %v1415, 4
      %v1417 = vadd.f32 %v1415, %v1416
      %v1418 = vrot.slane %v1417, 2
      %v1419 = vadd.f32 %v1417, %v1418
      %v1420 = vrot.slane %v1419, 1
      %v1421 = vadd.f32 %v1419, %v1420
      %v1422 = vmul.f32 %v1353, %v1353
      %v1423 = vmul.f32 %v1354, %v1354
      %v1424 = vmul.f32 %v1355, %v1355
      %v1425 = vmul.f32 %v1356, %v1356
      %v1426 = vmul.f32 %v1357, %v1357
      %v1427 = vmul.f32 %v1358, %v1358
      %v1428 = vmul.f32 %v1359, %v1359
      %v1429 = vmul.f32 %v1360, %v1360
      %v1430 = vmul.f32 %v1361, %v1361
      %v1431 = vmul.f32 %v1362, %v1362
      %v1432 = vmul.f32 %v1363, %v1363
      %v1433 = vmul.f32 %v1364, %v1364
      %v1434 = vmul.f32 %v1365, %v1365
      %v1435 = vmul.f32 %v1366, %v1366
      %v1436 = vmul.f32 %v1367, %v1367
      %v1437 = vmul.f32 %v1368, %v1368
      %v1438 = vsel %vm923, %v1422, 0.0
      %v1439 = vsel %vm923, %v1423, 0.0
      %v1440 = vadd.f32 %v1438, %v1439
      %v1441 = vsel %vm923, %v1424, 0.0
      %v1442 = vadd.f32 %v1440, %v1441
      %v1443 = vsel %vm923, %v1425, 0.0
      %v1444 = vadd.f32 %v1442, %v1443
      %v1445 = vsel %vm923, %v1426, 0.0
      %v1446 = vadd.f32 %v1444, %v1445
      %v1447 = vsel %vm923, %v1427, 0.0
      %v1448 = vadd.f32 %v1446, %v1447
      %v1449 = vsel %vm923, %v1428, 0.0
      %v1450 = vadd.f32 %v1448, %v1449
      %v1451 = vsel %vm923, %v1429, 0.0
      %v1452 = vadd.f32 %v1450, %v1451
      %v1453 = vsel %vm923, %v1430, 0.0
      %v1454 = vadd.f32 %v1452, %v1453
      %v1455 = vsel %vm923, %v1431, 0.0
      %v1456 = vadd.f32 %v1454, %v1455
      %v1457 = vsel %vm923, %v1432, 0.0
      %v1458 = vadd.f32 %v1456, %v1457
      %v1459 = vsel %vm923, %v1433, 0.0
      %v1460 = vadd.f32 %v1458, %v1459
      %v1461 = vsel %vm923, %v1434, 0.0
      %v1462 = vadd.f32 %v1460, %v1461
      %v1463 = vsel %vm923, %v1435, 0.0
      %v1464 = vadd.f32 %v1462, %v1463
      %v1465 = vsel %vm923, %v1436, 0.0
      %v1466 = vadd.f32 %v1464, %v1465
      %v1467 = vsel %vm923, %v1437, 0.0
      %v1468 = vadd.f32 %v1466, %v1467
      %v1469 = vrot.slane %v1468, 4
      %v1470 = vadd.f32 %v1468, %v1469
      %v1471 = vrot.slane %v1470, 2
      %v1472 = vadd.f32 %v1470, %v1471
      %v1473 = vrot.slane %v1472, 1
      %v1474 = vadd.f32 %v1472, %v1473
      // Predicated region
      $region45: #{triple_conv3_pallas.4} parent=43 // pred_check
        %p1475 = pneg %p478
      $region46: #{triple_conv3_pallas.4} parent=43 // pred_check_branch
        %1477 = sbr.rel (%p1475) target = $region48
      $region47: #{triple_conv3_pallas.4} parent=43 // pred_region
        %vm1478 = vcmask 58368
        %1479 = vst.msk [vmem:[%s457] sm:$0x3] %vm1478, 0.0
      $region48: #{triple_conv3_pallas.4} parent=43 // pred_fallthru
        _
      %v1480 = vld [vmem:[%s457] sm:$0x3]
      %vm1481 = vcmask 1040384
      %v1482 = vsel %vm1481, %v1421, %v1474
      %v1483 = vadd.f32 %v1480, %v1482
      %vm1484 = vcmask 58368
      %1485 = vst.msk [vmem:[%s457] sm:$0x3] %vm1484, %v1483
      %s1486 = smul.u32 4, %s24
      %p1487 = scmp.lt.s32.totalorder %s23, 1
      %s1488 = scalar_select %p1487, %s23, 1
      %p1489 = scmp.lt.s32.totalorder %s1486, 15
      %s1490 = scalar_select %p1489, %s1486, 15
      %s1491 = smul.addr %s1490, 4
      %s1492 = smul.addr %s1488, 64
      %s1493 = sadd.s32 %s1491, %s1492
      %s1494 = smul.addr %s1493, 8
      %s1495 = scalar_lea.vmem %s6, %s1494
      %p1496 = scmp.lt.s32.totalorder %s23, 1
      %s1497 = scalar_select %p1496, %s23, 1
      %s1498 = smul.addr %s1497, 2
      %s1499 = scalar_lea.vmem %s7, %s1498
      // Predicated region
      $region49: #{triple_conv3_pallas.4} parent=43 // pred_check
        %p1500 = pneg %p214
      $region50: #{triple_conv3_pallas.4} parent=43 // pred_check_branch
        %1502 = sbr.rel (%p1500) target = $region52
      $region51: #{triple_conv3_pallas.4} parent=43 // pred_region
        %s1503 = smul.u32 4, %s24
      $region52: #{triple_conv3_pallas.4} parent=43 // pred_fallthru
        _
      // Predicated region
      $region53: #{triple_conv3_pallas.4} parent=43 // pred_check
        %p1504 = pneg %p240
      $region54: #{triple_conv3_pallas.4} parent=43 // pred_check_branch
        %1506 = sbr.rel (%p1504) target = $region56
      $region55: #{triple_conv3_pallas.4} parent=43 // pred_region
        _
      $region56: #{triple_conv3_pallas.4} parent=43 // pred_fallthru
        _
    $region44: #{triple_conv3_pallas.4} parent=5 // pred_fallthru
      _
    %p1507 = scmp.le.s32.totalorder 2, %s14
    // Predicated region
    $region57: #{triple_conv3_pallas.4} parent=5 // pred_check
      %p1508 = pneg %p1507
    $region58: #{triple_conv3_pallas.4} parent=5 // pred_check_branch
      %1510 = sbr.rel (%p1508) target = $region60
    $region59: #{triple_conv3_pallas.4} parent=5 // pred_region
      %s1511 = ssub.s32 %s14, 2
      // Predicated region
      $region61: #{triple_conv3_pallas.4} parent=59 // pred_check
        %p1512 = pneg %p220
      $region62: #{triple_conv3_pallas.4} parent=59 // pred_check_branch
        %1514 = sbr.rel (%p1512) target = $region64
      $region63: #{triple_conv3_pallas.4} parent=59 // pred_region
        %s1515 = smul.u32 4, %s26
        %p1516 = scmp.lt.s32.totalorder %s25, 1
        %s1517 = scalar_select %p1516, %s25, 1
        %p1518 = scmp.lt.s32.totalorder %s1515, 15
        %s1519 = scalar_select %p1518, %s1515, 15
        %s1520 = smul.addr %s1519, 4
        %s1521 = smul.addr %s1517, 64
        %s1522 = sadd.s32 %s1520, %s1521
        %s1523 = smul.addr %s1522, 8
        %s1524 = scalar_lea.vmem %s6, %s1523
      $region64: #{triple_conv3_pallas.4} parent=59 // pred_fallthru
        _
      // Predicated region
      $region65: #{triple_conv3_pallas.4} parent=59 // pred_check
        %p1525 = pneg %p246
      $region66: #{triple_conv3_pallas.4} parent=59 // pred_check_branch
        %1527 = sbr.rel (%p1525) target = $region68
      $region67: #{triple_conv3_pallas.4} parent=59 // pred_region
        %p1528 = scmp.lt.s32.totalorder %s25, 1
        %s1529 = scalar_select %p1528, %s25, 1
        %s1530 = smul.addr %s1529, 2
        %s1531 = scalar_lea.vmem %s7, %s1530
      $region68: #{triple_conv3_pallas.4} parent=59 // pred_fallthru
        _
    $region60: #{triple_conv3_pallas.4} parent=5 // pred_fallthru
      _
  $region6: #{triple_conv3_pallas.4} parent=0 // loop_footer
    %s18 = sadd.s32 1, %s14
  $region7: #{triple_conv3_pallas.4} parent=0 // loop_footer_branch
    %13 = sbr.rel target = $region3
  $region8: #{triple_conv3_pallas.4} parent=0 // loop_exit
    _

// kernel: triple_conv3_pallas.5
$region0: #{triple_conv3_pallas.5}
  #allocation0 [shape = 'u32[]', space=smem, size = 0x4, offset = 0x4, fixed_abs, tag = 'smem constant byte address 0x4 - core index']
  #allocation1 [shape = 'u32[144,128]{1,0:T(1,128)}', space=vmem, size = 0x12000, scoped, tag = 'internal scratch']
  %s0 = inlined_call_operand.vmem [shape: f32[1,8], index: 0, kind: input, shape index: {}]
  %s1 = inlined_call_operand.vmem [shape: f32[1,8], index: 1, kind: input, shape index: {}]
  %s2 = inlined_call_operand.vmem [shape: f32[2,16,32,8], index: 2, kind: input, shape index: {}, may-alias: {2,3,4}]
  %s3 = inlined_call_operand.vmem [shape: f32[2,16,32,8], index: 3, kind: input, shape index: {}, may-alias: {2,3,4}]
  %s4 = inlined_call_operand.vmem [shape: f32[2,16,32,8], index: 4, kind: input, shape index: {}, may-alias: {2,3,4}]
  %s5 = inlined_call_operand.vmem [shape: bf16[3,24,8], index: 5, kind: input, shape index: {}]
  %s6 = inlined_call_operand.vmem [shape: f32[2,16,32,8], index: 6, kind: output, shape index: {0}]
  %s7 = inlined_call_operand.vmem [shape: f32[2,2,8], index: 7, kind: output, shape index: {1}]
  %8 = xla_tuple %s6, %s7
  %s9 = sld [smem:[#allocation0]]
  $region69: #{triple_conv3_pallas.5} parent=0
    _
  %s11 = ssub.s32 1, %s9
  %s12 = scalar_select 0, %s11, %s9
  loop: start=0, step=1, limit=10
  $region2: #{triple_conv3_pallas.5} parent=0 // loop_pre_header
    _
  $region3: #{triple_conv3_pallas.5} parent=0 // loop_header
    %s14 = sphi 0, %s18
    %p15 = scmp.ge.s32.totalorder %s14, 10
    %s21 = sphi 0, %s33
    %s22 = sphi 0, %s29
    %s23 = sphi 0, %s21
    %s24 = sphi 0, %s22
    %s25 = sphi 0, %s23
    %s26 = sphi 0, %s24
    %s34 = sphi 0, %s34
    %s36 = sphi 0, %s34
    %s37 = sphi 0, %s36
    %s51 = sphi 0, %s37
    %s55 = sphi 0, %s55
    %s57 = sphi 0, %s55
    %s58 = sphi 0, %s57
    %s72 = sphi 0, %s58
    %s88 = sphi 0, %s90
    %s91 = sphi 0, %s88
    %s92 = sphi 0, %s91
    %s108 = sphi 0, %s92
    %s116 = sphi 0, %s118
    %s119 = sphi 0, %s116
    %s120 = sphi 0, %s119
    %s136 = sphi 0, %s120
    %s152 = sphi 0, %s154
    %s155 = sphi 0, %s152
    %s156 = sphi 0, %s155
    %s172 = sphi 0, %s156
    %s176 = sphi 0, %s176
    %s178 = sphi 0, %s176
    %s179 = sphi 0, %s178
    %s193 = sphi 0, %s179
    %s201 = sphi 0, %s203
    %s204 = sphi 0, %s201
    %s205 = sphi 0, %s204
    %s221 = sphi 0, %s205
    %s227 = sphi 0, %s229
    %s230 = sphi 0, %s227
    %s231 = sphi 0, %s230
    %s247 = sphi 0, %s231
  $region4: #{triple_conv3_pallas.5} parent=0 // loop_header_branch
    %17 = sbr.rel (%p15) target = $region8
  $region5: #{triple_conv3_pallas.5} parent=0 // loop_body
    %s19 = ssub.s32 %s14, 1
    %s20 = ssub.s32 %s14, 2
    %s27 = sadd.s32 1, %s22
    %p28 = scmp.ge.s32.totalorder %s27, 4
    %s29 = scalar_select %p28, 0, %s27
    %s30 = sadd.s32 1, %s21
    %s31 = scalar_select %p28, %s30, %s21
    %p32 = scmp.ge.s32.totalorder %s31, 2
    %s33 = scalar_select %p32, 0, %s31
    %s35 = sadd.s32 %s34, 1
    %p38 = scmp.eq.s32.totalorder %s14, 7
    %p39 = scmp.ne.s32.totalorder %s34, %s36
    %p40 = scmp.eq.s32.totalorder %s14, 0
    %p41 = por %p39, %p40
    %p42 = scmp.ne.s32.totalorder %s34, %s36
    %p43 = scmp.eq.s32.totalorder %s19, 7
    %p44 = por %p42, %p43
    %p45 = scmp.ne.s32.totalorder %s36, %s37
    %p46 = scmp.eq.s32.totalorder %s19, 0
    %p47 = por %p45, %p46
    %p48 = scmp.ne.s32.totalorder %s36, %s37
    %p49 = scmp.eq.s32.totalorder %s20, 7
    %p50 = por %p48, %p49
    %p52 = scmp.ne.s32.totalorder %s37, %s51
    %p53 = scmp.eq.s32.totalorder %s20, 0
    %p54 = por %p52, %p53
    %s56 = sadd.s32 %s55, 1
    %p59 = scmp.eq.s32.totalorder %s14, 7
    %p60 = scmp.ne.s32.totalorder %s55, %s57
    %p61 = scmp.eq.s32.totalorder %s14, 0
    %p62 = por %p60, %p61
    %p63 = scmp.ne.s32.totalorder %s55, %s57
    %p64 = scmp.eq.s32.totalorder %s19, 7
    %p65 = por %p63, %p64
    %p66 = scmp.ne.s32.totalorder %s57, %s58
    %p67 = scmp.eq.s32.totalorder %s19, 0
    %p68 = por %p66, %p67
    %p69 = scmp.ne.s32.totalorder %s57, %s58
    %p70 = scmp.eq.s32.totalorder %s20, 7
    %p71 = por %p69, %p70
    %p73 = scmp.ne.s32.totalorder %s58, %s72
    %p74 = scmp.eq.s32.totalorder %s20, 0
    %p75 = por %p73, %p74
    %s76 = smul.u32 %s22, 4
    %s77 = ssub.s32 %s76, 1
    %p78 = scmp.gt.s32.totalorder %s77, 0
    %s79 = scalar_select %p78, %s77, 0
    %s80 = smul.u32 %s29, 4
    %s81 = ssub.s32 %s80, 1
    %p82 = scmp.gt.s32.totalorder %s81, 0
    %s83 = scalar_select %p82, %s81, 0
    %s84 = ssub.s32 %s21, %s33
    %s85 = ssub.s32 %s79, %s83
    %s86 = sor.u32 %s84, %s85
    %p87 = scmp.eq.s32.totalorder %s86, 0
    %s89 = sadd.s32 %s88, 1
    %s90 = scalar_select %p87, %s88, %s89
    %p93 = pneg %p87
    %p94 = scmp.eq.s32.totalorder %s14, 7
    %p95 = por %p93, %p94
    %p96 = scmp.ne.s32.totalorder %s88, %s91
    %p97 = scmp.eq.s32.totalorder %s14, 0
    %p98 = por %p96, %p97
    %p99 = scmp.ne.s32.totalorder %s88, %s91
    %p100 = scmp.eq.s32.totalorder %s19, 7
    %p101 = por %p99, %p100
    %p102 = scmp.ne.s32.totalorder %s91, %s92
    %p103 = scmp.eq.s32.totalorder %s19, 0
    %p104 = por %p102, %p103
    %p105 = scmp.ne.s32.totalorder %s91, %s92
    %p106 = scmp.eq.s32.totalorder %s20, 7
    %p107 = por %p105, %p106
    %p109 = scmp.ne.s32.totalorder %s92, %s108
    %p110 = scmp.eq.s32.totalorder %s20, 0
    %p111 = por %p109, %p110
    %s112 = ssub.s32 %s21, %s33
    %s113 = ssub.s32 %s22, %s29
    %s114 = sor.u32 %s112, %s113
    %p115 = scmp.eq.s32.totalorder %s114, 0
    %s117 = sadd.s32 %s116, 1
    %s118 = scalar_select %p115, %s116, %s117
    %p121 = pneg %p115
    %p122 = scmp.eq.s32.totalorder %s14, 7
    %p123 = por %p121, %p122
    %p124 = scmp.ne.s32.totalorder %s116, %s119
    %p125 = scmp.eq.s32.totalorder %s14, 0
    %p126 = por %p124, %p125
    %p127 = scmp.ne.s32.totalorder %s116, %s119
    %p128 = scmp.eq.s32.totalorder %s19, 7
    %p129 = por %p127, %p128
    %p130 = scmp.ne.s32.totalorder %s119, %s120
    %p131 = scmp.eq.s32.totalorder %s19, 0
    %p132 = por %p130, %p131
    %p133 = scmp.ne.s32.totalorder %s119, %s120
    %p134 = scmp.eq.s32.totalorder %s20, 7
    %p135 = por %p133, %p134
    %p137 = scmp.ne.s32.totalorder %s120, %s136
    %p138 = scmp.eq.s32.totalorder %s20, 0
    %p139 = por %p137, %p138
    %s140 = sadd.s32 %s22, 1
    %s141 = smul.u32 %s140, 4
    %p142 = scmp.lt.s32.totalorder %s141, 15
    %s143 = scalar_select %p142, %s141, 15
    %s144 = sadd.s32 %s29, 1
    %s145 = smul.u32 %s144, 4
    %p146 = scmp.lt.s32.totalorder %s145, 15
    %s147 = scalar_select %p146, %s145, 15
    %s148 = ssub.s32 %s21, %s33
    %s149 = ssub.s32 %s143, %s147
    %s150 = sor.u32 %s148, %s149
    %p151 = scmp.eq.s32.totalorder %s150, 0
    %s153 = sadd.s32 %s152, 1
    %s154 = scalar_select %p151, %s152, %s153
    %p157 = pneg %p151
    %p158 = scmp.eq.s32.totalorder %s14, 7
    %p159 = por %p157, %p158
    %p160 = scmp.ne.s32.totalorder %s152, %s155
    %p161 = scmp.eq.s32.totalorder %s14, 0
    %p162 = por %p160, %p161
    %p163 = scmp.ne.s32.totalorder %s152, %s155
    %p164 = scmp.eq.s32.totalorder %s19, 7
    %p165 = por %p163, %p164
    %p166 = scmp.ne.s32.totalorder %s155, %s156
    %p167 = scmp.eq.s32.totalorder %s19, 0
    %p168 = por %p166, %p167
    %p169 = scmp.ne.s32.totalorder %s155, %s156
    %p170 = scmp.eq.s32.totalorder %s20, 7
    %p171 = por %p169, %p170
    %p173 = scmp.ne.s32.totalorder %s156, %s172
    %p174 = scmp.eq.s32.totalorder %s20, 0
    %p175 = por %p173, %p174
    %s177 = sadd.s32 %s176, 1
    %p180 = scmp.eq.s32.totalorder %s14, 7
    %p181 = scmp.ne.s32.totalorder %s176, %s178
    %p182 = scmp.eq.s32.totalorder %s14, 0
    %p183 = por %p181, %p182
    %p184 = scmp.ne.s32.totalorder %s176, %s178
    %p185 = scmp.eq.s32.totalorder %s19, 7
    %p186 = por %p184, %p185
    %p187 = scmp.ne.s32.totalorder %s178, %s179
    %p188 = scmp.eq.s32.totalorder %s19, 0
    %p189 = por %p187, %p188
    %p190 = scmp.ne.s32.totalorder %s178, %s179
    %p191 = scmp.eq.s32.totalorder %s20, 7
    %p192 = por %p190, %p191
    %p194 = scmp.ne.s32.totalorder %s179, %s193
    %p195 = scmp.eq.s32.totalorder %s20, 0
    %p196 = por %p194, %p195
    %s197 = ssub.s32 %s21, %s33
    %s198 = ssub.s32 %s22, %s29
    %s199 = sor.u32 %s197, %s198
    %p200 = scmp.eq.s32.totalorder %s199, 0
    %s202 = sadd.s32 %s201, 1
    %s203 = scalar_select %p200, %s201, %s202
    %p206 = pneg %p200
    %p207 = scmp.eq.s32.totalorder %s14, 7
    %p208 = por %p206, %p207
    %p209 = scmp.ne.s32.totalorder %s201, %s204
    %p210 = scmp.eq.s32.totalorder %s14, 0
    %p211 = por %p209, %p210
    %p212 = scmp.ne.s32.totalorder %s201, %s204
    %p213 = scmp.eq.s32.totalorder %s19, 7
    %p214 = por %p212, %p213
    %p215 = scmp.ne.s32.totalorder %s204, %s205
    %p216 = scmp.eq.s32.totalorder %s19, 0
    %p217 = por %p215, %p216
    %p218 = scmp.ne.s32.totalorder %s204, %s205
    %p219 = scmp.eq.s32.totalorder %s20, 7
    %p220 = por %p218, %p219
    %p222 = scmp.ne.s32.totalorder %s205, %s221
    %p223 = scmp.eq.s32.totalorder %s20, 0
    %p224 = por %p222, %p223
    %s225 = ssub.s32 %s21, %s33
    %p226 = scmp.eq.s32.totalorder %s225, 0
    %s228 = sadd.s32 %s227, 1
    %s229 = scalar_select %p226, %s227, %s228
    %p232 = pneg %p226
    %p233 = scmp.eq.s32.totalorder %s14, 7
    %p234 = por %p232, %p233
    %p235 = scmp.ne.s32.totalorder %s227, %s230
    %p236 = scmp.eq.s32.totalorder %s14, 0
    %p237 = por %p235, %p236
    %p238 = scmp.ne.s32.totalorder %s227, %s230
    %p239 = scmp.eq.s32.totalorder %s19, 7
    %p240 = por %p238, %p239
    %p241 = scmp.ne.s32.totalorder %s230, %s231
    %p242 = scmp.eq.s32.totalorder %s19, 0
    %p243 = por %p241, %p242
    %p244 = scmp.ne.s32.totalorder %s230, %s231
    %p245 = scmp.eq.s32.totalorder %s20, 7
    %p246 = por %p244, %p245
    %p248 = scmp.ne.s32.totalorder %s231, %s247
    %p249 = scmp.eq.s32.totalorder %s20, 0
    %p250 = por %p248, %p249
    %p251 = scmp.le.s32.totalorder 1, %s14
    %p252 = scmp.lt.s32.totalorder %s14, 9
    %p253 = pnand %p251, %p252
    %p254 = pneg %p253
    // Predicated region
    $region9: #{triple_conv3_pallas.5} parent=5 // pred_check
      _
    $region10: #{triple_conv3_pallas.5} parent=5 // pred_check_branch
      %256 = sbr.rel (%p253) target = $region12
    $region11: #{triple_conv3_pallas.5} parent=5 // pred_region
      %s257 = ssub.s32 %s14, 1
      // Predicated region
      $region13: #{triple_conv3_pallas.5} parent=11 // pred_check
        %p258 = pneg %p47
      $region14: #{triple_conv3_pallas.5} parent=11 // pred_check_branch
        %260 = sbr.rel (%p258) target = $region16
      $region15: #{triple_conv3_pallas.5} parent=11 // pred_region
        _
      $region16: #{triple_conv3_pallas.5} parent=11 // pred_fallthru
        _
      // Predicated region
      $region17: #{triple_conv3_pallas.5} parent=11 // pred_check
        %p261 = pneg %p68
      $region18: #{triple_conv3_pallas.5} parent=11 // pred_check_branch
        %263 = sbr.rel (%p261) target = $region20
      $region19: #{triple_conv3_pallas.5} parent=11 // pred_region
        _
      $region20: #{triple_conv3_pallas.5} parent=11 // pred_fallthru
        _
      // Predicated region
      $region21: #{triple_conv3_pallas.5} parent=11 // pred_check
        %p264 = pneg %p189
      $region22: #{triple_conv3_pallas.5} parent=11 // pred_check_branch
        %266 = sbr.rel (%p264) target = $region24
      $region23: #{triple_conv3_pallas.5} parent=11 // pred_region
        _
      $region24: #{triple_conv3_pallas.5} parent=11 // pred_fallthru
        _
    $region12: #{triple_conv3_pallas.5} parent=5 // pred_fallthru
      _
    %p267 = scmp.lt.s32.totalorder %s14, 8
    // Predicated region
    $region25: #{triple_conv3_pallas.5} parent=5 // pred_check
      %p268 = pneg %p267
    $region26: #{triple_conv3_pallas.5} parent=5 // pred_check_branch
      %270 = sbr.rel (%p268) target = $region28
    $region27: #{triple_conv3_pallas.5} parent=5 // pred_region
      // Predicated region
      $region29: #{triple_conv3_pallas.5} parent=27 // pred_check
        %p271 = pneg %p98
      $region30: #{triple_conv3_pallas.5} parent=27 // pred_check_branch
        %273 = sbr.rel (%p271) target = $region32
      $region31: #{triple_conv3_pallas.5} parent=27 // pred_region
        %s274 = smul.u32 %s22, 4
        %s275 = ssub.s32 %s274, 1
        %p276 = scmp.gt.s32.totalorder %s275, 0
        %s277 = scalar_select %p276, %s275, 0
        %p278 = scmp.lt.s32.totalorder %s21, 1
        %s279 = scalar_select %p278, %s21, 1
        %p280 = scmp.lt.s32.totalorder %s277, 15
        %s281 = scalar_select %p280, %s277, 15
        %s282 = smul.addr %s281, 4
        %s283 = smul.addr %s279, 64
        %s284 = sadd.s32 %s282, %s283
        %s285 = smul.addr %s284, 8
        %s286 = scalar_lea.vmem %s2, %s285
        %s287 = smul.u32 %s22, 4
        %s288 = ssub.s32 %s287, 1
        %p289 = scmp.gt.s32.totalorder %s288, 0
        %s290 = scalar_select %p289, %s288, 0
      $region32: #{triple_conv3_pallas.5} parent=27 // pred_fallthru
        _
      // Predicated region
      $region33: #{triple_conv3_pallas.5} parent=27 // pred_check
        %p291 = pneg %p126
      $region34: #{triple_conv3_pallas.5} parent=27 // pred_check_branch
        %293 = sbr.rel (%p291) target = $region36
      $region35: #{triple_conv3_pallas.5} parent=27 // pred_region
        %s294 = smul.u32 4, %s22
        %p295 = scmp.lt.s32.totalorder %s21, 1
        %s296 = scalar_select %p295, %s21, 1
        %p297 = scmp.lt.s32.totalorder %s294, 15
        %s298 = scalar_select %p297, %s294, 15
        %s299 = smul.addr %s298, 4
        %s300 = smul.addr %s296, 64
        %s301 = sadd.s32 %s299, %s300
        %s302 = smul.addr %s301, 8
        %s303 = scalar_lea.vmem %s3, %s302
        %s304 = smul.u32 4, %s22
      $region36: #{triple_conv3_pallas.5} parent=27 // pred_fallthru
        _
      // Predicated region
      $region37: #{triple_conv3_pallas.5} parent=27 // pred_check
        %p305 = pneg %p162
      $region38: #{triple_conv3_pallas.5} parent=27 // pred_check_branch
        %307 = sbr.rel (%p305) target = $region40
      $region39: #{triple_conv3_pallas.5} parent=27 // pred_region
        %s308 = sadd.s32 %s22, 1
        %s309 = smul.u32 %s308, 4
        %p310 = scmp.lt.s32.totalorder %s309, 15
        %s311 = scalar_select %p310, %s309, 15
        %p312 = scmp.lt.s32.totalorder %s21, 1
        %s313 = scalar_select %p312, %s21, 1
        %p314 = scmp.lt.s32.totalorder %s311, 15
        %s315 = scalar_select %p314, %s311, 15
        %s316 = smul.addr %s315, 4
        %s317 = smul.addr %s313, 64
        %s318 = sadd.s32 %s316, %s317
        %s319 = smul.addr %s318, 8
        %s320 = scalar_lea.vmem %s4, %s319
        %s321 = sadd.s32 %s22, 1
        %s322 = smul.u32 %s321, 4
        %p323 = scmp.lt.s32.totalorder %s322, 15
        %s324 = scalar_select %p323, %s322, 15
      $region40: #{triple_conv3_pallas.5} parent=27 // pred_fallthru
        _
    $region28: #{triple_conv3_pallas.5} parent=5 // pred_fallthru
      _
    %p325 = scmp.le.s32.totalorder 1, %s14
    %p326 = scmp.lt.s32.totalorder %s14, 9
    %p327 = pnand %p325, %p326
    %p328 = pneg %p327
    // Predicated region
    $region41: #{triple_conv3_pallas.5} parent=5 // pred_check
      _
    $region42: #{triple_conv3_pallas.5} parent=5 // pred_check_branch
      %330 = sbr.rel (%p327) target = $region44
    $region43: #{triple_conv3_pallas.5} parent=5 // pred_region
      %s331 = ssub.s32 %s14, 1
      %p332 = pneg %p47
      %p333 = pneg %p44
      %p334 = pneg %p68
      %p335 = pneg %p65
      %s336 = smul.u32 %s24, 4
      %s337 = ssub.s32 %s336, 1
      %p338 = scmp.gt.s32.totalorder %s337, 0
      %s339 = scalar_select %p338, %s337, 0
      %p340 = scmp.lt.s32.totalorder %s23, 1
      %s341 = scalar_select %p340, %s23, 1
      %p342 = scmp.lt.s32.totalorder %s339, 15
      %s343 = scalar_select %p342, %s339, 15
      %s344 = smul.addr %s343, 4
      %s345 = smul.addr %s341, 64
      %s346 = sadd.s32 %s344, %s345
      %s347 = smul.addr %s346, 8
      %s348 = scalar_lea.vmem %s2, %s347
      %p349 = pneg %p104
      %p350 = pneg %p101
      %s351 = smul.u32 4, %s24
      %p352 = scmp.lt.s32.totalorder %s23, 1
      %s353 = scalar_select %p352, %s23, 1
      %p354 = scmp.lt.s32.totalorder %s351, 15
      %s355 = scalar_select %p354, %s351, 15
      %s356 = smul.addr %s355, 4
      %s357 = smul.addr %s353, 64
      %s358 = sadd.s32 %s356, %s357
      %s359 = smul.addr %s358, 8
      %s360 = scalar_lea.vmem %s3, %s359
      %p361 = pneg %p132
      %p362 = pneg %p129
      %s363 = sadd.s32 %s24, 1
      %s364 = smul.u32 %s363, 4
      %p365 = scmp.lt.s32.totalorder %s364, 15
      %s366 = scalar_select %p365, %s364, 15
      %p367 = scmp.lt.s32.totalorder %s23, 1
      %s368 = scalar_select %p367, %s23, 1
      %p369 = scmp.lt.s32.totalorder %s366, 15
      %s370 = scalar_select %p369, %s366, 15
      %s371 = smul.addr %s370, 4
      %s372 = smul.addr %s368, 64
      %s373 = sadd.s32 %s371, %s372
      %s374 = smul.addr %s373, 8
      %s375 = scalar_lea.vmem %s4, %s374
      %p376 = pneg %p168
      %p377 = pneg %p165
      %p378 = pneg %p189
      %p379 = pneg %p186
      %p380 = pneg %p217
      %p381 = pneg %p214
      %s382 = smul.u32 4, %s24
      %p383 = scmp.lt.s32.totalorder %s23, 1
      %s384 = scalar_select %p383, %s23, 1
      %p385 = scmp.lt.s32.totalorder %s382, 15
      %s386 = scalar_select %p385, %s382, 15
      %s387 = smul.addr %s386, 4
      %s388 = smul.addr %s384, 64
      %s389 = sadd.s32 %s387, %s388
      %s390 = smul.addr %s389, 8
      %s391 = scalar_lea.vmem %s6, %s390
      %p392 = pneg %p243
      %p393 = pneg %p240
      %p394 = scmp.lt.s32.totalorder %s23, 1
      %s395 = scalar_select %p394, %s23, 1
      %s396 = smul.addr %s395, 2
      %s397 = scalar_lea.vmem %s7, %s396
      %s398 = smul.u32 %s24, 4
      %s399 = ssub.s32 %s398, 1
      %p400 = scmp.gt.s32.totalorder %s399, 0
      %s401 = scalar_select %p400, %s399, 0
      %p402 = scmp.lt.s32.totalorder %s23, 1
      %s403 = scalar_select %p402, %s23, 1
      %p404 = scmp.lt.s32.totalorder %s401, 15
      %s405 = scalar_select %p404, %s401, 15
      %s406 = smul.addr %s405, 4
      %s407 = smul.addr %s403, 64
      %s408 = sadd.s32 %s406, %s407
      %s409 = smul.addr %s408, 8
      %s410 = scalar_lea.vmem %s2, %s409
      %s411 = smul.u32 %s24, 4
      %s412 = ssub.s32 %s411, 1
      %p413 = scmp.gt.s32.totalorder %s412, 0
      %s414 = scalar_select %p413, %s412, 0
      %s415 = smul.u32 4, %s24
      %p416 = scmp.lt.s32.totalorder %s23, 1
      %s417 = scalar_select %p416, %s23, 1
      %p418 = scmp.lt.s32.totalorder %s415, 15
      %s419 = scalar_select %p418, %s415, 15
      %s420 = smul.addr %s419, 4
      %s421 = smul.addr %s417, 64
      %s422 = sadd.s32 %s420, %s421
      %s423 = smul.addr %s422, 8
      %s424 = scalar_lea.vmem %s3, %s423
      %s425 = smul.u32 4, %s24
      %s426 = sadd.s32 %s24, 1
      %s427 = smul.u32 %s426, 4
      %p428 = scmp.lt.s32.totalorder %s427, 15
      %s429 = scalar_select %p428, %s427, 15
      %p430 = scmp.lt.s32.totalorder %s23, 1
      %s431 = scalar_select %p430, %s23, 1
      %p432 = scmp.lt.s32.totalorder %s429, 15
      %s433 = scalar_select %p432, %s429, 15
      %s434 = smul.addr %s433, 4
      %s435 = smul.addr %s431, 64
      %s436 = sadd.s32 %s434, %s435
      %s437 = smul.addr %s436, 8
      %s438 = scalar_lea.vmem %s4, %s437
      %s439 = sadd.s32 %s24, 1
      %s440 = smul.u32 %s439, 4
      %p441 = scmp.lt.s32.totalorder %s440, 15
      %s442 = scalar_select %p441, %s440, 15
      %s443 = smul.u32 4, %s24
      %p444 = scmp.lt.s32.totalorder %s23, 1
      %s445 = scalar_select %p444, %s23, 1
      %p446 = scmp.lt.s32.totalorder %s443, 15
      %s447 = scalar_select %p446, %s443, 15
      %s448 = smul.addr %s447, 4
      %s449 = smul.addr %s445, 64
      %s450 = sadd.s32 %s448, %s449
      %s451 = smul.addr %s450, 8
      %s452 = scalar_lea.vmem %s6, %s451
      %s453 = smul.u32 4, %s24
      %p454 = scmp.lt.s32.totalorder %s23, 1
      %s455 = scalar_select %p454, %s23, 1
      %s456 = smul.addr %s455, 2
      %s457 = scalar_lea.vmem %s7, %s456
      %v459 = vld [vmem:[%s0] sm:$0x1]
      %v460 = vld [vmem:[%s1] sm:$0x1]
      %v461 = vlaneseq
      %v462 = vshrl.u32 %v461, 7
      %v463 = vadd.s32 %v462, 8
      %v464 = vadd.s32 %v462, 16
      %v465 = vadd.s32 %v462, 24
      %vm466 = vcmp.ge.s32.totalorder %v462, 1
      %vm467 = vcmp.ge.s32.totalorder %v463, 1
      %vm468 = vcmp.ge.s32.totalorder %v464, 1
      %vm469 = vcmp.ge.s32.totalorder %v465, 1
      %vm470 = vcmp.le.s32.totalorder %v462, 16
      %vm471 = vcmp.le.s32.totalorder %v463, 16
      %vm472 = vcmp.le.s32.totalorder %v464, 16
      %vm473 = vcmp.le.s32.totalorder %v465, 16
      %vm474 = vmand %vm466, %vm470
      %vm475 = vmand %vm467, %vm471
      %vm476 = vmand %vm468, %vm472
      %vm477 = vmand %vm469, %vm473
      %p478 = scmp.eq.s32.totalorder %s24, 0
      %s479 = scalar_select %p478, 0.0, 1.0
      %v480 = vld [vmem:[%s410] sm:$0xff]
      %v481 = vld [vmem:[%s410 + $0x8] sm:$0xff]
      %v482 = vld [vmem:[%s410 + $0x10] sm:$0xff]
      %v483 = vld [vmem:[%s410 + $0x18] sm:$0xff]
      %v485 = vlaneseq
      %v486 = vshrl.u32 %v485, 7
      %v487 = vsub.s32 0, %v486
      %v488 = vrot.slane %v459, %v487
      %v490 = vmul.f32 %v480, %v488
      %v491 = vmul.f32 %v481, %v488
      %v492 = vmul.f32 %v482, %v488
      %v493 = vmul.f32 %v483, %v488
      %v495 = vlaneseq
      %v496 = vshrl.u32 %v495, 7
      %v497 = vsub.s32 0, %v496
      %v498 = vrot.slane %v460, %v497
      %v500 = vadd.f32 %v490, %v498
      %v501 = vadd.f32 %v491, %v498
      %v502 = vadd.f32 %v492, %v498
      %v503 = vadd.f32 %v493, %v498
      %v504 = vsel %vm474, 1, 0
      %v505 = vsel %vm475, 1, 0
      %v506 = vsel %vm476, 1, 0
      %v507 = vsel %vm477, 1, 0
      %vm508 = vcmp.eq.s32.totalorder %v504, 1
      %vm509 = vcmp.eq.s32.totalorder %v505, 1
      %vm510 = vcmp.eq.s32.totalorder %v506, 1
      %vm511 = vcmp.eq.s32.totalorder %v507, 1
      %v512 = vsel %vm508, %v500, 0.0
      %v513 = vsel %vm509, %v501, 0.0
      %v514 = vsel %vm510, %v502, 0.0
      %v515 = vsel %vm511, %v503, 0.0
      %v516 = vstv %s479
      %v517 = vmul.f32 %v512, %v516
      %v518 = vmul.f32 %v513, %v516
      %v519 = vmul.f32 %v514, %v516
      %v520 = vmul.f32 %v515, %v516
      %p521 = scmp.eq.s32.totalorder %s24, 3
      %s522 = scalar_select %p521, 0.0, 1.0
      %v523 = vld [vmem:[%s438] sm:$0xff]
      %v524 = vld [vmem:[%s438 + $0x8] sm:$0xff]
      %v525 = vld [vmem:[%s438 + $0x10] sm:$0xff]
      %v526 = vld [vmem:[%s438 + $0x18] sm:$0xff]
      %v527 = vmul.f32 %v523, %v488
      %v528 = vmul.f32 %v524, %v488
      %v529 = vmul.f32 %v525, %v488
      %v530 = vmul.f32 %v526, %v488
      %v531 = vadd.f32 %v527, %v498
      %v532 = vadd.f32 %v528, %v498
      %v533 = vadd.f32 %v529, %v498
      %v534 = vadd.f32 %v530, %v498
      %v535 = vsel %vm508, %v531, 0.0
      %v536 = vsel %vm509, %v532, 0.0
      %v537 = vsel %vm510, %v533, 0.0
      %v538 = vsel %vm511, %v534, 0.0
      %v539 = vstv %s522
      %v540 = vmul.f32 %v535, %v539
      %v541 = vmul.f32 %v536, %v539
      %v542 = vmul.f32 %v537, %v539
      %v543 = vmul.f32 %v538, %v539
      %v544 = vld [vmem:[%s424] sm:$0xff]
      %v545 = vld [vmem:[%s424 + $0x8] sm:$0xff]
      %v546 = vld [vmem:[%s424 + $0x10] sm:$0xff]
      %v547 = vld [vmem:[%s424 + $0x18] sm:$0xff]
      %v548 = vld [vmem:[%s424 + $0x20] sm:$0xff]
      %v549 = vld [vmem:[%s424 + $0x28] sm:$0xff]
      %v550 = vld [vmem:[%s424 + $0x30] sm:$0xff]
      %v551 = vld [vmem:[%s424 + $0x38] sm:$0xff]
      %v552 = vld [vmem:[%s424 + $0x40] sm:$0xff]
      %v553 = vld [vmem:[%s424 + $0x48] sm:$0xff]
      %v554 = vld [vmem:[%s424 + $0x50] sm:$0xff]
      %v555 = vld [vmem:[%s424 + $0x58] sm:$0xff]
      %v556 = vld [vmem:[%s424 + $0x60] sm:$0xff]
      %v557 = vld [vmem:[%s424 + $0x68] sm:$0xff]
      %v558 = vld [vmem:[%s424 + $0x70] sm:$0xff]
      %v559 = vld [vmem:[%s424 + $0x78] sm:$0xff]
      %v560 = vmul.f32 %v544, %v488
      %v561 = vmul.f32 %v545, %v488
      %v562 = vmul.f32 %v546, %v488
      %v563 = vmul.f32 %v547, %v488
      %v564 = vmul.f32 %v548, %v488
      %v565 = vmul.f32 %v549, %v488
      %v566 = vmul.f32 %v550, %v488
      %v567 = vmul.f32 %v551, %v488
      %v568 = vmul.f32 %v552, %v488
      %v569 = vmul.f32 %v553, %v488
      %v570 = vmul.f32 %v554, %v488
      %v571 = vmul.f32 %v555, %v488
      %v572 = vmul.f32 %v556, %v488
      %v573 = vmul.f32 %v557, %v488
      %v574 = vmul.f32 %v558, %v488
      %v575 = vmul.f32 %v559, %v488
      %v576 = vadd.f32 %v560, %v498
      %v577 = vadd.f32 %v561, %v498
      %v578 = vadd.f32 %v562, %v498
      %v579 = vadd.f32 %v563, %v498
      %v580 = vadd.f32 %v564, %v498
      %v581 = vadd.f32 %v565, %v498
      %v582 = vadd.f32 %v566, %v498
      %v583 = vadd.f32 %v567, %v498
      %v584 = vadd.f32 %v568, %v498
      %v585 = vadd.f32 %v569, %v498
      %v586 = vadd.f32 %v570, %v498
      %v587 = vadd.f32 %v571, %v498
      %v588 = vadd.f32 %v572, %v498
      %v589 = vadd.f32 %v573, %v498
      %v590 = vadd.f32 %v574, %v498
      %v591 = vadd.f32 %v575, %v498
      %v592 = vsel %vm508, %v576, 0.0
      %v593 = vsel %vm509, %v577, 0.0
      %v594 = vsel %vm510, %v578, 0.0
      %v595 = vsel %vm511, %v579, 0.0
      %v596 = vsel %vm508, %v580, 0.0
      %v597 = vsel %vm509, %v581, 0.0
      %v598 = vsel %vm510, %v582, 0.0
      %v599 = vsel %vm511, %v583, 0.0
      %v600 = vsel %vm508, %v584, 0.0
      %v601 = vsel %vm509, %v585, 0.0
      %v602 = vsel %vm510, %v586, 0.0
      %v603 = vsel %vm511, %v587, 0.0
      %v604 = vsel %vm508, %v588, 0.0
      %v605 = vsel %vm509, %v589, 0.0
      %v606 = vsel %vm510, %v590, 0.0
      %v607 = vsel %vm511, %v591, 0.0
      %v608 = vrot.slane %v517, 7
      %v609 = vrot.slane %v592, 7
      %v610 = vrot.slane %v596, 7
      %v611 = vrot.slane %v600, 7
      %v612 = vrot.slane %v604, 7
      %v613 = vrot.slane %v540, 7
      %v614 = vrot.slane %v518, 7
      %v615 = vrot.slane %v593, 7
      %v616 = vrot.slane %v597, 7
      %v617 = vrot.slane %v601, 7
      %v618 = vrot.slane %v605, 7
      %v619 = vrot.slane %v541, 7
      %v620 = vrot.slane %v519, 7
      %v621 = vrot.slane %v594, 7
      %v622 = vrot.slane %v598, 7
      %v623 = vrot.slane %v602, 7
      %v624 = vrot.slane %v606, 7
      %v625 = vrot.slane %v542, 7
      %v626 = vrot.slane %v520, 7
      %v627 = vrot.slane %v595, 7
      %v628 = vrot.slane %v599, 7
      %v629 = vrot.slane %v603, 7
      %v630 = vrot.slane %v607, 7
      %v631 = vrot.slane %v543, 7
      %vm632 = vcmp.lt.s32.totalorder %v462, 1
      %v633 = vsel %vm632, %v620, %v626
      %v634 = vsel %vm632, %v621, %v627
      %v635 = vsel %vm632, %v622, %v628
      %v636 = vsel %vm632, %v623, %v629
      %v637 = vsel %vm632, %v624, %v630
      %v638 = vsel %vm632, %v625, %v631
      %v639 = vsel %vm632, %v614, %v620
      %v640 = vsel %vm632, %v615, %v621
      %v641 = vsel %vm632, %v616, %v622
      %v642 = vsel %vm632, %v617, %v623
      %v643 = vsel %vm632, %v618, %v624
      %v644 = vsel %vm632, %v619, %v625
      %v645 = vsel %vm632, %v608, %v614
      %v646 = vsel %vm632, %v609, %v615
      %v647 = vsel %vm632, %v610, %v616
      %v648 = vsel %vm632, %v611, %v617
      %v649 = vsel %vm632, %v612, %v618
      %v650 = vsel %vm632, %v613, %v619
      %v651 = vsel %vm632, %v626, %v608
      %v652 = vsel %vm632, %v627, %v609
      %v653 = vsel %vm632, %v628, %v610
      %v654 = vsel %vm632, %v629, %v611
      %v655 = vsel %vm632, %v630, %v612
      %v656 = vsel %vm632, %v631, %v613
      %v657 = vrot.slane %v517, 1
      %v658 = vrot.slane %v592, 1
      %v659 = vrot.slane %v596, 1
      %v660 = vrot.slane %v600, 1
      %v661 = vrot.slane %v604, 1
      %v662 = vrot.slane %v540, 1
      %v663 = vrot.slane %v518, 1
      %v664 = vrot.slane %v593, 1
      %v665 = vrot.slane %v597, 1
      %v666 = vrot.slane %v601, 1
      %v667 = vrot.slane %v605, 1
      %v668 = vrot.slane %v541, 1
      %v669 = vrot.slane %v519, 1
      %v670 = vrot.slane %v594, 1
      %v671 = vrot.slane %v598, 1
      %v672 = vrot.slane %v602, 1
      %v673 = vrot.slane %v606, 1
      %v674 = vrot.slane %v542, 1
      %v675 = vrot.slane %v520, 1
      %v676 = vrot.slane %v595, 1
      %v677 = vrot.slane %v599, 1
      %v678 = vrot.slane %v603, 1
      %v679 = vrot.slane %v607, 1
      %v680 = vrot.slane %v543, 1
      %vm681 = vcmp.lt.s32.totalorder %v462, 7
      %v682 = vsel %vm681, %v669, %v675
      %v683 = vsel %vm681, %v670, %v676
      %v684 = vsel %vm681, %v671, %v677
      %v685 = vsel %vm681, %v672, %v678
      %v686 = vsel %vm681, %v673, %v679
      %v687 = vsel %vm681, %v674, %v680
      %v688 = vsel %vm681, %v663, %v669
      %v689 = vsel %vm681, %v664, %v670
      %v690 = vsel %vm681, %v665, %v671
      %v691 = vsel %vm681, %v666, %v672
      %v692 = vsel %vm681, %v667, %v673
      %v693 = vsel %vm681, %v668, %v674
      %v694 = vsel %vm681, %v657, %v663
      %v695 = vsel %vm681, %v658, %v664
      %v696 = vsel %vm681, %v659, %v665
      %v697 = vsel %vm681, %v660, %v666
      %v698 = vsel %vm681, %v661, %v667
      %v699 = vsel %vm681, %v662, %v668
      %v700 = vsel %vm681, %v675, %v657
      %v701 = vsel %vm681, %v676, %v658
      %v702 = vsel %vm681, %v677, %v659
      %v703 = vsel %vm681, %v678, %v660
      %v704 = vsel %vm681, %v679, %v661
      %v705 = vsel %vm681, %v680, %v662
      %730 = vrot.lane.b32.xlu0 %v517, 8
      %v731 = vpop.permute.xlu0 %730
      %732 = vrot.lane.b32.xlu0 %v518, 8
      %v733 = vpop.permute.xlu0 %732
      %734 = vrot.lane.b32.xlu0 %v519, 8
      %v735 = vpop.permute.xlu0 %734
      %736 = vrot.lane.b32.xlu0 %v520, 8
      %v737 = vpop.permute.xlu0 %736
      %738 = vrot.lane.b32.xlu0 %v592, 8
      %v739 = vpop.permute.xlu0 %738
      %740 = vrot.lane.b32.xlu0 %v593, 8
      %v741 = vpop.permute.xlu0 %740
      %742 = vrot.lane.b32.xlu0 %v594, 8
      %v743 = vpop.permute.xlu0 %742
      %744 = vrot.lane.b32.xlu0 %v595, 8
      %v745 = vpop.permute.xlu0 %744
      %746 = vrot.lane.b32.xlu0 %v596, 8
      %v747 = vpop.permute.xlu0 %746
      %748 = vrot.lane.b32.xlu0 %v597, 8
      %v749 = vpop.permute.xlu0 %748
      %750 = vrot.lane.b32.xlu0 %v598, 8
      %v751 = vpop.permute.xlu0 %750
      %752 = vrot.lane.b32.xlu0 %v599, 8
      %v753 = vpop.permute.xlu0 %752
      %754 = vrot.lane.b32.xlu0 %v600, 8
      %v755 = vpop.permute.xlu0 %754
      %756 = vrot.lane.b32.xlu0 %v601, 8
      %v757 = vpop.permute.xlu0 %756
      %758 = vrot.lane.b32.xlu0 %v602, 8
      %v759 = vpop.permute.xlu0 %758
      %760 = vrot.lane.b32.xlu0 %v603, 8
      %v761 = vpop.permute.xlu0 %760
      %762 = vrot.lane.b32.xlu0 %v604, 8
      %v763 = vpop.permute.xlu0 %762
      %764 = vrot.lane.b32.xlu0 %v605, 8
      %v765 = vpop.permute.xlu0 %764
      %766 = vrot.lane.b32.xlu0 %v606, 8
      %v767 = vpop.permute.xlu0 %766
      %768 = vrot.lane.b32.xlu0 %v607, 8
      %v769 = vpop.permute.xlu0 %768
      %770 = vrot.lane.b32.xlu0 %v540, 8
      %v771 = vpop.permute.xlu0 %770
      %772 = vrot.lane.b32.xlu0 %v541, 8
      %v773 = vpop.permute.xlu0 %772
      %774 = vrot.lane.b32.xlu0 %v542, 8
      %v775 = vpop.permute.xlu0 %774
      %776 = vrot.lane.b32.xlu0 %v543, 8
      %v777 = vpop.permute.xlu0 %776
      %826 = vrot.lane.b32.xlu0 %v694, 16
      %v827 = vpop.permute.xlu0 %826
      %828 = vrot.lane.b32.xlu0 %v688, 16
      %v829 = vpop.permute.xlu0 %828
      %830 = vrot.lane.b32.xlu0 %v682, 16
      %v831 = vpop.permute.xlu0 %830
      %832 = vrot.lane.b32.xlu0 %v700, 16
      %v833 = vpop.permute.xlu0 %832
      %834 = vrot.lane.b32.xlu0 %v695, 16
      %v835 = vpop.permute.xlu0 %834
      %836 = vrot.lane.b32.xlu0 %v689, 16
      %v837 = vpop.permute.xlu0 %836
      %838 = vrot.lane.b32.xlu0 %v683, 16
      %v839 = vpop.permute.xlu0 %838
      %840 = vrot.lane.b32.xlu0 %v701, 16
      %v841 = vpop.permute.xlu0 %840
      %842 = vrot.lane.b32.xlu0 %v696, 16
      %v843 = vpop.permute.xlu0 %842
      %844 = vrot.lane.b32.xlu0 %v690, 16
      %v845 = vpop.permute.xlu0 %844
      %846 = vrot.lane.b32.xlu0 %v684, 16
      %v847 = vpop.permute.xlu0 %846
      %848 = vrot.lane.b32.xlu0 %v702, 16
      %v849 = vpop.permute.xlu0 %848
      %850 = vrot.lane.b32.xlu0 %v697, 16
      %v851 = vpop.permute.xlu0 %850
      %852 = vrot.lane.b32.xlu0 %v691, 16
      %v853 = vpop.permute.xlu0 %852
      %854 = vrot.lane.b32.xlu0 %v685, 16
      %v855 = vpop.permute.xlu0 %854
      %856 = vrot.lane.b32.xlu0 %v703, 16
      %v857 = vpop.permute.xlu0 %856
      %858 = vrot.lane.b32.xlu0 %v698, 16
      %v859 = vpop.permute.xlu0 %858
      %860 = vrot.lane.b32.xlu0 %v692, 16
      %v861 = vpop.permute.xlu0 %860
      %862 = vrot.lane.b32.xlu0 %v686, 16
      %v863 = vpop.permute.xlu0 %862
      %864 = vrot.lane.b32.xlu0 %v704, 16
      %v865 = vpop.permute.xlu0 %864
      %866 = vrot.lane.b32.xlu0 %v699, 16
      %v867 = vpop.permute.xlu0 %866
      %868 = vrot.lane.b32.xlu0 %v693, 16
      %v869 = vpop.permute.xlu0 %868
      %870 = vrot.lane.b32.xlu0 %v687, 16
      %v871 = vpop.permute.xlu0 %870
      %872 = vrot.lane.b32.xlu0 %v705, 16
      %v873 = vpop.permute.xlu0 %872
      %vm898 = vcmask 64512
      %v899 = vsel %vm898, %v651, %v731
      %v900 = vsel %vm898, %v645, %v733
      %v901 = vsel %vm898, %v639, %v735
      %v902 = vsel %vm898, %v633, %v737
      %v903 = vsel %vm898, %v652, %v739
      %v904 = vsel %vm898, %v646, %v741
      %v905 = vsel %vm898, %v640, %v743
      %v906 = vsel %vm898, %v634, %v745
      %v907 = vsel %vm898, %v653, %v747
      %v908 = vsel %vm898, %v647, %v749
      %v909 = vsel %vm898, %v641, %v751
      %v910 = vsel %vm898, %v635, %v753
      %v911 = vsel %vm898, %v654, %v755
      %v912 = vsel %vm898, %v648, %v757
      %v913 = vsel %vm898, %v642, %v759
      %v914 = vsel %vm898, %v636, %v761
      %v915 = vsel %vm898, %v655, %v763
      %v916 = vsel %vm898, %v649, %v765
      %v917 = vsel %vm898, %v643, %v767
      %v918 = vsel %vm898, %v637, %v769
      %v919 = vsel %vm898, %v656, %v771
      %v920 = vsel %vm898, %v650, %v773
      %v921 = vsel %vm898, %v644, %v775
      %v922 = vsel %vm898, %v638, %v777
      %vm923 = vcmask 130048
      %v924 = vsel %vm923, %v899, %v827
      %v925 = vsel %vm923, %v900, %v829
      %v926 = vsel %vm923, %v901, %v831
      %v927 = vsel %vm923, %v902, %v833
      %v928 = vsel %vm923, %v903, %v835
      %v929 = vsel %vm923, %v904, %v837
      %v930 = vsel %vm923, %v905, %v839
      %v931 = vsel %vm923, %v906, %v841
      %v932 = vsel %vm923, %v907, %v843
      %v933 = vsel %vm923, %v908, %v845
      %v934 = vsel %vm923, %v909, %v847
      %v935 = vsel %vm923, %v910, %v849
      %v936 = vsel %vm923, %v911, %v851
      %v937 = vsel %vm923, %v912, %v853
      %v938 = vsel %vm923, %v913, %v855
      %v939 = vsel %vm923, %v914, %v857
      %v940 = vsel %vm923, %v915, %v859
      %v941 = vsel %vm923, %v916, %v861
      %v942 = vsel %vm923, %v917, %v863
      %v943 = vsel %vm923, %v918, %v865
      %v944 = vsel %vm923, %v919, %v867
      %v945 = vsel %vm923, %v920, %v869
      %v946 = vsel %vm923, %v921, %v871
      %v947 = vsel %vm923, %v922, %v873
      %v948 = vpack.c.bf16 %v925, %v924
      %v949 = vpack.c.bf16 %v927, %v926
      %v950 = vpack.c.bf16 %v929, %v928
      %v951 = vpack.c.bf16 %v931, %v930
      %v952 = vpack.c.bf16 %v933, %v932
      %v953 = vpack.c.bf16 %v935, %v934
      %v954 = vpack.c.bf16 %v937, %v936
      %v955 = vpack.c.bf16 %v939, %v938
      %v956 = vpack.c.bf16 %v941, %v940
      %v957 = vpack.c.bf16 %v943, %v942
      %v958 = vpack.c.bf16 %v945, %v944
      %v959 = vpack.c.bf16 %v947, %v946
      %v960 = vld [vmem:[%s5] sm:$0xf]
      %v961 = vld [vmem:[%s5 + $0x4] sm:$0xf]
      %v962 = vld [vmem:[%s5 + $0x8] sm:$0xf]
      %s963 = scalar_lea.vmem %s5, 12
      %v964 = vld [vmem:[%s963] sm:$0xf]
      %v965 = vld [vmem:[%s963 + $0x4] sm:$0xf]
      %v966 = vld [vmem:[%s963 + $0x8] sm:$0xf]
      %v970 = vunpack.c.l.b16 %v964
      %v971 = vunpack.c.l.b16 %v965
      %v972 = vunpack.c.l.b16 %v966
      %v973 = vpack.c.b16 %v971, %v970
      %v974 = vpack.c.b16 %v972, %v972
      %vm976 = vcmask 195584
      %v978 = vsel %vm976, %v950, 0
      %v981 = vsel %vm976, %v951, 0
      %v984 = vsel %vm976, %v952, 0
      %v987 = vsel %vm976, %v953, 0
      %v990 = vsel %vm976, %v954, 0
      %v993 = vsel %vm976, %v955, 0
      %v996 = vsel %vm976, %v956, 0
      %v999 = vsel %vm976, %v957, 0
      %vm1001 = vcmask 1043456
      %v1003 = vsel %vm1001, %v974, 0
      %1005 = vmatprep.subr.bf16.mxu0 0
      %1006 = vmatpush1.bf16.msra.mxu0 0
      %1007 = vmatprep.subr.bf16.mxu0 0
      %1008 = vmatpush1.bf16.msra.mxu0 0
      %1009 = vmatprep.subr.bf16.mxu0 0
      %1010 = vmatpush1.bf16.msra.mxu0 0
      %1011 = vmatprep.subr.bf16.mxu0 0
      %1012 = vmatpush1.bf16.msra.mxu0 0
      %1013 = vmatprep.subr.bf16.mxu0 0
      %1014 = vmatpush1.bf16.msra.mxu0 0
      %1015 = vmatprep.subr.bf16.mxu0 0
      %1016 = vmatpush1.bf16.msra.mxu0 0
      %1017 = vmatprep.subr.bf16.mxu0 0
      %1018 = vmatpush1.bf16.msra.mxu0 %v1003
      %1019 = vmatprep.subr.bf16.mxu0 0
      %1020 = vmatpush1.bf16.msra.mxu0 %v973
      %1021 = vmatprep.subr.bf16.mxu0 0
      %1022 = vmatpush2.bf16.msra.mxu0 0
      %1023 = vmatprep.subr.bf16.mxu0 0
      %1024 = vmatpush2.bf16.msra.mxu0 0
      %1025 = vmatprep.subr.bf16.mxu0 0
      %1026 = vmatpush2.bf16.msra.mxu0 0
      %1027 = vmatprep.subr.bf16.mxu0 0
      %1028 = vmatpush2.bf16.msra.mxu0 0
      %1029 = vmatprep.subr.bf16.mxu0 0
      %1030 = vmatpush2.bf16.msra.mxu0 0
      %1031 = vmatprep.subr.bf16.mxu0 0
      %1032 = vmatpush2.bf16.msra.mxu0 0
      %1033 = vmatprep.subr.bf16.mxu0 0
      %1034 = vmatpush2.bf16.msra.mxu0 0
      %1035 = vmatprep.subr.bf16.mxu0 0
      %1036 = vmatpush2.bf16.msra.mxu0 0
      %1037 = vmatprep.mubr.bf16.mxu0 0
      %1038 = vmatmul.mubr.bf16.gmra.mxu0 %v978
      %v1039 = vpop.f32.mrf.mxu0
      %v1040 = vadd.f32 0.0, %v1039
      %v1041 = vpop.f32.mrf.mxu0
      %v1042 = vpop.f32.mrf.mxu0
      %v1043 = vadd.f32 0.0, %v1042
      %v1044 = vpop.f32.mrf.mxu0
      %1045 = vmatprep.mubr.bf16.mxu0 0
      %1046 = vmatmul.mubr.bf16.gmra.mxu0 %v981
      %v1047 = vpop.f32.mrf.mxu0
      %v1048 = vadd.f32 0.0, %v1047
      %v1049 = vpop.f32.mrf.mxu0
      %v1050 = vpop.f32.mrf.mxu0
      %v1051 = vadd.f32 0.0, %v1050
      %v1052 = vpop.f32.mrf.mxu0
      %1053 = vmatprep.mubr.bf16.mxu0 0
      %1054 = vmatmul.mubr.bf16.gmra.mxu0 %v984
      %v1055 = vpop.f32.mrf.mxu0
      %v1056 = vadd.f32 0.0, %v1055
      %v1057 = vpop.f32.mrf.mxu0
      %v1058 = vpop.f32.mrf.mxu0
      %v1059 = vadd.f32 0.0, %v1058
      %v1060 = vpop.f32.mrf.mxu0
      %1061 = vmatprep.mubr.bf16.mxu0 0
      %1062 = vmatmul.mubr.bf16.gmra.mxu0 %v987
      %v1063 = vpop.f32.mrf.mxu0
      %v1064 = vadd.f32 0.0, %v1063
      %v1065 = vpop.f32.mrf.mxu0
      %v1066 = vpop.f32.mrf.mxu0
      %v1067 = vadd.f32 0.0, %v1066
      %v1068 = vpop.f32.mrf.mxu0
      %1069 = vmatprep.mubr.bf16.mxu0 0
      %1070 = vmatmul.mubr.bf16.gmra.mxu0 %v990
      %v1071 = vpop.f32.mrf.mxu0
      %v1072 = vadd.f32 0.0, %v1071
      %v1073 = vpop.f32.mrf.mxu0
      %v1074 = vpop.f32.mrf.mxu0
      %v1075 = vadd.f32 0.0, %v1074
      %v1076 = vpop.f32.mrf.mxu0
      %1077 = vmatprep.mubr.bf16.mxu0 0
      %1078 = vmatmul.mubr.bf16.gmra.mxu0 %v993
      %v1079 = vpop.f32.mrf.mxu0
      %v1080 = vadd.f32 0.0, %v1079
      %v1081 = vpop.f32.mrf.mxu0
      %v1082 = vpop.f32.mrf.mxu0
      %v1083 = vadd.f32 0.0, %v1082
      %v1084 = vpop.f32.mrf.mxu0
      %1085 = vmatprep.mubr.bf16.mxu0 0
      %1086 = vmatmul.mubr.bf16.gmra.mxu0 %v996
      %v1087 = vpop.f32.mrf.mxu0
      %v1088 = vadd.f32 0.0, %v1087
      %v1089 = vpop.f32.mrf.mxu0
      %v1090 = vpop.f32.mrf.mxu0
      %v1091 = vadd.f32 0.0, %v1090
      %v1092 = vpop.f32.mrf.mxu0
      %1093 = vmatprep.mubr.bf16.mxu0 0
      %1094 = vmatmul.mubr.bf16.gmra.mxu0 %v999
      %v1095 = vpop.f32.mrf.mxu0
      %v1096 = vadd.f32 0.0, %v1095
      %v1097 = vpop.f32.mrf.mxu0
      %v1098 = vpop.f32.mrf.mxu0
      %v1099 = vadd.f32 0.0, %v1098
      %v1100 = vpop.f32.mrf.mxu0
      %1101 = vdwg.mxu0
      %v1105 = vunpack.c.l.b16 %v960
      %v1106 = vunpack.c.l.b16 %v961
      %v1107 = vunpack.c.l.b16 %v962
      %v1108 = vpack.c.b16 %v1106, %v1105
      %v1109 = vpack.c.b16 %v1107, %v1107
      %v1112 = vsel %vm976, %v948, 0
      %v1115 = vsel %vm976, %v949, 0
      %v1118 = vsel %vm1001, %v1109, 0
      %1120 = vmatprep.subr.bf16.mxu0 0
      %1121 = vmatpush1.bf16.msra.mxu0 0
      %1122 = vmatprep.subr.bf16.mxu0 0
      %1123 = vmatpush1.bf16.msra.mxu0 0
      %1124 = vmatprep.subr.bf16.mxu0 0
      %1125 = vmatpush1.bf16.msra.mxu0 0
      %1126 = vmatprep.subr.bf16.mxu0 0
      %1127 = vmatpush1.bf16.msra.mxu0 0
      %1128 = vmatprep.subr.bf16.mxu0 0
      %1129 = vmatpush1.bf16.msra.mxu0 0
      %1130 = vmatprep.subr.bf16.mxu0 0
      %1131 = vmatpush1.bf16.msra.mxu0 0
      %1132 = vmatprep.subr.bf16.mxu0 0
      %1133 = vmatpush1.bf16.msra.mxu0 %v1118
      %1134 = vmatprep.subr.bf16.mxu0 0
      %1135 = vmatpush1.bf16.msra.mxu0 %v1108
      %1136 = vmatprep.subr.bf16.mxu0 0
      %1137 = vmatpush2.bf16.msra.mxu0 0
      %1138 = vmatprep.subr.bf16.mxu0 0
      %1139 = vmatpush2.bf16.msra.mxu0 0
      %1140 = vmatprep.subr.bf16.mxu0 0
      %1141 = vmatpush2.bf16.msra.mxu0 0
      %1142 = vmatprep.subr.bf16.mxu0 0
      %1143 = vmatpush2.bf16.msra.mxu0 0
      %1144 = vmatprep.subr.bf16.mxu0 0
      %1145 = vmatpush2.bf16.msra.mxu0 0
      %1146 = vmatprep.subr.bf16.mxu0 0
      %1147 = vmatpush2.bf16.msra.mxu0 0
      %1148 = vmatprep.subr.bf16.mxu0 0
      %1149 = vmatpush2.bf16.msra.mxu0 0
      %1150 = vmatprep.subr.bf16.mxu0 0
      %1151 = vmatpush2.bf16.msra.mxu0 0
      %1152 = vmatprep.mubr.bf16.mxu0 0
      %1153 = vmatmul.mubr.bf16.gmra.mxu0 %v1112
      %v1154 = vpop.f32.mrf.mxu0
      %v1155 = vadd.f32 %v1040, %v1154
      %v1156 = vpop.f32.mrf.mxu0
      %v1157 = vpop.f32.mrf.mxu0
      %v1158 = vadd.f32 %v1043, %v1157
      %v1159 = vpop.f32.mrf.mxu0
      %1160 = vmatprep.mubr.bf16.mxu0 0
      %1161 = vmatmul.mubr.bf16.gmra.mxu0 %v1115
      %v1162 = vpop.f32.mrf.mxu0
      %v1163 = vadd.f32 %v1048, %v1162
      %v1164 = vpop.f32.mrf.mxu0
      %v1165 = vpop.f32.mrf.mxu0
      %v1166 = vadd.f32 %v1051, %v1165
      %v1167 = vpop.f32.mrf.mxu0
      %1168 = vmatprep.mubr.bf16.mxu0 0
      %1169 = vmatmul.mubr.bf16.gmra.mxu0 %v978
      %v1170 = vpop.f32.mrf.mxu0
      %v1171 = vadd.f32 %v1056, %v1170
      %v1172 = vpop.f32.mrf.mxu0
      %v1173 = vpop.f32.mrf.mxu0
      %v1174 = vadd.f32 %v1059, %v1173
      %v1175 = vpop.f32.mrf.mxu0
      %1176 = vmatprep.mubr.bf16.mxu0 0
      %1177 = vmatmul.mubr.bf16.gmra.mxu0 %v981
      %v1178 = vpop.f32.mrf.mxu0
      %v1179 = vadd.f32 %v1064, %v1178
      %v1180 = vpop.f32.mrf.mxu0
      %v1181 = vpop.f32.mrf.mxu0
      %v1182 = vadd.f32 %v1067, %v1181
      %v1183 = vpop.f32.mrf.mxu0
      %1184 = vmatprep.mubr.bf16.mxu0 0
      %1185 = vmatmul.mubr.bf16.gmra.mxu0 %v984
      %v1186 = vpop.f32.mrf.mxu0
      %v1187 = vadd.f32 %v1072, %v1186
      %v1188 = vpop.f32.mrf.mxu0
      %v1189 = vpop.f32.mrf.mxu0
      %v1190 = vadd.f32 %v1075, %v1189
      %v1191 = vpop.f32.mrf.mxu0
      %1192 = vmatprep.mubr.bf16.mxu0 0
      %1193 = vmatmul.mubr.bf16.gmra.mxu0 %v987
      %v1194 = vpop.f32.mrf.mxu0
      %v1195 = vadd.f32 %v1080, %v1194
      %v1196 = vpop.f32.mrf.mxu0
      %v1197 = vpop.f32.mrf.mxu0
      %v1198 = vadd.f32 %v1083, %v1197
      %v1199 = vpop.f32.mrf.mxu0
      %1200 = vmatprep.mubr.bf16.mxu0 0
      %1201 = vmatmul.mubr.bf16.gmra.mxu0 %v990
      %v1202 = vpop.f32.mrf.mxu0
      %v1203 = vadd.f32 %v1088, %v1202
      %v1204 = vpop.f32.mrf.mxu0
      %v1205 = vpop.f32.mrf.mxu0
      %v1206 = vadd.f32 %v1091, %v1205
      %v1207 = vpop.f32.mrf.mxu0
      %1208 = vmatprep.mubr.bf16.mxu0 0
      %1209 = vmatmul.mubr.bf16.gmra.mxu0 %v993
      %v1210 = vpop.f32.mrf.mxu0
      %v1211 = vadd.f32 %v1096, %v1210
      %v1212 = vpop.f32.mrf.mxu0
      %v1213 = vpop.f32.mrf.mxu0
      %v1214 = vadd.f32 %v1099, %v1213
      %v1215 = vpop.f32.mrf.mxu0
      %1216 = vdwg.mxu0
      %s1217 = scalar_lea.vmem %s5, 24
      %v1218 = vld [vmem:[%s1217] sm:$0xf]
      %v1219 = vld [vmem:[%s1217 + $0x4] sm:$0xf]
      %v1220 = vld [vmem:[%s1217 + $0x8] sm:$0xf]
      %v1224 = vunpack.c.l.b16 %v1218
      %v1225 = vunpack.c.l.b16 %v1219
      %v1226 = vunpack.c.l.b16 %v1220
      %v1227 = vpack.c.b16 %v1225, %v1224
      %v1228 = vpack.c.b16 %v1226, %v1226
      %v1231 = vsel %vm976, %v958, 0
      %v1234 = vsel %vm976, %v959, 0
      %v1237 = vsel %vm1001, %v1228, 0
      %1239 = vmatprep.subr.bf16.mxu0 0
      %1240 = vmatpush1.bf16.msra.mxu0 0
      %1241 = vmatprep.subr.bf16.mxu0 0
      %1242 = vmatpush1.bf16.msra.mxu0 0
      %1243 = vmatprep.subr.bf16.mxu0 0
      %1244 = vmatpush1.bf16.msra.mxu0 0
      %1245 = vmatprep.subr.bf16.mxu0 0
      %1246 = vmatpush1.bf16.msra.mxu0 0
      %1247 = vmatprep.subr.bf16.mxu0 0
      %1248 = vmatpush1.bf16.msra.mxu0 0
      %1249 = vmatprep.subr.bf16.mxu0 0
      %1250 = vmatpush1.bf16.msra.mxu0 0
      %1251 = vmatprep.subr.bf16.mxu0 0
      %1252 = vmatpush1.bf16.msra.mxu0 %v1237
      %1253 = vmatprep.subr.bf16.mxu0 0
      %1254 = vmatpush1.bf16.msra.mxu0 %v1227
      %1255 = vmatprep.subr.bf16.mxu0 0
      %1256 = vmatpush2.bf16.msra.mxu0 0
      %1257 = vmatprep.subr.bf16.mxu0 0
      %1258 = vmatpush2.bf16.msra.mxu0 0
      %1259 = vmatprep.subr.bf16.mxu0 0
      %1260 = vmatpush2.bf16.msra.mxu0 0
      %1261 = vmatprep.subr.bf16.mxu0 0
      %1262 = vmatpush2.bf16.msra.mxu0 0
      %1263 = vmatprep.subr.bf16.mxu0 0
      %1264 = vmatpush2.bf16.msra.mxu0 0
      %1265 = vmatprep.subr.bf16.mxu0 0
      %1266 = vmatpush2.bf16.msra.mxu0 0
      %1267 = vmatprep.subr.bf16.mxu0 0
      %1268 = vmatpush2.bf16.msra.mxu0 0
      %1269 = vmatprep.subr.bf16.mxu0 0
      %1270 = vmatpush2.bf16.msra.mxu0 0
      %1271 = vmatprep.mubr.bf16.mxu0 0
      %1272 = vmatmul.mubr.bf16.gmra.mxu0 %v984
      %v1273 = vpop.f32.mrf.mxu0
      %v1274 = vadd.f32 0.0, %v1273
      %v1275 = vpop.f32.mrf.mxu0
      %v1276 = vpop.f32.mrf.mxu0
      %v1277 = vadd.f32 0.0, %v1276
      %v1278 = vpop.f32.mrf.mxu0
      %1279 = vmatprep.mubr.bf16.mxu0 0
      %1280 = vmatmul.mubr.bf16.gmra.mxu0 %v987
      %v1281 = vpop.f32.mrf.mxu0
      %v1282 = vadd.f32 0.0, %v1281
      %v1283 = vpop.f32.mrf.mxu0
      %v1284 = vpop.f32.mrf.mxu0
      %v1285 = vadd.f32 0.0, %v1284
      %v1286 = vpop.f32.mrf.mxu0
      %1287 = vmatprep.mubr.bf16.mxu0 0
      %1288 = vmatmul.mubr.bf16.gmra.mxu0 %v990
      %v1289 = vpop.f32.mrf.mxu0
      %v1290 = vadd.f32 0.0, %v1289
      %v1291 = vpop.f32.mrf.mxu0
      %v1292 = vpop.f32.mrf.mxu0
      %v1293 = vadd.f32 0.0, %v1292
      %v1294 = vpop.f32.mrf.mxu0
      %1295 = vmatprep.mubr.bf16.mxu0 0
      %1296 = vmatmul.mubr.bf16.gmra.mxu0 %v993
      %v1297 = vpop.f32.mrf.mxu0
      %v1298 = vadd.f32 0.0, %v1297
      %v1299 = vpop.f32.mrf.mxu0
      %v1300 = vpop.f32.mrf.mxu0
      %v1301 = vadd.f32 0.0, %v1300
      %v1302 = vpop.f32.mrf.mxu0
      %1303 = vmatprep.mubr.bf16.mxu0 0
      %1304 = vmatmul.mubr.bf16.gmra.mxu0 %v996
      %v1305 = vpop.f32.mrf.mxu0
      %v1306 = vadd.f32 0.0, %v1305
      %v1307 = vpop.f32.mrf.mxu0
      %v1308 = vpop.f32.mrf.mxu0
      %v1309 = vadd.f32 0.0, %v1308
      %v1310 = vpop.f32.mrf.mxu0
      %1311 = vmatprep.mubr.bf16.mxu0 0
      %1312 = vmatmul.mubr.bf16.gmra.mxu0 %v999
      %v1313 = vpop.f32.mrf.mxu0
      %v1314 = vadd.f32 0.0, %v1313
      %v1315 = vpop.f32.mrf.mxu0
      %v1316 = vpop.f32.mrf.mxu0
      %v1317 = vadd.f32 0.0, %v1316
      %v1318 = vpop.f32.mrf.mxu0
      %1319 = vmatprep.mubr.bf16.mxu0 0
      %1320 = vmatmul.mubr.bf16.gmra.mxu0 %v1231
      %v1321 = vpop.f32.mrf.mxu0
      %v1322 = vadd.f32 0.0, %v1321
      %v1323 = vpop.f32.mrf.mxu0
      %v1324 = vpop.f32.mrf.mxu0
      %v1325 = vadd.f32 0.0, %v1324
      %v1326 = vpop.f32.mrf.mxu0
      %1327 = vmatprep.mubr.bf16.mxu0 0
      %1328 = vmatmul.mubr.bf16.gmra.mxu0 %v1234
      %v1329 = vpop.f32.mrf.mxu0
      %v1330 = vadd.f32 0.0, %v1329
      %v1331 = vpop.f32.mrf.mxu0
      %v1332 = vpop.f32.mrf.mxu0
      %v1333 = vadd.f32 0.0, %v1332
      %v1334 = vpop.f32.mrf.mxu0
      %1335 = vdwg.mxu0
      %v1336 = vadd.f32 %v1155, %v1274
      %v1337 = vadd.f32 %v1158, %v1277
      %v1338 = vadd.f32 %v1163, %v1282
      %v1339 = vadd.f32 %v1166, %v1285
      %v1340 = vadd.f32 %v1171, %v1290
      %v1341 = vadd.f32 %v1174, %v1293
      %v1342 = vadd.f32 %v1179, %v1298
      %v1343 = vadd.f32 %v1182, %v1301
      %v1344 = vadd.f32 %v1187, %v1306
      %v1345 = vadd.f32 %v1190, %v1309
      %v1346 = vadd.f32 %v1195, %v1314
      %v1347 = vadd.f32 %v1198, %v1317
      %v1348 = vadd.f32 %v1203, %v1322
      %v1349 = vadd.f32 %v1206, %v1325
      %v1350 = vadd.f32 %v1211, %v1330
      %v1351 = vadd.f32 %v1214, %v1333
      %v1352 = vmax.f32 %v1336, 0.0
      %v1353 = vmax.f32 %v1337, 0.0
      %v1354 = vmax.f32 %v1338, 0.0
      %v1355 = vmax.f32 %v1339, 0.0
      %v1356 = vmax.f32 %v1340, 0.0
      %v1357 = vmax.f32 %v1341, 0.0
      %v1358 = vmax.f32 %v1342, 0.0
      %v1359 = vmax.f32 %v1343, 0.0
      %v1360 = vmax.f32 %v1344, 0.0
      %v1361 = vmax.f32 %v1345, 0.0
      %v1362 = vmax.f32 %v1346, 0.0
      %v1363 = vmax.f32 %v1347, 0.0
      %v1364 = vmax.f32 %v1348, 0.0
      %v1365 = vmax.f32 %v1349, 0.0
      %v1366 = vmax.f32 %v1350, 0.0
      %v1367 = vmax.f32 %v1351, 0.0
      %v1368 = vsel %vm508, %v1352, 0.0
      %v1369 = vsel %vm509, %v1353, 0.0
      %v1370 = vsel %vm510, %v1354, 0.0
      %v1371 = vsel %vm511, %v1355, 0.0
      %v1372 = vsel %vm508, %v1356, 0.0
      %v1373 = vsel %vm509, %v1357, 0.0
      %v1374 = vsel %vm510, %v1358, 0.0
      %v1375 = vsel %vm511, %v1359, 0.0
      %v1376 = vsel %vm508, %v1360, 0.0
      %v1377 = vsel %vm509, %v1361, 0.0
      %v1378 = vsel %vm510, %v1362, 0.0
      %v1379 = vsel %vm511, %v1363, 0.0
      %v1380 = vsel %vm508, %v1364, 0.0
      %v1381 = vsel %vm509, %v1365, 0.0
      %v1382 = vsel %vm510, %v1366, 0.0
      %v1383 = vsel %vm511, %v1367, 0.0
      %1384 = vst.msk [vmem:[%s452] sm:$0xff] %vm898, %v1368
      %1385 = vst.msk [vmem:[%s452 + $0x8] sm:$0xff] %vm898, %v1369
      %1386 = vst.msk [vmem:[%s452 + $0x10] sm:$0xff] %vm898, %v1370
      %1387 = vst.msk [vmem:[%s452 + $0x18] sm:$0xff] %vm898, %v1371
      %1388 = vst.msk [vmem:[%s452 + $0x20] sm:$0xff] %vm898, %v1372
      %1389 = vst.msk [vmem:[%s452 + $0x28] sm:$0xff] %vm898, %v1373
      %1390 = vst.msk [vmem:[%s452 + $0x30] sm:$0xff] %vm898, %v1374
      %1391 = vst.msk [vmem:[%s452 + $0x38] sm:$0xff] %vm898, %v1375
      %1392 = vst.msk [vmem:[%s452 + $0x40] sm:$0xff] %vm898, %v1376
      %1393 = vst.msk [vmem:[%s452 + $0x48] sm:$0xff] %vm898, %v1377
      %1394 = vst.msk [vmem:[%s452 + $0x50] sm:$0xff] %vm898, %v1378
      %1395 = vst.msk [vmem:[%s452 + $0x58] sm:$0xff] %vm898, %v1379
      %1396 = vst.msk [vmem:[%s452 + $0x60] sm:$0xff] %vm898, %v1380
      %1397 = vst.msk [vmem:[%s452 + $0x68] sm:$0xff] %vm898, %v1381
      %1398 = vst.msk [vmem:[%s452 + $0x70] sm:$0xff] %vm898, %v1382
      %1399 = vst.msk [vmem:[%s452 + $0x78] sm:$0xff] %vm898, %v1383
      %v1400 = vsel %vm898, %v1368, 0.0
      %v1401 = vsel %vm898, %v1369, 0.0
      %v1402 = vadd.f32 %v1400, %v1401
      %v1403 = vsel %vm898, %v1370, 0.0
      %v1404 = vadd.f32 %v1402, %v1403
      %v1405 = vsel %vm898, %v1371, 0.0
      %v1406 = vadd.f32 %v1404, %v1405
      %v1407 = vsel %vm898, %v1372, 0.0
      %v1408 = vadd.f32 %v1406, %v1407
      %v1409 = vsel %vm898, %v1373, 0.0
      %v1410 = vadd.f32 %v1408, %v1409
      %v1411 = vsel %vm898, %v1374, 0.0
      %v1412 = vadd.f32 %v1410, %v1411
      %v1413 = vsel %vm898, %v1375, 0.0
      %v1414 = vadd.f32 %v1412, %v1413
      %v1415 = vsel %vm898, %v1376, 0.0
      %v1416 = vadd.f32 %v1414, %v1415
      %v1417 = vsel %vm898, %v1377, 0.0
      %v1418 = vadd.f32 %v1416, %v1417
      %v1419 = vsel %vm898, %v1378, 0.0
      %v1420 = vadd.f32 %v1418, %v1419
      %v1421 = vsel %vm898, %v1379, 0.0
      %v1422 = vadd.f32 %v1420, %v1421
      %v1423 = vsel %vm898, %v1380, 0.0
      %v1424 = vadd.f32 %v1422, %v1423
      %v1425 = vsel %vm898, %v1381, 0.0
      %v1426 = vadd.f32 %v1424, %v1425
      %v1427 = vsel %vm898, %v1382, 0.0
      %v1428 = vadd.f32 %v1426, %v1427
      %v1429 = vsel %vm898, %v1383, 0.0
      %v1430 = vadd.f32 %v1428, %v1429
      %v1431 = vrot.slane %v1430, 4
      %v1432 = vadd.f32 %v1430, %v1431
      %v1433 = vrot.slane %v1432, 2
      %v1434 = vadd.f32 %v1432, %v1433
      %v1435 = vrot.slane %v1434, 1
      %v1436 = vadd.f32 %v1434, %v1435
      %v1437 = vmul.f32 %v1368, %v1368
      %v1438 = vmul.f32 %v1369, %v1369
      %v1439 = vmul.f32 %v1370, %v1370
      %v1440 = vmul.f32 %v1371, %v1371
      %v1441 = vmul.f32 %v1372, %v1372
      %v1442 = vmul.f32 %v1373, %v1373
      %v1443 = vmul.f32 %v1374, %v1374
      %v1444 = vmul.f32 %v1375, %v1375
      %v1445 = vmul.f32 %v1376, %v1376
      %v1446 = vmul.f32 %v1377, %v1377
      %v1447 = vmul.f32 %v1378, %v1378
      %v1448 = vmul.f32 %v1379, %v1379
      %v1449 = vmul.f32 %v1380, %v1380
      %v1450 = vmul.f32 %v1381, %v1381
      %v1451 = vmul.f32 %v1382, %v1382
      %v1452 = vmul.f32 %v1383, %v1383
      %v1453 = vsel %vm898, %v1437, 0.0
      %v1454 = vsel %vm898, %v1438, 0.0
      %v1455 = vadd.f32 %v1453, %v1454
      %v1456 = vsel %vm898, %v1439, 0.0
      %v1457 = vadd.f32 %v1455, %v1456
      %v1458 = vsel %vm898, %v1440, 0.0
      %v1459 = vadd.f32 %v1457, %v1458
      %v1460 = vsel %vm898, %v1441, 0.0
      %v1461 = vadd.f32 %v1459, %v1460
      %v1462 = vsel %vm898, %v1442, 0.0
      %v1463 = vadd.f32 %v1461, %v1462
      %v1464 = vsel %vm898, %v1443, 0.0
      %v1465 = vadd.f32 %v1463, %v1464
      %v1466 = vsel %vm898, %v1444, 0.0
      %v1467 = vadd.f32 %v1465, %v1466
      %v1468 = vsel %vm898, %v1445, 0.0
      %v1469 = vadd.f32 %v1467, %v1468
      %v1470 = vsel %vm898, %v1446, 0.0
      %v1471 = vadd.f32 %v1469, %v1470
      %v1472 = vsel %vm898, %v1447, 0.0
      %v1473 = vadd.f32 %v1471, %v1472
      %v1474 = vsel %vm898, %v1448, 0.0
      %v1475 = vadd.f32 %v1473, %v1474
      %v1476 = vsel %vm898, %v1449, 0.0
      %v1477 = vadd.f32 %v1475, %v1476
      %v1478 = vsel %vm898, %v1450, 0.0
      %v1479 = vadd.f32 %v1477, %v1478
      %v1480 = vsel %vm898, %v1451, 0.0
      %v1481 = vadd.f32 %v1479, %v1480
      %v1482 = vsel %vm898, %v1452, 0.0
      %v1483 = vadd.f32 %v1481, %v1482
      %v1484 = vrot.slane %v1483, 4
      %v1485 = vadd.f32 %v1483, %v1484
      %v1486 = vrot.slane %v1485, 2
      %v1487 = vadd.f32 %v1485, %v1486
      %v1488 = vrot.slane %v1487, 1
      %v1489 = vadd.f32 %v1487, %v1488
      // Predicated region
      $region45: #{triple_conv3_pallas.5} parent=43 // pred_check
        %p1490 = pneg %p478
      $region46: #{triple_conv3_pallas.5} parent=43 // pred_check_branch
        %1492 = sbr.rel (%p1490) target = $region48
      $region47: #{triple_conv3_pallas.5} parent=43 // pred_region
        %vm1493 = vcmask 58368
        %1494 = vst.msk [vmem:[%s457] sm:$0x3] %vm1493, 0.0
      $region48: #{triple_conv3_pallas.5} parent=43 // pred_fallthru
        _
      %v1495 = vld [vmem:[%s457] sm:$0x3]
      %vm1496 = vcmask 1040384
      %v1497 = vsel %vm1496, %v1436, %v1489
      %v1498 = vadd.f32 %v1495, %v1497
      %vm1499 = vcmask 58368
      %1500 = vst.msk [vmem:[%s457] sm:$0x3] %vm1499, %v1498
      %s1501 = smul.u32 4, %s24
      %p1502 = scmp.lt.s32.totalorder %s23, 1
      %s1503 = scalar_select %p1502, %s23, 1
      %p1504 = scmp.lt.s32.totalorder %s1501, 15
      %s1505 = scalar_select %p1504, %s1501, 15
      %s1506 = smul.addr %s1505, 4
      %s1507 = smul.addr %s1503, 64
      %s1508 = sadd.s32 %s1506, %s1507
      %s1509 = smul.addr %s1508, 8
      %s1510 = scalar_lea.vmem %s6, %s1509
      %p1511 = scmp.lt.s32.totalorder %s23, 1
      %s1512 = scalar_select %p1511, %s23, 1
      %s1513 = smul.addr %s1512, 2
      %s1514 = scalar_lea.vmem %s7, %s1513
      // Predicated region
      $region49: #{triple_conv3_pallas.5} parent=43 // pred_check
        %p1515 = pneg %p214
      $region50: #{triple_conv3_pallas.5} parent=43 // pred_check_branch
        %1517 = sbr.rel (%p1515) target = $region52
      $region51: #{triple_conv3_pallas.5} parent=43 // pred_region
        %s1518 = smul.u32 4, %s24
      $region52: #{triple_conv3_pallas.5} parent=43 // pred_fallthru
        _
      // Predicated region
      $region53: #{triple_conv3_pallas.5} parent=43 // pred_check
        %p1519 = pneg %p240
      $region54: #{triple_conv3_pallas.5} parent=43 // pred_check_branch
        %1521 = sbr.rel (%p1519) target = $region56
      $region55: #{triple_conv3_pallas.5} parent=43 // pred_region
        _
      $region56: #{triple_conv3_pallas.5} parent=43 // pred_fallthru
        _
    $region44: #{triple_conv3_pallas.5} parent=5 // pred_fallthru
      _
    %p1522 = scmp.le.s32.totalorder 2, %s14
    // Predicated region
    $region57: #{triple_conv3_pallas.5} parent=5 // pred_check
      %p1523 = pneg %p1522
    $region58: #{triple_conv3_pallas.5} parent=5 // pred_check_branch
      %1525 = sbr.rel (%p1523) target = $region60
    $region59: #{triple_conv3_pallas.5} parent=5 // pred_region
      %s1526 = ssub.s32 %s14, 2
      // Predicated region
      $region61: #{triple_conv3_pallas.5} parent=59 // pred_check
        %p1527 = pneg %p220
      $region62: #{triple_conv3_pallas.5} parent=59 // pred_check_branch
        %1529 = sbr.rel (%p1527) target = $region64
      $region63: #{triple_conv3_pallas.5} parent=59 // pred_region
        %s1530 = smul.u32 4, %s26
        %p1531 = scmp.lt.s32.totalorder %s25, 1
        %s1532 = scalar_select %p1531, %s25, 1
        %p1533 = scmp.lt.s32.totalorder %s1530, 15
        %s1534 = scalar_select %p1533, %s1530, 15
        %s1535 = smul.addr %s1534, 4
        %s1536 = smul.addr %s1532, 64
        %s1537 = sadd.s32 %s1535, %s1536
        %s1538 = smul.addr %s1537, 8
        %s1539 = scalar_lea.vmem %s6, %s1538
      $region64: #{triple_conv3_pallas.5} parent=59 // pred_fallthru
        _
      // Predicated region
      $region65: #{triple_conv3_pallas.5} parent=59 // pred_check
        %p1540 = pneg %p246
      $region66: #{triple_conv3_pallas.5} parent=59 // pred_check_branch
        %1542 = sbr.rel (%p1540) target = $region68
      $region67: #{triple_conv3_pallas.5} parent=59 // pred_region
        %p1543 = scmp.lt.s32.totalorder %s25, 1
        %s1544 = scalar_select %p1543, %s25, 1
        %s1545 = smul.addr %s1544, 2
        %s1546 = scalar_lea.vmem %s7, %s1545
      $region68: #{triple_conv3_pallas.5} parent=59 // pred_fallthru
        _
    $region60: #{triple_conv3_pallas.5} parent=5 // pred_fallthru
      _
  $region6: #{triple_conv3_pallas.5} parent=0 // loop_footer
    %s18 = sadd.s32 1, %s14
  $region7: #{triple_conv3_pallas.5} parent=0 // loop_footer_branch
    %13 = sbr.rel target = $region3
  $region8: #{triple_conv3_pallas.5} parent=0 // loop_exit
    _

</llo_original>
